<compile_context>
chip_gen: v5e
topology: v5e:2x2
jax: 0.10.0
libtpu: 0.0.40
codegen_flags: <defaults>
</compile_context>

<pallas_src>
import functools

import jax
import jax.numpy as jnp
from jax.experimental import pallas as pl
from jax.experimental.pallas import tpu as pltpu

# ----------------------------- hyper parameters ------------------------------
VOCAB = 50          # vocab_size
EMB = 16            # parameters.word_embedding_size (input_size)
CHANNELS = (32, 32) # num_channels
KSIZE = 2           # kernel_size
OUT = 8             # output_size == number of CRF tags
T = 16              # sequence length (batch = 1, as in feats.view(1, -1, OUT))

_VMEM = functools.partial(pl.BlockSpec, memory_space=pltpu.MemorySpace.VMEM)


# ------------------------------- fused kernel --------------------------------
def make_fused_kernel(dilations, has_down, max_shift):
    """Embedding -> TCN blocks -> decoder -> CRF (loss + Viterbi), one kernel body."""
    n_blocks = len(dilations)
    D = int(max_shift)   # fixed store offset for the causal-shift scratch window

    def kernel(*refs):
        refs = list(refs)
        pos = 0
        actions_ref, tags_ref, emb_ref = refs[pos:pos + 3]; pos += 3
        blocks = []
        for lvl in range(n_blocks):
            w1a, w1b, b1, w2a, w2b, b2 = refs[pos:pos + 6]; pos += 6
            if has_down[lvl]:
                wd, bd = refs[pos:pos + 2]; pos += 2
            else:
                wd = bd = None
            blocks.append((w1a, w1b, b1, w2a, w2b, b2, wd, bd))
        dec_w, dec_b = refs[pos:pos + 2]; pos += 2
        start_ref, end_ref, trans_ref = refs[pos:pos + 3]; pos += 3
        loss_ref, pred_ref = refs[pos:pos + 2]; pos += 2
        shift_buf, feats_buf = refs[pos:pos + 2]          # VMEM scratch

        Tn = actions_ref.shape[0]
        Vsz = emb_ref.shape[0]
        K = trans_ref.shape[0]
        f32 = jnp.float32
        HIGH = jax.lax.Precision.HIGHEST

        # ---------------- constants: built once, reused everywhere ----------------
        lane_vocab = jax.lax.broadcasted_iota(jnp.int32, (Tn, Vsz), 1)
        lane_TK = jax.lax.broadcasted_iota(jnp.int32, (Tn, K), 1)
        row_TK = jax.lax.broadcasted_iota(jnp.int32, (Tn, K), 0)
        lane_1K = jax.lax.broadcasted_iota(jnp.int32, (1, K), 1)
        sub_KK = jax.lax.broadcasted_iota(jnp.int32, (K, K), 0)
        lane_KK = jax.lax.broadcasted_iota(jnp.int32, (K, K), 1)
        lane_1T = jax.lax.broadcasted_iota(jnp.int32, (1, Tn), 1)
        ident_K = (sub_KK == lane_KK).astype(f32)
        sub_KK_f = sub_KK.astype(f32)
        lane_1K_f = lane_1K.astype(f32)

        # Zero the causal-shift prefix ONCE.  All later stores land at row offset D,
        # so rows [0, D) stay zero for the lifetime of the kernel.
        shift_buf[pl.ds(0, D), :] = jnp.zeros((D, shift_buf.shape[1]), f32)

        def mxu(a, b):
            # conv / decoder matmuls: bf16 operands, f32 accumulation (MXU native).
            return jnp.dot(a.astype(jnp.bfloat16), b.astype(jnp.bfloat16),
                           preferred_element_type=f32)

        def flip(row):
            # (1, K) row -> (K, 1) column (identity mask + 8-lane reduce).
            return jnp.sum(row * ident_K, axis=1, keepdims=True)

        def shift_down(h, d):
            # h[t - d] with zero rows for t < d (dilated causal shift):
            # store at fixed row offset D, read at offset D - d (zero prefix pre-filled).
            c = h.shape[1]
            shift_buf[pl.ds(D, Tn), pl.ds(0, c)] = h
            return shift_buf[pl.ds(D - d, Tn), pl.ds(0, c)]

        # ------------- embedding lookup (one-hot @ table, all in VMEM) ------------
        onehot_a = (lane_vocab == actions_ref[...]).astype(f32)             # (T, V)
        x = jnp.dot(onehot_a, emb_ref[...],
                    preferred_element_type=f32, precision=HIGH)             # (T, E)

        # ------------------------- TCN temporal blocks ----------------------------
        # dropout / weight_norm are identities at inference time (frozen TCN).
        for lvl in range(n_blocks):
            w1a, w1b, b1, w2a, w2b, b2, wd, bd = blocks[lvl]
            d = dilations[lvl]

            def cconv(h, wa, wb, b):
                return mxu(shift_down(h, d), wa[...]) + mxu(h, wb[...]) + b[...]

            h1 = jnp.maximum(cconv(x, w1a, w1b, b1), 0.0)
            h2 = jnp.maximum(cconv(h1, w2a, w2b, b2), 0.0)
            res = x if wd is None else mxu(x, wd[...]) + bd[...]   # downsample / identity
            x = jnp.maximum(h2 + res, 0.0)

        # ----------------------------- linear decoder -----------------------------
        feats = mxu(x, dec_w[...]) + dec_b[...]                             # (T, K)
        feats_buf[...] = feats

        start = start_ref[...]        # (1, K)
        end = end_ref[...]            # (1, K)
        trans = trans_ref[...]        # (K, K)  [from, to]

        # --------- CRF gold-path numerator: vectorized & hoisted off the loop -----
        oh = (lane_TK == tags_ref[...]).astype(f32)                         # (T, K)
        oh_prev = shift_down(oh, 1)                                         # row t = onehot(tags[t-1])
        trans_sel = jnp.dot(oh_prev, trans,
                            preferred_element_type=f32, precision=HIGH)     # row t = trans[tags[t-1], :]
        gold = (feats + trans_sel) * oh
        num_1k = (jnp.sum(gold, axis=0, keepdims=True)
                  + start * jnp.sum(jnp.where(row_TK == 0, oh, 0.0),
                                    axis=0, keepdims=True)
                  + end * jnp.sum(jnp.where(row_TK == Tn - 1, oh, 0.0),
                                  axis=0, keepdims=True))
        num = jnp.sum(num_1k, axis=1, keepdims=True)                        # (1, 1)

        # -------- CRF forward (log-partition) + Viterbi, fully unrolled over T ----
        e0 = feats_buf[pl.ds(0, 1), :]                                      # (1, K)
        alpha = start + e0            # forward scores (1, K)
        score = start + e0            # Viterbi scores (1, K)
        hist = []                     # backpointer rows, register-resident
        for t in range(1, Tn):
            e_t = feats_buf[pl.ds(t, 1), :]
            alpha_col = flip(alpha)                                         # (K, 1)
            score_col = flip(score)                                         # (K, 1)
            # log-partition: alpha[k] = LSE_j(alpha[j] + trans[j, k]) + e[t, k]
            m_mat = alpha_col + trans                                       # [j, k]
            m_max = jnp.max(m_mat, axis=0, keepdims=True)                   # (1, K)
            alpha = (jnp.log(jnp.sum(jnp.exp(m_mat - m_max), axis=0, keepdims=True))
                     + m_max + e_t)
            # Viterbi recursion + backpointers (first-argmax, matches jnp.argmax);
            # off the alpha/score serial chain, so it overlaps with the next step.
            v = score_col + trans                                           # [j, k]
            vmax = jnp.max(v, axis=0, keepdims=True)                        # (1, K)
            hist.append(jnp.min(jnp.where(v == vmax, sub_KK_f, float(K)),
                                axis=0, keepdims=True))                     # (1, K)
            score = vmax + e_t

        # loss = logZ - gold-path score
        zrow = alpha + end
        zm = jnp.max(zrow, axis=1, keepdims=True)
        logz = jnp.log(jnp.sum(jnp.exp(zrow - zm), axis=1, keepdims=True)) + zm
        loss_ref[...] = logz - num

        # Viterbi termination + backtrack (history stays in registers)
        final = score + end
        fmax = jnp.max(final, axis=1, keepdims=True)
        best = jnp.min(jnp.where(final == fmax, lane_1K_f, float(K)),
                       axis=1, keepdims=True)                               # (1, 1)
        preds = [best]
        for t in range(Tn - 1, 0, -1):
            best = jnp.sum(jnp.where(lane_1K_f == best, hist[t - 1], 0.0),
                           axis=1, keepdims=True)
            preds.append(best)
        preds.reverse()

        # single lane-dense (1, T) int32 store for the predictions
        pred_row = jnp.zeros((1, Tn), f32)
        for t in range(Tn):
            pred_row = pred_row + jnp.where(lane_1T == t, preds[t], 0.0)
        pred_ref[...] = pred_row.astype(jnp.int32)

    return kernel


# --------------------------------- forward -----------------------------------
def cps_tcn_model_forward(actions, tags, params):
    """actions, tags: (1, T) int32.  Returns (loss, predict) like the torch module."""
    Tn = actions.shape[1]
    K = params["crf_trans"].shape[0]

    inputs = [actions.reshape(Tn, 1).astype(jnp.int32),
              tags.reshape(Tn, 1).astype(jnp.int32),
              params["emb"].astype(jnp.float32)]
    dils, has_down, widths = [], [], [params["emb"].shape[1]]
    for blk in params["blocks"]:
        dils.append(int(blk["dilation"]))
        has_down.append("wd" in blk)
        widths.append(blk["w1a"].shape[1])
        inputs += [blk["w1a"], blk["w1b"], blk["b1"],
                   blk["w2a"], blk["w2b"], blk["b2"]]
        if "wd" in blk:
            inputs += [blk["wd"], blk["bd"]]
    inputs += [params["dec_w"], params["dec_b"],
               params["crf_start"].reshape(1, K).astype(jnp.float32),
               params["crf_end"].reshape(1, K).astype(jnp.float32),
               params["crf_trans"].astype(jnp.float32)]

    max_shift = max(dils + [1])
    shift_rows = Tn + max_shift
    shift_cols = max(widths + [K])

    loss, pred = pl.pallas_call(
        make_fused_kernel(tuple(dils), tuple(has_down), max_shift),
        out_shape=(jax.ShapeDtypeStruct((1, 1), jnp.float32),
                   jax.ShapeDtypeStruct((1, Tn), jnp.int32)),
        in_specs=[_VMEM()] * len(inputs),
        out_specs=(_VMEM(), _VMEM()),
        scratch_shapes=[pltpu.VMEM((shift_rows, shift_cols), jnp.float32),  # causal shift
                        pltpu.VMEM((Tn, K), jnp.float32)],                  # emissions
    )(*inputs)
    # TODO(synk): torch returns int64 predictions; JAX default has no x64, int32 kept.
    return loss[0, 0], pred[0]


# ----------------------------- deterministic init -----------------------------
def init_params(key):
    ks = iter(jax.random.split(key, 64))

    def nrm(shape, scale=0.1):
        return (scale * jax.random.normal(next(ks), shape)).astype(jnp.float32)

    def uni(shape):
        return jax.random.uniform(next(ks), shape, jnp.float32, -0.1, 0.1)

    params = {"emb": nrm((VOCAB, EMB))}
    blocks = []
    cin = EMB
    for level, cout in enumerate(CHANNELS):
        blk = dict(
            dilation=2 ** level,
            w1a=nrm((cin, cout)), w1b=nrm((cin, cout)), b1=nrm((1, cout)),
            w2a=nrm((cout, cout)), w2b=nrm((cout, cout)), b2=nrm((1, cout)),
        )
        if cin != cout:   # torch TemporalBlock downsample (1x1 conv); identity otherwise
            blk["wd"] = nrm((cin, cout))
            blk["bd"] = nrm((1, cout))
        blocks.append(blk)
        cin = cout
    params["blocks"] = blocks
    params["dec_w"] = nrm((cin, OUT))
    params["dec_b"] = nrm((1, OUT))
    params["crf_start"] = uni((OUT,))
    params["crf_end"] = uni((OUT,))
    params["crf_trans"] = uni((OUT, OUT))
    return params


# ----------------------------- pure-JAX reference -----------------------------
def reference_forward(actions, tags, params):
    def mm(a, b):   # same bf16-operand / f32-accumulate contraction as the kernel
        return jnp.dot(a.astype(jnp.bfloat16), b.astype(jnp.bfloat16),
                       preferred_element_type=jnp.float32)

    emb = params["emb"][actions[0]]
    h = emb
    for blk in params["blocks"]:
        d = blk["dilation"]

        def cconv(x, wa, wb, b, d=d):
            xs = jnp.concatenate([jnp.zeros((d, x.shape[1]), x.dtype), x[:-d]], axis=0)
            return mm(xs, wa) + mm(x, wb) + b

        h1 = jax.nn.relu(cconv(h, blk["w1a"], blk["w1b"], blk["b1"]))
        h2 = jax.nn.relu(cconv(h1, blk["w2a"], blk["w2b"], blk["b2"]))
        res = h if "wd" not in blk else mm(h, blk["wd"]) + blk["bd"]
        h = jax.nn.relu(h2 + res)
    feats = mm(h, params["dec_w"]) + params["dec_b"]

    start, end, trans = params["crf_start"], params["crf_end"], params["crf_trans"]
    tg = tags[0]
    Tn = feats.shape[0]

    num = start[tg[0]] + feats[0, tg[0]]
    for i in range(1, Tn):
        num = num + trans[tg[i - 1], tg[i]] + feats[i, tg[i]]
    num = num + end[tg[-1]]

    alpha = start + feats[0]
    for i in range(1, Tn):
        alpha = jax.scipy.special.logsumexp(alpha[:, None] + trans, axis=0) + feats[i]
    logz = jax.scipy.special.logsumexp(alpha + end)
    loss = logz - num

    score = start + feats[0]
    hist = []
    for i in range(1, Tn):
        M = score[:, None] + trans
        hist.append(jnp.argmax(M, axis=0))
        score = jnp.max(M, axis=0) + feats[i]
    score = score + end
    best = int(jnp.argmax(score))
    preds = [best]
    for hrow in reversed(hist):
        best = int(hrow[best])
        preds.append(best)
    preds.reverse()
    return loss, jnp.asarray(preds, jnp.int32)


# ------------------------------------ main ------------------------------------
if __name__ == "__main__":
    root = jax.random.PRNGKey(0)
    kp, ka, kt = jax.random.split(root, 3)
    params = init_params(kp)

    actions = jax.random.randint(ka, (1, T), 0, VOCAB, dtype=jnp.int32)
    tags = jax.random.randint(kt, (1, T), 0, OUT, dtype=jnp.int32)

    loss, predict = cps_tcn_model_forward(actions, tags, params)
    loss = jax.block_until_ready(loss)
    predict = jax.block_until_ready(predict)

    ref_loss, ref_pred = reference_forward(actions, tags, params)
    assert jnp.allclose(loss, ref_loss, atol=1e-3, rtol=1e-3), (loss, ref_loss)
    assert jnp.array_equal(predict, ref_pred), (predict, ref_pred)

    print("KERNEL_OK")
</pallas_src>

<mosaic_0001>
module attributes {stable_mosaic.version = 11 : i64} {
  func.func @kernel(%arg0: memref<16x1xi32, #tpu.memory_space<vmem>>, %arg1: memref<16x1xi32, #tpu.memory_space<vmem>>, %arg2: memref<50x16xf32, #tpu.memory_space<vmem>>, %arg3: memref<16x32xf32, #tpu.memory_space<vmem>>, %arg4: memref<16x32xf32, #tpu.memory_space<vmem>>, %arg5: memref<1x32xf32, #tpu.memory_space<vmem>>, %arg6: memref<32x32xf32, #tpu.memory_space<vmem>>, %arg7: memref<32x32xf32, #tpu.memory_space<vmem>>, %arg8: memref<1x32xf32, #tpu.memory_space<vmem>>, %arg9: memref<16x32xf32, #tpu.memory_space<vmem>>, %arg10: memref<1x32xf32, #tpu.memory_space<vmem>>, %arg11: memref<32x32xf32, #tpu.memory_space<vmem>>, %arg12: memref<32x32xf32, #tpu.memory_space<vmem>>, %arg13: memref<1x32xf32, #tpu.memory_space<vmem>>, %arg14: memref<32x32xf32, #tpu.memory_space<vmem>>, %arg15: memref<32x32xf32, #tpu.memory_space<vmem>>, %arg16: memref<1x32xf32, #tpu.memory_space<vmem>>, %arg17: memref<32x8xf32, #tpu.memory_space<vmem>>, %arg18: memref<1x8xf32, #tpu.memory_space<vmem>>, %arg19: memref<1x8xf32, #tpu.memory_space<vmem>>, %arg20: memref<1x8xf32, #tpu.memory_space<vmem>>, %arg21: memref<8x8xf32, #tpu.memory_space<vmem>>, %arg22: memref<1x1xf32, #tpu.memory_space<vmem>>, %arg23: memref<1x16xi32, #tpu.memory_space<vmem>>, %arg24: memref<18x32xf32, #tpu.memory_space<vmem>>, %arg25: memref<16x8xf32, #tpu.memory_space<vmem>>) attributes {dimension_semantics = [], scalar_prefetch = 0 : i64, scratch_operands = 2 : i64, tpu.core_type = #tpu.core_type<tc>} {
    %0 = tpu.iota {dimensions = array<i32: 1>} : vector<16x50xi32>
    %1 = tpu.iota {dimensions = array<i32: 1>} : vector<16x8xi32>
    %2 = tpu.iota {dimensions = array<i32: 0>} : vector<16x8xi32>
    %3 = tpu.iota {dimensions = array<i32: 1>} : vector<1x8xi32>
    %4 = tpu.iota {dimensions = array<i32: 0>} : vector<8x8xi32>
    %5 = tpu.iota {dimensions = array<i32: 1>} : vector<8x8xi32>
    %6 = tpu.iota {dimensions = array<i32: 1>} : vector<1x16xi32>
    %7 = arith.cmpi eq, %4, %5 : vector<8x8xi32>
    %8 = arith.extui %7 : vector<8x8xi1> to vector<8x8xi32>
    %9 = arith.sitofp %8 : vector<8x8xi32> to vector<8x8xf32>
    %10 = arith.sitofp %4 : vector<8x8xi32> to vector<8x8xf32>
    %11 = arith.sitofp %3 : vector<1x8xi32> to vector<1x8xf32>
    %cst = arith.constant 0.000000e+00 : f32
    %12 = vector.broadcast %cst : f32 to vector<2x32xf32>
    %c0 = arith.constant 0 : index
    %c0_0 = arith.constant 0 : index
    %13 = vector.load %arg24[%c0, %c0_0] : memref<18x32xf32, #tpu.memory_space<vmem>>, vector<2x32xf32>
    tpu.vector_store %arg24[%c0, %c0_0], %12 {strides = array<i32>} : memref<18x32xf32, #tpu.memory_space<vmem>>, vector<2x32xf32>,
    %c0_1 = arith.constant 0 : index
    %c0_2 = arith.constant 0 : index
    %14 = vector.load %arg0[%c0_1, %c0_2] : memref<16x1xi32, #tpu.memory_space<vmem>>, vector<16x1xi32>
    %15 = vector.broadcast %14 : vector<16x1xi32> to vector<16x50xi32>
    %16 = arith.cmpi eq, %0, %15 : vector<16x50xi32>
    %17 = arith.extui %16 : vector<16x50xi1> to vector<16x50xi32>
    %18 = arith.sitofp %17 : vector<16x50xi32> to vector<16x50xf32>
    %c0_3 = arith.constant 0 : index
    %c0_4 = arith.constant 0 : index
    %19 = vector.load %arg2[%c0_3, %c0_4] : memref<50x16xf32, #tpu.memory_space<vmem>>, vector<50x16xf32>
    %cst_5 = arith.constant dense<0.000000e+00> : vector<16x16xf32>
    %20 = tpu.matmul %18, %19, %cst_5 {dimension_numbers = #tpu.dot_dimension_numbers<[1], [0], [0], [1], [0, 0, 1, 1], [], []>, precision = #tpu.contract_precision<fp32>} : vector<16x50xf32>, vector<50x16xf32>, vector<16x16xf32> -> vector<16x16xf32>
    %c2 = arith.constant 2 : index
    %c0_6 = arith.constant 0 : index
    %21 = vector.load %arg24[%c2, %c0_6] : memref<18x32xf32, #tpu.memory_space<vmem>>, vector<16x16xf32>
    tpu.vector_store %arg24[%c2, %c0_6], %20 {strides = array<i32>} : memref<18x32xf32, #tpu.memory_space<vmem>>, vector<16x16xf32>,
    %c1 = arith.constant 1 : index
    %c0_7 = arith.constant 0 : index
    %22 = vector.load %arg24[%c1, %c0_7] : memref<18x32xf32, #tpu.memory_space<vmem>>, vector<16x16xf32>
    %c0_8 = arith.constant 0 : index
    %c0_9 = arith.constant 0 : index
    %23 = vector.load %arg3[%c0_8, %c0_9] : memref<16x32xf32, #tpu.memory_space<vmem>>, vector<16x32xf32>
    %24 = arith.truncf %22 : vector<16x16xf32> to vector<16x16xbf16>
    %25 = arith.truncf %23 : vector<16x32xf32> to vector<16x32xbf16>
    %cst_10 = arith.constant dense<0.000000e+00> : vector<16x32xf32>
    %26 = tpu.matmul %24, %25, %cst_10 {dimension_numbers = #tpu.dot_dimension_numbers<[1], [0], [0], [1], [0, 0, 1, 1], [], []>} : vector<16x16xbf16>, vector<16x32xbf16>, vector<16x32xf32> -> vector<16x32xf32>
    %c0_11 = arith.constant 0 : index
    %c0_12 = arith.constant 0 : index
    %27 = vector.load %arg4[%c0_11, %c0_12] : memref<16x32xf32, #tpu.memory_space<vmem>>, vector<16x32xf32>
    %28 = arith.truncf %20 : vector<16x16xf32> to vector<16x16xbf16>
    %29 = arith.truncf %27 : vector<16x32xf32> to vector<16x32xbf16>
    %cst_13 = arith.constant dense<0.000000e+00> : vector<16x32xf32>
    %30 = tpu.matmul %28, %29, %cst_13 {dimension_numbers = #tpu.dot_dimension_numbers<[1], [0], [0], [1], [0, 0, 1, 1], [], []>} : vector<16x16xbf16>, vector<16x32xbf16>, vector<16x32xf32> -> vector<16x32xf32>
    %31 = arith.addf %26, %30 : vector<16x32xf32>
    %c0_14 = arith.constant 0 : index
    %c0_15 = arith.constant 0 : index
    %32 = vector.load %arg5[%c0_14, %c0_15] : memref<1x32xf32, #tpu.memory_space<vmem>>, vector<1x32xf32>
    %33 = vector.broadcast %32 : vector<1x32xf32> to vector<16x32xf32>
    %34 = arith.addf %31, %33 : vector<16x32xf32>
    %cst_16 = arith.constant 0.000000e+00 : f32
    %35 = vector.broadcast %cst_16 : f32 to vector<16x32xf32>
    %36 = arith.maximumf %34, %35 : vector<16x32xf32>
    %c2_17 = arith.constant 2 : index
    %c0_18 = arith.constant 0 : index
    %37 = vector.load %arg24[%c2_17, %c0_18] : memref<18x32xf32, #tpu.memory_space<vmem>>, vector<16x32xf32>
    tpu.vector_store %arg24[%c2_17, %c0_18], %36 {strides = array<i32>} : memref<18x32xf32, #tpu.memory_space<vmem>>, vector<16x32xf32>,
    %c1_19 = arith.constant 1 : index
    %c0_20 = arith.constant 0 : index
    %38 = vector.load %arg24[%c1_19, %c0_20] : memref<18x32xf32, #tpu.memory_space<vmem>>, vector<16x32xf32>
    %c0_21 = arith.constant 0 : index
    %c0_22 = arith.constant 0 : index
    %39 = vector.load %arg6[%c0_21, %c0_22] : memref<32x32xf32, #tpu.memory_space<vmem>>, vector<32x32xf32>
    %40 = arith.truncf %38 : vector<16x32xf32> to vector<16x32xbf16>
    %41 = arith.truncf %39 : vector<32x32xf32> to vector<32x32xbf16>
    %cst_23 = arith.constant dense<0.000000e+00> : vector<16x32xf32>
    %42 = tpu.matmul %40, %41, %cst_23 {dimension_numbers = #tpu.dot_dimension_numbers<[1], [0], [0], [1], [0, 0, 1, 1], [], []>} : vector<16x32xbf16>, vector<32x32xbf16>, vector<16x32xf32> -> vector<16x32xf32>
    %c0_24 = arith.constant 0 : index
    %c0_25 = arith.constant 0 : index
    %43 = vector.load %arg7[%c0_24, %c0_25] : memref<32x32xf32, #tpu.memory_space<vmem>>, vector<32x32xf32>
    %44 = arith.truncf %36 : vector<16x32xf32> to vector<16x32xbf16>
    %45 = arith.truncf %43 : vector<32x32xf32> to vector<32x32xbf16>
    %cst_26 = arith.constant dense<0.000000e+00> : vector<16x32xf32>
    %46 = tpu.matmul %44, %45, %cst_26 {dimension_numbers = #tpu.dot_dimension_numbers<[1], [0], [0], [1], [0, 0, 1, 1], [], []>} : vector<16x32xbf16>, vector<32x32xbf16>, vector<16x32xf32> -> vector<16x32xf32>
    %47 = arith.addf %42, %46 : vector<16x32xf32>
    %c0_27 = arith.constant 0 : index
    %c0_28 = arith.constant 0 : index
    %48 = vector.load %arg8[%c0_27, %c0_28] : memref<1x32xf32, #tpu.memory_space<vmem>>, vector<1x32xf32>
    %49 = vector.broadcast %48 : vector<1x32xf32> to vector<16x32xf32>
    %50 = arith.addf %47, %49 : vector<16x32xf32>
    %cst_29 = arith.constant 0.000000e+00 : f32
    %51 = vector.broadcast %cst_29 : f32 to vector<16x32xf32>
    %52 = arith.maximumf %50, %51 : vector<16x32xf32>
    %c0_30 = arith.constant 0 : index
    %c0_31 = arith.constant 0 : index
    %53 = vector.load %arg9[%c0_30, %c0_31] : memref<16x32xf32, #tpu.memory_space<vmem>>, vector<16x32xf32>
    %54 = arith.truncf %20 : vector<16x16xf32> to vector<16x16xbf16>
    %55 = arith.truncf %53 : vector<16x32xf32> to vector<16x32xbf16>
    %cst_32 = arith.constant dense<0.000000e+00> : vector<16x32xf32>
    %56 = tpu.matmul %54, %55, %cst_32 {dimension_numbers = #tpu.dot_dimension_numbers<[1], [0], [0], [1], [0, 0, 1, 1], [], []>} : vector<16x16xbf16>, vector<16x32xbf16>, vector<16x32xf32> -> vector<16x32xf32>
    %c0_33 = arith.constant 0 : index
    %c0_34 = arith.constant 0 : index
    %57 = vector.load %arg10[%c0_33, %c0_34] : memref<1x32xf32, #tpu.memory_space<vmem>>, vector<1x32xf32>
    %58 = vector.broadcast %57 : vector<1x32xf32> to vector<16x32xf32>
    %59 = arith.addf %56, %58 : vector<16x32xf32>
    %60 = arith.addf %52, %59 : vector<16x32xf32>
    %cst_35 = arith.constant 0.000000e+00 : f32
    %61 = vector.broadcast %cst_35 : f32 to vector<16x32xf32>
    %62 = arith.maximumf %60, %61 : vector<16x32xf32>
    %c2_36 = arith.constant 2 : index
    %c0_37 = arith.constant 0 : index
    %63 = vector.load %arg24[%c2_36, %c0_37] : memref<18x32xf32, #tpu.memory_space<vmem>>, vector<16x32xf32>
    tpu.vector_store %arg24[%c2_36, %c0_37], %62 {strides = array<i32>} : memref<18x32xf32, #tpu.memory_space<vmem>>, vector<16x32xf32>,
    %c0_38 = arith.constant 0 : index
    %c0_39 = arith.constant 0 : index
    %64 = vector.load %arg24[%c0_38, %c0_39] : memref<18x32xf32, #tpu.memory_space<vmem>>, vector<16x32xf32>
    %c0_40 = arith.constant 0 : index
    %c0_41 = arith.constant 0 : index
    %65 = vector.load %arg11[%c0_40, %c0_41] : memref<32x32xf32, #tpu.memory_space<vmem>>, vector<32x32xf32>
    %66 = arith.truncf %64 : vector<16x32xf32> to vector<16x32xbf16>
    %67 = arith.truncf %65 : vector<32x32xf32> to vector<32x32xbf16>
    %cst_42 = arith.constant dense<0.000000e+00> : vector<16x32xf32>
    %68 = tpu.matmul %66, %67, %cst_42 {dimension_numbers = #tpu.dot_dimension_numbers<[1], [0], [0], [1], [0, 0, 1, 1], [], []>} : vector<16x32xbf16>, vector<32x32xbf16>, vector<16x32xf32> -> vector<16x32xf32>
    %c0_43 = arith.constant 0 : index
    %c0_44 = arith.constant 0 : index
    %69 = vector.load %arg12[%c0_43, %c0_44] : memref<32x32xf32, #tpu.memory_space<vmem>>, vector<32x32xf32>
    %70 = arith.truncf %62 : vector<16x32xf32> to vector<16x32xbf16>
    %71 = arith.truncf %69 : vector<32x32xf32> to vector<32x32xbf16>
    %cst_45 = arith.constant dense<0.000000e+00> : vector<16x32xf32>
    %72 = tpu.matmul %70, %71, %cst_45 {dimension_numbers = #tpu.dot_dimension_numbers<[1], [0], [0], [1], [0, 0, 1, 1], [], []>} : vector<16x32xbf16>, vector<32x32xbf16>, vector<16x32xf32> -> vector<16x32xf32>
    %73 = arith.addf %68, %72 : vector<16x32xf32>
    %c0_46 = arith.constant 0 : index
    %c0_47 = arith.constant 0 : index
    %74 = vector.load %arg13[%c0_46, %c0_47] : memref<1x32xf32, #tpu.memory_space<vmem>>, vector<1x32xf32>
    %75 = vector.broadcast %74 : vector<1x32xf32> to vector<16x32xf32>
    %76 = arith.addf %73, %75 : vector<16x32xf32>
    %cst_48 = arith.constant 0.000000e+00 : f32
    %77 = vector.broadcast %cst_48 : f32 to vector<16x32xf32>
    %78 = arith.maximumf %76, %77 : vector<16x32xf32>
    %c2_49 = arith.constant 2 : index
    %c0_50 = arith.constant 0 : index
    %79 = vector.load %arg24[%c2_49, %c0_50] : memref<18x32xf32, #tpu.memory_space<vmem>>, vector<16x32xf32>
    tpu.vector_store %arg24[%c2_49, %c0_50], %78 {strides = array<i32>} : memref<18x32xf32, #tpu.memory_space<vmem>>, vector<16x32xf32>,
    %c0_51 = arith.constant 0 : index
    %c0_52 = arith.constant 0 : index
    %80 = vector.load %arg24[%c0_51, %c0_52] : memref<18x32xf32, #tpu.memory_space<vmem>>, vector<16x32xf32>
    %c0_53 = arith.constant 0 : index
    %c0_54 = arith.constant 0 : index
    %81 = vector.load %arg14[%c0_53, %c0_54] : memref<32x32xf32, #tpu.memory_space<vmem>>, vector<32x32xf32>
    %82 = arith.truncf %80 : vector<16x32xf32> to vector<16x32xbf16>
    %83 = arith.truncf %81 : vector<32x32xf32> to vector<32x32xbf16>
    %cst_55 = arith.constant dense<0.000000e+00> : vector<16x32xf32>
    %84 = tpu.matmul %82, %83, %cst_55 {dimension_numbers = #tpu.dot_dimension_numbers<[1], [0], [0], [1], [0, 0, 1, 1], [], []>} : vector<16x32xbf16>, vector<32x32xbf16>, vector<16x32xf32> -> vector<16x32xf32>
    %c0_56 = arith.constant 0 : index
    %c0_57 = arith.constant 0 : index
    %85 = vector.load %arg15[%c0_56, %c0_57] : memref<32x32xf32, #tpu.memory_space<vmem>>, vector<32x32xf32>
    %86 = arith.truncf %78 : vector<16x32xf32> to vector<16x32xbf16>
    %87 = arith.truncf %85 : vector<32x32xf32> to vector<32x32xbf16>
    %cst_58 = arith.constant dense<0.000000e+00> : vector<16x32xf32>
    %88 = tpu.matmul %86, %87, %cst_58 {dimension_numbers = #tpu.dot_dimension_numbers<[1], [0], [0], [1], [0, 0, 1, 1], [], []>} : vector<16x32xbf16>, vector<32x32xbf16>, vector<16x32xf32> -> vector<16x32xf32>
    %89 = arith.addf %84, %88 : vector<16x32xf32>
    %c0_59 = arith.constant 0 : index
    %c0_60 = arith.constant 0 : index
    %90 = vector.load %arg16[%c0_59, %c0_60] : memref<1x32xf32, #tpu.memory_space<vmem>>, vector<1x32xf32>
    %91 = vector.broadcast %90 : vector<1x32xf32> to vector<16x32xf32>
    %92 = arith.addf %89, %91 : vector<16x32xf32>
    %cst_61 = arith.constant 0.000000e+00 : f32
    %93 = vector.broadcast %cst_61 : f32 to vector<16x32xf32>
    %94 = arith.maximumf %92, %93 : vector<16x32xf32>
    %95 = arith.addf %94, %62 : vector<16x32xf32>
    %cst_62 = arith.constant 0.000000e+00 : f32
    %96 = vector.broadcast %cst_62 : f32 to vector<16x32xf32>
    %97 = arith.maximumf %95, %96 : vector<16x32xf32>
    %c0_63 = arith.constant 0 : index
    %c0_64 = arith.constant 0 : index
    %98 = vector.load %arg17[%c0_63, %c0_64] : memref<32x8xf32, #tpu.memory_space<vmem>>, vector<32x8xf32>
    %99 = arith.truncf %97 : vector<16x32xf32> to vector<16x32xbf16>
    %100 = arith.truncf %98 : vector<32x8xf32> to vector<32x8xbf16>
    %cst_65 = arith.constant dense<0.000000e+00> : vector<16x8xf32>
    %101 = tpu.matmul %99, %100, %cst_65 {dimension_numbers = #tpu.dot_dimension_numbers<[1], [0], [0], [1], [0, 0, 1, 1], [], []>} : vector<16x32xbf16>, vector<32x8xbf16>, vector<16x8xf32> -> vector<16x8xf32>
    %c0_66 = arith.constant 0 : index
    %c0_67 = arith.constant 0 : index
    %102 = vector.load %arg18[%c0_66, %c0_67] : memref<1x8xf32, #tpu.memory_space<vmem>>, vector<1x8xf32>
    %103 = vector.broadcast %102 : vector<1x8xf32> to vector<16x8xf32>
    %104 = arith.addf %101, %103 : vector<16x8xf32>
    %c0_68 = arith.constant 0 : index
    %c0_69 = arith.constant 0 : index
    %105 = vector.load %arg25[%c0_68, %c0_69] : memref<16x8xf32, #tpu.memory_space<vmem>>, vector<16x8xf32>
    tpu.vector_store %arg25[%c0_68, %c0_69], %104 {strides = array<i32>} : memref<16x8xf32, #tpu.memory_space<vmem>>, vector<16x8xf32>,
    %c0_70 = arith.constant 0 : index
    %c0_71 = arith.constant 0 : index
    %106 = vector.load %arg19[%c0_70, %c0_71] : memref<1x8xf32, #tpu.memory_space<vmem>>, vector<1x8xf32>
    %c0_72 = arith.constant 0 : index
    %c0_73 = arith.constant 0 : index
    %107 = vector.load %arg20[%c0_72, %c0_73] : memref<1x8xf32, #tpu.memory_space<vmem>>, vector<1x8xf32>
    %c0_74 = arith.constant 0 : index
    %c0_75 = arith.constant 0 : index
    %108 = vector.load %arg21[%c0_74, %c0_75] : memref<8x8xf32, #tpu.memory_space<vmem>>, vector<8x8xf32>
    %c0_76 = arith.constant 0 : index
    %c0_77 = arith.constant 0 : index
    %109 = vector.load %arg1[%c0_76, %c0_77] : memref<16x1xi32, #tpu.memory_space<vmem>>, vector<16x1xi32>
    %110 = vector.broadcast %109 : vector<16x1xi32> to vector<16x8xi32>
    %111 = arith.cmpi eq, %1, %110 : vector<16x8xi32>
    %112 = arith.extui %111 : vector<16x8xi1> to vector<16x8xi32>
    %113 = arith.sitofp %112 : vector<16x8xi32> to vector<16x8xf32>
    %c2_78 = arith.constant 2 : index
    %c0_79 = arith.constant 0 : index
    %114 = vector.load %arg24[%c2_78, %c0_79] : memref<18x32xf32, #tpu.memory_space<vmem>>, vector<16x8xf32>
    tpu.vector_store %arg24[%c2_78, %c0_79], %113 {strides = array<i32>} : memref<18x32xf32, #tpu.memory_space<vmem>>, vector<16x8xf32>,
    %c1_80 = arith.constant 1 : index
    %c0_81 = arith.constant 0 : index
    %115 = vector.load %arg24[%c1_80, %c0_81] : memref<18x32xf32, #tpu.memory_space<vmem>>, vector<16x8xf32>
    %cst_82 = arith.constant dense<0.000000e+00> : vector<16x8xf32>
    %116 = tpu.matmul %115, %108, %cst_82 {dimension_numbers = #tpu.dot_dimension_numbers<[1], [0], [0], [1], [0, 0, 1, 1], [], []>, precision = #tpu.contract_precision<fp32>} : vector<16x8xf32>, vector<8x8xf32>, vector<16x8xf32> -> vector<16x8xf32>
    %117 = arith.addf %104, %116 : vector<16x8xf32>
    %118 = arith.mulf %117, %113 : vector<16x8xf32>
    %cst_83 = arith.constant dense<0.000000e+00> : vector<8xf32>
    %119 = vector.multi_reduction <add>, %118, %cst_83 [0] : vector<16x8xf32> to vector<8xf32>
    %120 = vector.shape_cast %119 : vector<8xf32> to vector<1x8xf32>
    %c0_i32 = arith.constant 0 : i32
    %121 = vector.broadcast %c0_i32 : i32 to vector<16x8xi32>
    %122 = arith.cmpi eq, %2, %121 : vector<16x8xi32>
    %cst_84 = arith.constant 0.000000e+00 : f32
    %123 = vector.broadcast %cst_84 : f32 to vector<16x8xf32>
    %124 = arith.select %122, %113, %123 : vector<16x8xi1>, vector<16x8xf32>
    %cst_85 = arith.constant dense<0.000000e+00> : vector<8xf32>
    %125 = vector.multi_reduction <add>, %124, %cst_85 [0] : vector<16x8xf32> to vector<8xf32>
    %126 = vector.shape_cast %125 : vector<8xf32> to vector<1x8xf32>
    %127 = arith.mulf %106, %126 : vector<1x8xf32>
    %128 = arith.addf %120, %127 : vector<1x8xf32>
    %c15_i32 = arith.constant 15 : i32
    %129 = vector.broadcast %c15_i32 : i32 to vector<16x8xi32>
    %130 = arith.cmpi eq, %2, %129 : vector<16x8xi32>
    %cst_86 = arith.constant 0.000000e+00 : f32
    %131 = vector.broadcast %cst_86 : f32 to vector<16x8xf32>
    %132 = arith.select %130, %113, %131 : vector<16x8xi1>, vector<16x8xf32>
    %cst_87 = arith.constant dense<0.000000e+00> : vector<8xf32>
    %133 = vector.multi_reduction <add>, %132, %cst_87 [0] : vector<16x8xf32> to vector<8xf32>
    %134 = vector.shape_cast %133 : vector<8xf32> to vector<1x8xf32>
    %135 = arith.mulf %107, %134 : vector<1x8xf32>
    %136 = arith.addf %128, %135 : vector<1x8xf32>
    %cst_88 = arith.constant dense<0.000000e+00> : vector<1xf32>
    %137 = vector.multi_reduction <add>, %136, %cst_88 [1] : vector<1x8xf32> to vector<1xf32>
    %138 = vector.shape_cast %137 : vector<1xf32> to vector<1x1xf32>
    %c0_89 = arith.constant 0 : index
    %c0_90 = arith.constant 0 : index
    %139 = vector.load %arg25[%c0_89, %c0_90] : memref<16x8xf32, #tpu.memory_space<vmem>>, vector<1x8xf32>
    %140 = arith.addf %106, %139 : vector<1x8xf32>
    %141 = arith.addf %106, %139 : vector<1x8xf32>
    %c1_91 = arith.constant 1 : index
    %c0_92 = arith.constant 0 : index
    %142 = vector.load %arg25[%c1_91, %c0_92] : memref<16x8xf32, #tpu.memory_space<vmem>>, vector<1x8xf32>
    %143 = vector.broadcast %140 : vector<1x8xf32> to vector<8x8xf32>
    %144 = arith.mulf %143, %9 : vector<8x8xf32>
    %cst_93 = arith.constant dense<0.000000e+00> : vector<8xf32>
    %145 = vector.multi_reduction <add>, %144, %cst_93 [1] : vector<8x8xf32> to vector<8xf32>
    %146 = vector.shape_cast %145 : vector<8xf32> to vector<8x1xf32>
    %147 = vector.broadcast %141 : vector<1x8xf32> to vector<8x8xf32>
    %148 = arith.mulf %147, %9 : vector<8x8xf32>
    %cst_94 = arith.constant dense<0.000000e+00> : vector<8xf32>
    %149 = vector.multi_reduction <add>, %148, %cst_94 [1] : vector<8x8xf32> to vector<8xf32>
    %150 = vector.shape_cast %149 : vector<8xf32> to vector<8x1xf32>
    %151 = vector.broadcast %146 : vector<8x1xf32> to vector<8x8xf32>
    %152 = arith.addf %151, %108 : vector<8x8xf32>
    %cst_95 = arith.constant dense<0xFF800000> : vector<8xf32>
    %153 = vector.multi_reduction <maximumf>, %152, %cst_95 [0] : vector<8x8xf32> to vector<8xf32>
    %154 = vector.shape_cast %153 : vector<8xf32> to vector<1x8xf32>
    %155 = vector.broadcast %154 : vector<1x8xf32> to vector<8x8xf32>
    %156 = arith.subf %152, %155 : vector<8x8xf32>
    %157 = math.exp %156 : vector<8x8xf32>
    %cst_96 = arith.constant dense<0.000000e+00> : vector<8xf32>
    %158 = vector.multi_reduction <add>, %157, %cst_96 [0] : vector<8x8xf32> to vector<8xf32>
    %159 = vector.shape_cast %158 : vector<8xf32> to vector<1x8xf32>
    %160 = math.log %159 : vector<1x8xf32>
    %161 = arith.addf %160, %154 : vector<1x8xf32>
    %162 = arith.addf %161, %142 : vector<1x8xf32>
    %163 = vector.broadcast %150 : vector<8x1xf32> to vector<8x8xf32>
    %164 = arith.addf %163, %108 : vector<8x8xf32>
    %cst_97 = arith.constant dense<0xFF800000> : vector<8xf32>
    %165 = vector.multi_reduction <maximumf>, %164, %cst_97 [0] : vector<8x8xf32> to vector<8xf32>
    %166 = vector.shape_cast %165 : vector<8xf32> to vector<1x8xf32>
    %167 = vector.broadcast %166 : vector<1x8xf32> to vector<8x8xf32>
    %168 = arith.cmpf oeq, %164, %167 : vector<8x8xf32>
    %cst_98 = arith.constant 8.000000e+00 : f32
    %169 = vector.broadcast %cst_98 : f32 to vector<8x8xf32>
    %170 = arith.select %168, %10, %169 : vector<8x8xi1>, vector<8x8xf32>
    %cst_99 = arith.constant dense<0x7F800000> : vector<8xf32>
    %171 = vector.multi_reduction <minimumf>, %170, %cst_99 [0] : vector<8x8xf32> to vector<8xf32>
    %172 = vector.shape_cast %171 : vector<8xf32> to vector<1x8xf32>
    %173 = arith.addf %166, %142 : vector<1x8xf32>
    %c2_100 = arith.constant 2 : index
    %c0_101 = arith.constant 0 : index
    %174 = vector.load %arg25[%c2_100, %c0_101] : memref<16x8xf32, #tpu.memory_space<vmem>>, vector<1x8xf32>
    %175 = vector.broadcast %162 : vector<1x8xf32> to vector<8x8xf32>
    %176 = arith.mulf %175, %9 : vector<8x8xf32>
    %cst_102 = arith.constant dense<0.000000e+00> : vector<8xf32>
    %177 = vector.multi_reduction <add>, %176, %cst_102 [1] : vector<8x8xf32> to vector<8xf32>
    %178 = vector.shape_cast %177 : vector<8xf32> to vector<8x1xf32>
    %179 = vector.broadcast %173 : vector<1x8xf32> to vector<8x8xf32>
    %180 = arith.mulf %179, %9 : vector<8x8xf32>
    %cst_103 = arith.constant dense<0.000000e+00> : vector<8xf32>
    %181 = vector.multi_reduction <add>, %180, %cst_103 [1] : vector<8x8xf32> to vector<8xf32>
    %182 = vector.shape_cast %181 : vector<8xf32> to vector<8x1xf32>
    %183 = vector.broadcast %178 : vector<8x1xf32> to vector<8x8xf32>
    %184 = arith.addf %183, %108 : vector<8x8xf32>
    %cst_104 = arith.constant dense<0xFF800000> : vector<8xf32>
    %185 = vector.multi_reduction <maximumf>, %184, %cst_104 [0] : vector<8x8xf32> to vector<8xf32>
    %186 = vector.shape_cast %185 : vector<8xf32> to vector<1x8xf32>
    %187 = vector.broadcast %186 : vector<1x8xf32> to vector<8x8xf32>
    %188 = arith.subf %184, %187 : vector<8x8xf32>
    %189 = math.exp %188 : vector<8x8xf32>
    %cst_105 = arith.constant dense<0.000000e+00> : vector<8xf32>
    %190 = vector.multi_reduction <add>, %189, %cst_105 [0] : vector<8x8xf32> to vector<8xf32>
    %191 = vector.shape_cast %190 : vector<8xf32> to vector<1x8xf32>
    %192 = math.log %191 : vector<1x8xf32>
    %193 = arith.addf %192, %186 : vector<1x8xf32>
    %194 = arith.addf %193, %174 : vector<1x8xf32>
    %195 = vector.broadcast %182 : vector<8x1xf32> to vector<8x8xf32>
    %196 = arith.addf %195, %108 : vector<8x8xf32>
    %cst_106 = arith.constant dense<0xFF800000> : vector<8xf32>
    %197 = vector.multi_reduction <maximumf>, %196, %cst_106 [0] : vector<8x8xf32> to vector<8xf32>
    %198 = vector.shape_cast %197 : vector<8xf32> to vector<1x8xf32>
    %199 = vector.broadcast %198 : vector<1x8xf32> to vector<8x8xf32>
    %200 = arith.cmpf oeq, %196, %199 : vector<8x8xf32>
    %cst_107 = arith.constant 8.000000e+00 : f32
    %201 = vector.broadcast %cst_107 : f32 to vector<8x8xf32>
    %202 = arith.select %200, %10, %201 : vector<8x8xi1>, vector<8x8xf32>
    %cst_108 = arith.constant dense<0x7F800000> : vector<8xf32>
    %203 = vector.multi_reduction <minimumf>, %202, %cst_108 [0] : vector<8x8xf32> to vector<8xf32>
    %204 = vector.shape_cast %203 : vector<8xf32> to vector<1x8xf32>
    %205 = arith.addf %198, %174 : vector<1x8xf32>
    %c3 = arith.constant 3 : index
    %c0_109 = arith.constant 0 : index
    %206 = vector.load %arg25[%c3, %c0_109] : memref<16x8xf32, #tpu.memory_space<vmem>>, vector<1x8xf32>
    %207 = vector.broadcast %194 : vector<1x8xf32> to vector<8x8xf32>
    %208 = arith.mulf %207, %9 : vector<8x8xf32>
    %cst_110 = arith.constant dense<0.000000e+00> : vector<8xf32>
    %209 = vector.multi_reduction <add>, %208, %cst_110 [1] : vector<8x8xf32> to vector<8xf32>
    %210 = vector.shape_cast %209 : vector<8xf32> to vector<8x1xf32>
    %211 = vector.broadcast %205 : vector<1x8xf32> to vector<8x8xf32>
    %212 = arith.mulf %211, %9 : vector<8x8xf32>
    %cst_111 = arith.constant dense<0.000000e+00> : vector<8xf32>
    %213 = vector.multi_reduction <add>, %212, %cst_111 [1] : vector<8x8xf32> to vector<8xf32>
    %214 = vector.shape_cast %213 : vector<8xf32> to vector<8x1xf32>
    %215 = vector.broadcast %210 : vector<8x1xf32> to vector<8x8xf32>
    %216 = arith.addf %215, %108 : vector<8x8xf32>
    %cst_112 = arith.constant dense<0xFF800000> : vector<8xf32>
    %217 = vector.multi_reduction <maximumf>, %216, %cst_112 [0] : vector<8x8xf32> to vector<8xf32>
    %218 = vector.shape_cast %217 : vector<8xf32> to vector<1x8xf32>
    %219 = vector.broadcast %218 : vector<1x8xf32> to vector<8x8xf32>
    %220 = arith.subf %216, %219 : vector<8x8xf32>
    %221 = math.exp %220 : vector<8x8xf32>
    %cst_113 = arith.constant dense<0.000000e+00> : vector<8xf32>
    %222 = vector.multi_reduction <add>, %221, %cst_113 [0] : vector<8x8xf32> to vector<8xf32>
    %223 = vector.shape_cast %222 : vector<8xf32> to vector<1x8xf32>
    %224 = math.log %223 : vector<1x8xf32>
    %225 = arith.addf %224, %218 : vector<1x8xf32>
    %226 = arith.addf %225, %206 : vector<1x8xf32>
    %227 = vector.broadcast %214 : vector<8x1xf32> to vector<8x8xf32>
    %228 = arith.addf %227, %108 : vector<8x8xf32>
    %cst_114 = arith.constant dense<0xFF800000> : vector<8xf32>
    %229 = vector.multi_reduction <maximumf>, %228, %cst_114 [0] : vector<8x8xf32> to vector<8xf32>
    %230 = vector.shape_cast %229 : vector<8xf32> to vector<1x8xf32>
    %231 = vector.broadcast %230 : vector<1x8xf32> to vector<8x8xf32>
    %232 = arith.cmpf oeq, %228, %231 : vector<8x8xf32>
    %cst_115 = arith.constant 8.000000e+00 : f32
    %233 = vector.broadcast %cst_115 : f32 to vector<8x8xf32>
    %234 = arith.select %232, %10, %233 : vector<8x8xi1>, vector<8x8xf32>
    %cst_116 = arith.constant dense<0x7F800000> : vector<8xf32>
    %235 = vector.multi_reduction <minimumf>, %234, %cst_116 [0] : vector<8x8xf32> to vector<8xf32>
    %236 = vector.shape_cast %235 : vector<8xf32> to vector<1x8xf32>
    %237 = arith.addf %230, %206 : vector<1x8xf32>
    %c4 = arith.constant 4 : index
    %c0_117 = arith.constant 0 : index
    %238 = vector.load %arg25[%c4, %c0_117] : memref<16x8xf32, #tpu.memory_space<vmem>>, vector<1x8xf32>
    %239 = vector.broadcast %226 : vector<1x8xf32> to vector<8x8xf32>
    %240 = arith.mulf %239, %9 : vector<8x8xf32>
    %cst_118 = arith.constant dense<0.000000e+00> : vector<8xf32>
    %241 = vector.multi_reduction <add>, %240, %cst_118 [1] : vector<8x8xf32> to vector<8xf32>
    %242 = vector.shape_cast %241 : vector<8xf32> to vector<8x1xf32>
    %243 = vector.broadcast %237 : vector<1x8xf32> to vector<8x8xf32>
    %244 = arith.mulf %243, %9 : vector<8x8xf32>
    %cst_119 = arith.constant dense<0.000000e+00> : vector<8xf32>
    %245 = vector.multi_reduction <add>, %244, %cst_119 [1] : vector<8x8xf32> to vector<8xf32>
    %246 = vector.shape_cast %245 : vector<8xf32> to vector<8x1xf32>
    %247 = vector.broadcast %242 : vector<8x1xf32> to vector<8x8xf32>
    %248 = arith.addf %247, %108 : vector<8x8xf32>
    %cst_120 = arith.constant dense<0xFF800000> : vector<8xf32>
    %249 = vector.multi_reduction <maximumf>, %248, %cst_120 [0] : vector<8x8xf32> to vector<8xf32>
    %250 = vector.shape_cast %249 : vector<8xf32> to vector<1x8xf32>
    %251 = vector.broadcast %250 : vector<1x8xf32> to vector<8x8xf32>
    %252 = arith.subf %248, %251 : vector<8x8xf32>
    %253 = math.exp %252 : vector<8x8xf32>
    %cst_121 = arith.constant dense<0.000000e+00> : vector<8xf32>
    %254 = vector.multi_reduction <add>, %253, %cst_121 [0] : vector<8x8xf32> to vector<8xf32>
    %255 = vector.shape_cast %254 : vector<8xf32> to vector<1x8xf32>
    %256 = math.log %255 : vector<1x8xf32>
    %257 = arith.addf %256, %250 : vector<1x8xf32>
    %258 = arith.addf %257, %238 : vector<1x8xf32>
    %259 = vector.broadcast %246 : vector<8x1xf32> to vector<8x8xf32>
    %260 = arith.addf %259, %108 : vector<8x8xf32>
    %cst_122 = arith.constant dense<0xFF800000> : vector<8xf32>
    %261 = vector.multi_reduction <maximumf>, %260, %cst_122 [0] : vector<8x8xf32> to vector<8xf32>
    %262 = vector.shape_cast %261 : vector<8xf32> to vector<1x8xf32>
    %263 = vector.broadcast %262 : vector<1x8xf32> to vector<8x8xf32>
    %264 = arith.cmpf oeq, %260, %263 : vector<8x8xf32>
    %cst_123 = arith.constant 8.000000e+00 : f32
    %265 = vector.broadcast %cst_123 : f32 to vector<8x8xf32>
    %266 = arith.select %264, %10, %265 : vector<8x8xi1>, vector<8x8xf32>
    %cst_124 = arith.constant dense<0x7F800000> : vector<8xf32>
    %267 = vector.multi_reduction <minimumf>, %266, %cst_124 [0] : vector<8x8xf32> to vector<8xf32>
    %268 = vector.shape_cast %267 : vector<8xf32> to vector<1x8xf32>
    %269 = arith.addf %262, %238 : vector<1x8xf32>
    %c5 = arith.constant 5 : index
    %c0_125 = arith.constant 0 : index
    %270 = vector.load %arg25[%c5, %c0_125] : memref<16x8xf32, #tpu.memory_space<vmem>>, vector<1x8xf32>
    %271 = vector.broadcast %258 : vector<1x8xf32> to vector<8x8xf32>
    %272 = arith.mulf %271, %9 : vector<8x8xf32>
    %cst_126 = arith.constant dense<0.000000e+00> : vector<8xf32>
    %273 = vector.multi_reduction <add>, %272, %cst_126 [1] : vector<8x8xf32> to vector<8xf32>
    %274 = vector.shape_cast %273 : vector<8xf32> to vector<8x1xf32>
    %275 = vector.broadcast %269 : vector<1x8xf32> to vector<8x8xf32>
    %276 = arith.mulf %275, %9 : vector<8x8xf32>
    %cst_127 = arith.constant dense<0.000000e+00> : vector<8xf32>
    %277 = vector.multi_reduction <add>, %276, %cst_127 [1] : vector<8x8xf32> to vector<8xf32>
    %278 = vector.shape_cast %277 : vector<8xf32> to vector<8x1xf32>
    %279 = vector.broadcast %274 : vector<8x1xf32> to vector<8x8xf32>
    %280 = arith.addf %279, %108 : vector<8x8xf32>
    %cst_128 = arith.constant dense<0xFF800000> : vector<8xf32>
    %281 = vector.multi_reduction <maximumf>, %280, %cst_128 [0] : vector<8x8xf32> to vector<8xf32>
    %282 = vector.shape_cast %281 : vector<8xf32> to vector<1x8xf32>
    %283 = vector.broadcast %282 : vector<1x8xf32> to vector<8x8xf32>
    %284 = arith.subf %280, %283 : vector<8x8xf32>
    %285 = math.exp %284 : vector<8x8xf32>
    %cst_129 = arith.constant dense<0.000000e+00> : vector<8xf32>
    %286 = vector.multi_reduction <add>, %285, %cst_129 [0] : vector<8x8xf32> to vector<8xf32>
    %287 = vector.shape_cast %286 : vector<8xf32> to vector<1x8xf32>
    %288 = math.log %287 : vector<1x8xf32>
    %289 = arith.addf %288, %282 : vector<1x8xf32>
    %290 = arith.addf %289, %270 : vector<1x8xf32>
    %291 = vector.broadcast %278 : vector<8x1xf32> to vector<8x8xf32>
    %292 = arith.addf %291, %108 : vector<8x8xf32>
    %cst_130 = arith.constant dense<0xFF800000> : vector<8xf32>
    %293 = vector.multi_reduction <maximumf>, %292, %cst_130 [0] : vector<8x8xf32> to vector<8xf32>
    %294 = vector.shape_cast %293 : vector<8xf32> to vector<1x8xf32>
    %295 = vector.broadcast %294 : vector<1x8xf32> to vector<8x8xf32>
    %296 = arith.cmpf oeq, %292, %295 : vector<8x8xf32>
    %cst_131 = arith.constant 8.000000e+00 : f32
    %297 = vector.broadcast %cst_131 : f32 to vector<8x8xf32>
    %298 = arith.select %296, %10, %297 : vector<8x8xi1>, vector<8x8xf32>
    %cst_132 = arith.constant dense<0x7F800000> : vector<8xf32>
    %299 = vector.multi_reduction <minimumf>, %298, %cst_132 [0] : vector<8x8xf32> to vector<8xf32>
    %300 = vector.shape_cast %299 : vector<8xf32> to vector<1x8xf32>
    %301 = arith.addf %294, %270 : vector<1x8xf32>
    %c6 = arith.constant 6 : index
    %c0_133 = arith.constant 0 : index
    %302 = vector.load %arg25[%c6, %c0_133] : memref<16x8xf32, #tpu.memory_space<vmem>>, vector<1x8xf32>
    %303 = vector.broadcast %290 : vector<1x8xf32> to vector<8x8xf32>
    %304 = arith.mulf %303, %9 : vector<8x8xf32>
    %cst_134 = arith.constant dense<0.000000e+00> : vector<8xf32>
    %305 = vector.multi_reduction <add>, %304, %cst_134 [1] : vector<8x8xf32> to vector<8xf32>
    %306 = vector.shape_cast %305 : vector<8xf32> to vector<8x1xf32>
    %307 = vector.broadcast %301 : vector<1x8xf32> to vector<8x8xf32>
    %308 = arith.mulf %307, %9 : vector<8x8xf32>
    %cst_135 = arith.constant dense<0.000000e+00> : vector<8xf32>
    %309 = vector.multi_reduction <add>, %308, %cst_135 [1] : vector<8x8xf32> to vector<8xf32>
    %310 = vector.shape_cast %309 : vector<8xf32> to vector<8x1xf32>
    %311 = vector.broadcast %306 : vector<8x1xf32> to vector<8x8xf32>
    %312 = arith.addf %311, %108 : vector<8x8xf32>
    %cst_136 = arith.constant dense<0xFF800000> : vector<8xf32>
    %313 = vector.multi_reduction <maximumf>, %312, %cst_136 [0] : vector<8x8xf32> to vector<8xf32>
    %314 = vector.shape_cast %313 : vector<8xf32> to vector<1x8xf32>
    %315 = vector.broadcast %314 : vector<1x8xf32> to vector<8x8xf32>
    %316 = arith.subf %312, %315 : vector<8x8xf32>
    %317 = math.exp %316 : vector<8x8xf32>
    %cst_137 = arith.constant dense<0.000000e+00> : vector<8xf32>
    %318 = vector.multi_reduction <add>, %317, %cst_137 [0] : vector<8x8xf32> to vector<8xf32>
    %319 = vector.shape_cast %318 : vector<8xf32> to vector<1x8xf32>
    %320 = math.log %319 : vector<1x8xf32>
    %321 = arith.addf %320, %314 : vector<1x8xf32>
    %322 = arith.addf %321, %302 : vector<1x8xf32>
    %323 = vector.broadcast %310 : vector<8x1xf32> to vector<8x8xf32>
    %324 = arith.addf %323, %108 : vector<8x8xf32>
    %cst_138 = arith.constant dense<0xFF800000> : vector<8xf32>
    %325 = vector.multi_reduction <maximumf>, %324, %cst_138 [0] : vector<8x8xf32> to vector<8xf32>
    %326 = vector.shape_cast %325 : vector<8xf32> to vector<1x8xf32>
    %327 = vector.broadcast %326 : vector<1x8xf32> to vector<8x8xf32>
    %328 = arith.cmpf oeq, %324, %327 : vector<8x8xf32>
    %cst_139 = arith.constant 8.000000e+00 : f32
    %329 = vector.broadcast %cst_139 : f32 to vector<8x8xf32>
    %330 = arith.select %328, %10, %329 : vector<8x8xi1>, vector<8x8xf32>
    %cst_140 = arith.constant dense<0x7F800000> : vector<8xf32>
    %331 = vector.multi_reduction <minimumf>, %330, %cst_140 [0] : vector<8x8xf32> to vector<8xf32>
    %332 = vector.shape_cast %331 : vector<8xf32> to vector<1x8xf32>
    %333 = arith.addf %326, %302 : vector<1x8xf32>
    %c7 = arith.constant 7 : index
    %c0_141 = arith.constant 0 : index
    %334 = vector.load %arg25[%c7, %c0_141] : memref<16x8xf32, #tpu.memory_space<vmem>>, vector<1x8xf32>
    %335 = vector.broadcast %322 : vector<1x8xf32> to vector<8x8xf32>
    %336 = arith.mulf %335, %9 : vector<8x8xf32>
    %cst_142 = arith.constant dense<0.000000e+00> : vector<8xf32>
    %337 = vector.multi_reduction <add>, %336, %cst_142 [1] : vector<8x8xf32> to vector<8xf32>
    %338 = vector.shape_cast %337 : vector<8xf32> to vector<8x1xf32>
    %339 = vector.broadcast %333 : vector<1x8xf32> to vector<8x8xf32>
    %340 = arith.mulf %339, %9 : vector<8x8xf32>
    %cst_143 = arith.constant dense<0.000000e+00> : vector<8xf32>
    %341 = vector.multi_reduction <add>, %340, %cst_143 [1] : vector<8x8xf32> to vector<8xf32>
    %342 = vector.shape_cast %341 : vector<8xf32> to vector<8x1xf32>
    %343 = vector.broadcast %338 : vector<8x1xf32> to vector<8x8xf32>
    %344 = arith.addf %343, %108 : vector<8x8xf32>
    %cst_144 = arith.constant dense<0xFF800000> : vector<8xf32>
    %345 = vector.multi_reduction <maximumf>, %344, %cst_144 [0] : vector<8x8xf32> to vector<8xf32>
    %346 = vector.shape_cast %345 : vector<8xf32> to vector<1x8xf32>
    %347 = vector.broadcast %346 : vector<1x8xf32> to vector<8x8xf32>
    %348 = arith.subf %344, %347 : vector<8x8xf32>
    %349 = math.exp %348 : vector<8x8xf32>
    %cst_145 = arith.constant dense<0.000000e+00> : vector<8xf32>
    %350 = vector.multi_reduction <add>, %349, %cst_145 [0] : vector<8x8xf32> to vector<8xf32>
    %351 = vector.shape_cast %350 : vector<8xf32> to vector<1x8xf32>
    %352 = math.log %351 : vector<1x8xf32>
    %353 = arith.addf %352, %346 : vector<1x8xf32>
    %354 = arith.addf %353, %334 : vector<1x8xf32>
    %355 = vector.broadcast %342 : vector<8x1xf32> to vector<8x8xf32>
    %356 = arith.addf %355, %108 : vector<8x8xf32>
    %cst_146 = arith.constant dense<0xFF800000> : vector<8xf32>
    %357 = vector.multi_reduction <maximumf>, %356, %cst_146 [0] : vector<8x8xf32> to vector<8xf32>
    %358 = vector.shape_cast %357 : vector<8xf32> to vector<1x8xf32>
    %359 = vector.broadcast %358 : vector<1x8xf32> to vector<8x8xf32>
    %360 = arith.cmpf oeq, %356, %359 : vector<8x8xf32>
    %cst_147 = arith.constant 8.000000e+00 : f32
    %361 = vector.broadcast %cst_147 : f32 to vector<8x8xf32>
    %362 = arith.select %360, %10, %361 : vector<8x8xi1>, vector<8x8xf32>
    %cst_148 = arith.constant dense<0x7F800000> : vector<8xf32>
    %363 = vector.multi_reduction <minimumf>, %362, %cst_148 [0] : vector<8x8xf32> to vector<8xf32>
    %364 = vector.shape_cast %363 : vector<8xf32> to vector<1x8xf32>
    %365 = arith.addf %358, %334 : vector<1x8xf32>
    %c8 = arith.constant 8 : index
    %c0_149 = arith.constant 0 : index
    %366 = vector.load %arg25[%c8, %c0_149] : memref<16x8xf32, #tpu.memory_space<vmem>>, vector<1x8xf32>
    %367 = vector.broadcast %354 : vector<1x8xf32> to vector<8x8xf32>
    %368 = arith.mulf %367, %9 : vector<8x8xf32>
    %cst_150 = arith.constant dense<0.000000e+00> : vector<8xf32>
    %369 = vector.multi_reduction <add>, %368, %cst_150 [1] : vector<8x8xf32> to vector<8xf32>
    %370 = vector.shape_cast %369 : vector<8xf32> to vector<8x1xf32>
    %371 = vector.broadcast %365 : vector<1x8xf32> to vector<8x8xf32>
    %372 = arith.mulf %371, %9 : vector<8x8xf32>
    %cst_151 = arith.constant dense<0.000000e+00> : vector<8xf32>
    %373 = vector.multi_reduction <add>, %372, %cst_151 [1] : vector<8x8xf32> to vector<8xf32>
    %374 = vector.shape_cast %373 : vector<8xf32> to vector<8x1xf32>
    %375 = vector.broadcast %370 : vector<8x1xf32> to vector<8x8xf32>
    %376 = arith.addf %375, %108 : vector<8x8xf32>
    %cst_152 = arith.constant dense<0xFF800000> : vector<8xf32>
    %377 = vector.multi_reduction <maximumf>, %376, %cst_152 [0] : vector<8x8xf32> to vector<8xf32>
    %378 = vector.shape_cast %377 : vector<8xf32> to vector<1x8xf32>
    %379 = vector.broadcast %378 : vector<1x8xf32> to vector<8x8xf32>
    %380 = arith.subf %376, %379 : vector<8x8xf32>
    %381 = math.exp %380 : vector<8x8xf32>
    %cst_153 = arith.constant dense<0.000000e+00> : vector<8xf32>
    %382 = vector.multi_reduction <add>, %381, %cst_153 [0] : vector<8x8xf32> to vector<8xf32>
    %383 = vector.shape_cast %382 : vector<8xf32> to vector<1x8xf32>
    %384 = math.log %383 : vector<1x8xf32>
    %385 = arith.addf %384, %378 : vector<1x8xf32>
    %386 = arith.addf %385, %366 : vector<1x8xf32>
    %387 = vector.broadcast %374 : vector<8x1xf32> to vector<8x8xf32>
    %388 = arith.addf %387, %108 : vector<8x8xf32>
    %cst_154 = arith.constant dense<0xFF800000> : vector<8xf32>
    %389 = vector.multi_reduction <maximumf>, %388, %cst_154 [0] : vector<8x8xf32> to vector<8xf32>
    %390 = vector.shape_cast %389 : vector<8xf32> to vector<1x8xf32>
    %391 = vector.broadcast %390 : vector<1x8xf32> to vector<8x8xf32>
    %392 = arith.cmpf oeq, %388, %391 : vector<8x8xf32>
    %cst_155 = arith.constant 8.000000e+00 : f32
    %393 = vector.broadcast %cst_155 : f32 to vector<8x8xf32>
    %394 = arith.select %392, %10, %393 : vector<8x8xi1>, vector<8x8xf32>
    %cst_156 = arith.constant dense<0x7F800000> : vector<8xf32>
    %395 = vector.multi_reduction <minimumf>, %394, %cst_156 [0] : vector<8x8xf32> to vector<8xf32>
    %396 = vector.shape_cast %395 : vector<8xf32> to vector<1x8xf32>
    %397 = arith.addf %390, %366 : vector<1x8xf32>
    %c9 = arith.constant 9 : index
    %c0_157 = arith.constant 0 : index
    %398 = vector.load %arg25[%c9, %c0_157] : memref<16x8xf32, #tpu.memory_space<vmem>>, vector<1x8xf32>
    %399 = vector.broadcast %386 : vector<1x8xf32> to vector<8x8xf32>
    %400 = arith.mulf %399, %9 : vector<8x8xf32>
    %cst_158 = arith.constant dense<0.000000e+00> : vector<8xf32>
    %401 = vector.multi_reduction <add>, %400, %cst_158 [1] : vector<8x8xf32> to vector<8xf32>
    %402 = vector.shape_cast %401 : vector<8xf32> to vector<8x1xf32>
    %403 = vector.broadcast %397 : vector<1x8xf32> to vector<8x8xf32>
    %404 = arith.mulf %403, %9 : vector<8x8xf32>
    %cst_159 = arith.constant dense<0.000000e+00> : vector<8xf32>
    %405 = vector.multi_reduction <add>, %404, %cst_159 [1] : vector<8x8xf32> to vector<8xf32>
    %406 = vector.shape_cast %405 : vector<8xf32> to vector<8x1xf32>
    %407 = vector.broadcast %402 : vector<8x1xf32> to vector<8x8xf32>
    %408 = arith.addf %407, %108 : vector<8x8xf32>
    %cst_160 = arith.constant dense<0xFF800000> : vector<8xf32>
    %409 = vector.multi_reduction <maximumf>, %408, %cst_160 [0] : vector<8x8xf32> to vector<8xf32>
    %410 = vector.shape_cast %409 : vector<8xf32> to vector<1x8xf32>
    %411 = vector.broadcast %410 : vector<1x8xf32> to vector<8x8xf32>
    %412 = arith.subf %408, %411 : vector<8x8xf32>
    %413 = math.exp %412 : vector<8x8xf32>
    %cst_161 = arith.constant dense<0.000000e+00> : vector<8xf32>
    %414 = vector.multi_reduction <add>, %413, %cst_161 [0] : vector<8x8xf32> to vector<8xf32>
    %415 = vector.shape_cast %414 : vector<8xf32> to vector<1x8xf32>
    %416 = math.log %415 : vector<1x8xf32>
    %417 = arith.addf %416, %410 : vector<1x8xf32>
    %418 = arith.addf %417, %398 : vector<1x8xf32>
    %419 = vector.broadcast %406 : vector<8x1xf32> to vector<8x8xf32>
    %420 = arith.addf %419, %108 : vector<8x8xf32>
    %cst_162 = arith.constant dense<0xFF800000> : vector<8xf32>
    %421 = vector.multi_reduction <maximumf>, %420, %cst_162 [0] : vector<8x8xf32> to vector<8xf32>
    %422 = vector.shape_cast %421 : vector<8xf32> to vector<1x8xf32>
    %423 = vector.broadcast %422 : vector<1x8xf32> to vector<8x8xf32>
    %424 = arith.cmpf oeq, %420, %423 : vector<8x8xf32>
    %cst_163 = arith.constant 8.000000e+00 : f32
    %425 = vector.broadcast %cst_163 : f32 to vector<8x8xf32>
    %426 = arith.select %424, %10, %425 : vector<8x8xi1>, vector<8x8xf32>
    %cst_164 = arith.constant dense<0x7F800000> : vector<8xf32>
    %427 = vector.multi_reduction <minimumf>, %426, %cst_164 [0] : vector<8x8xf32> to vector<8xf32>
    %428 = vector.shape_cast %427 : vector<8xf32> to vector<1x8xf32>
    %429 = arith.addf %422, %398 : vector<1x8xf32>
    %c10 = arith.constant 10 : index
    %c0_165 = arith.constant 0 : index
    %430 = vector.load %arg25[%c10, %c0_165] : memref<16x8xf32, #tpu.memory_space<vmem>>, vector<1x8xf32>
    %431 = vector.broadcast %418 : vector<1x8xf32> to vector<8x8xf32>
    %432 = arith.mulf %431, %9 : vector<8x8xf32>
    %cst_166 = arith.constant dense<0.000000e+00> : vector<8xf32>
    %433 = vector.multi_reduction <add>, %432, %cst_166 [1] : vector<8x8xf32> to vector<8xf32>
    %434 = vector.shape_cast %433 : vector<8xf32> to vector<8x1xf32>
    %435 = vector.broadcast %429 : vector<1x8xf32> to vector<8x8xf32>
    %436 = arith.mulf %435, %9 : vector<8x8xf32>
    %cst_167 = arith.constant dense<0.000000e+00> : vector<8xf32>
    %437 = vector.multi_reduction <add>, %436, %cst_167 [1] : vector<8x8xf32> to vector<8xf32>
    %438 = vector.shape_cast %437 : vector<8xf32> to vector<8x1xf32>
    %439 = vector.broadcast %434 : vector<8x1xf32> to vector<8x8xf32>
    %440 = arith.addf %439, %108 : vector<8x8xf32>
    %cst_168 = arith.constant dense<0xFF800000> : vector<8xf32>
    %441 = vector.multi_reduction <maximumf>, %440, %cst_168 [0] : vector<8x8xf32> to vector<8xf32>
    %442 = vector.shape_cast %441 : vector<8xf32> to vector<1x8xf32>
    %443 = vector.broadcast %442 : vector<1x8xf32> to vector<8x8xf32>
    %444 = arith.subf %440, %443 : vector<8x8xf32>
    %445 = math.exp %444 : vector<8x8xf32>
    %cst_169 = arith.constant dense<0.000000e+00> : vector<8xf32>
    %446 = vector.multi_reduction <add>, %445, %cst_169 [0] : vector<8x8xf32> to vector<8xf32>
    %447 = vector.shape_cast %446 : vector<8xf32> to vector<1x8xf32>
    %448 = math.log %447 : vector<1x8xf32>
    %449 = arith.addf %448, %442 : vector<1x8xf32>
    %450 = arith.addf %449, %430 : vector<1x8xf32>
    %451 = vector.broadcast %438 : vector<8x1xf32> to vector<8x8xf32>
    %452 = arith.addf %451, %108 : vector<8x8xf32>
    %cst_170 = arith.constant dense<0xFF800000> : vector<8xf32>
    %453 = vector.multi_reduction <maximumf>, %452, %cst_170 [0] : vector<8x8xf32> to vector<8xf32>
    %454 = vector.shape_cast %453 : vector<8xf32> to vector<1x8xf32>
    %455 = vector.broadcast %454 : vector<1x8xf32> to vector<8x8xf32>
    %456 = arith.cmpf oeq, %452, %455 : vector<8x8xf32>
    %cst_171 = arith.constant 8.000000e+00 : f32
    %457 = vector.broadcast %cst_171 : f32 to vector<8x8xf32>
    %458 = arith.select %456, %10, %457 : vector<8x8xi1>, vector<8x8xf32>
    %cst_172 = arith.constant dense<0x7F800000> : vector<8xf32>
    %459 = vector.multi_reduction <minimumf>, %458, %cst_172 [0] : vector<8x8xf32> to vector<8xf32>
    %460 = vector.shape_cast %459 : vector<8xf32> to vector<1x8xf32>
    %461 = arith.addf %454, %430 : vector<1x8xf32>
    %c11 = arith.constant 11 : index
    %c0_173 = arith.constant 0 : index
    %462 = vector.load %arg25[%c11, %c0_173] : memref<16x8xf32, #tpu.memory_space<vmem>>, vector<1x8xf32>
    %463 = vector.broadcast %450 : vector<1x8xf32> to vector<8x8xf32>
    %464 = arith.mulf %463, %9 : vector<8x8xf32>
    %cst_174 = arith.constant dense<0.000000e+00> : vector<8xf32>
    %465 = vector.multi_reduction <add>, %464, %cst_174 [1] : vector<8x8xf32> to vector<8xf32>
    %466 = vector.shape_cast %465 : vector<8xf32> to vector<8x1xf32>
    %467 = vector.broadcast %461 : vector<1x8xf32> to vector<8x8xf32>
    %468 = arith.mulf %467, %9 : vector<8x8xf32>
    %cst_175 = arith.constant dense<0.000000e+00> : vector<8xf32>
    %469 = vector.multi_reduction <add>, %468, %cst_175 [1] : vector<8x8xf32> to vector<8xf32>
    %470 = vector.shape_cast %469 : vector<8xf32> to vector<8x1xf32>
    %471 = vector.broadcast %466 : vector<8x1xf32> to vector<8x8xf32>
    %472 = arith.addf %471, %108 : vector<8x8xf32>
    %cst_176 = arith.constant dense<0xFF800000> : vector<8xf32>
    %473 = vector.multi_reduction <maximumf>, %472, %cst_176 [0] : vector<8x8xf32> to vector<8xf32>
    %474 = vector.shape_cast %473 : vector<8xf32> to vector<1x8xf32>
    %475 = vector.broadcast %474 : vector<1x8xf32> to vector<8x8xf32>
    %476 = arith.subf %472, %475 : vector<8x8xf32>
    %477 = math.exp %476 : vector<8x8xf32>
    %cst_177 = arith.constant dense<0.000000e+00> : vector<8xf32>
    %478 = vector.multi_reduction <add>, %477, %cst_177 [0] : vector<8x8xf32> to vector<8xf32>
    %479 = vector.shape_cast %478 : vector<8xf32> to vector<1x8xf32>
    %480 = math.log %479 : vector<1x8xf32>
    %481 = arith.addf %480, %474 : vector<1x8xf32>
    %482 = arith.addf %481, %462 : vector<1x8xf32>
    %483 = vector.broadcast %470 : vector<8x1xf32> to vector<8x8xf32>
    %484 = arith.addf %483, %108 : vector<8x8xf32>
    %cst_178 = arith.constant dense<0xFF800000> : vector<8xf32>
    %485 = vector.multi_reduction <maximumf>, %484, %cst_178 [0] : vector<8x8xf32> to vector<8xf32>
    %486 = vector.shape_cast %485 : vector<8xf32> to vector<1x8xf32>
    %487 = vector.broadcast %486 : vector<1x8xf32> to vector<8x8xf32>
    %488 = arith.cmpf oeq, %484, %487 : vector<8x8xf32>
    %cst_179 = arith.constant 8.000000e+00 : f32
    %489 = vector.broadcast %cst_179 : f32 to vector<8x8xf32>
    %490 = arith.select %488, %10, %489 : vector<8x8xi1>, vector<8x8xf32>
    %cst_180 = arith.constant dense<0x7F800000> : vector<8xf32>
    %491 = vector.multi_reduction <minimumf>, %490, %cst_180 [0] : vector<8x8xf32> to vector<8xf32>
    %492 = vector.shape_cast %491 : vector<8xf32> to vector<1x8xf32>
    %493 = arith.addf %486, %462 : vector<1x8xf32>
    %c12 = arith.constant 12 : index
    %c0_181 = arith.constant 0 : index
    %494 = vector.load %arg25[%c12, %c0_181] : memref<16x8xf32, #tpu.memory_space<vmem>>, vector<1x8xf32>
    %495 = vector.broadcast %482 : vector<1x8xf32> to vector<8x8xf32>
    %496 = arith.mulf %495, %9 : vector<8x8xf32>
    %cst_182 = arith.constant dense<0.000000e+00> : vector<8xf32>
    %497 = vector.multi_reduction <add>, %496, %cst_182 [1] : vector<8x8xf32> to vector<8xf32>
    %498 = vector.shape_cast %497 : vector<8xf32> to vector<8x1xf32>
    %499 = vector.broadcast %493 : vector<1x8xf32> to vector<8x8xf32>
    %500 = arith.mulf %499, %9 : vector<8x8xf32>
    %cst_183 = arith.constant dense<0.000000e+00> : vector<8xf32>
    %501 = vector.multi_reduction <add>, %500, %cst_183 [1] : vector<8x8xf32> to vector<8xf32>
    %502 = vector.shape_cast %501 : vector<8xf32> to vector<8x1xf32>
    %503 = vector.broadcast %498 : vector<8x1xf32> to vector<8x8xf32>
    %504 = arith.addf %503, %108 : vector<8x8xf32>
    %cst_184 = arith.constant dense<0xFF800000> : vector<8xf32>
    %505 = vector.multi_reduction <maximumf>, %504, %cst_184 [0] : vector<8x8xf32> to vector<8xf32>
    %506 = vector.shape_cast %505 : vector<8xf32> to vector<1x8xf32>
    %507 = vector.broadcast %506 : vector<1x8xf32> to vector<8x8xf32>
    %508 = arith.subf %504, %507 : vector<8x8xf32>
    %509 = math.exp %508 : vector<8x8xf32>
    %cst_185 = arith.constant dense<0.000000e+00> : vector<8xf32>
    %510 = vector.multi_reduction <add>, %509, %cst_185 [0] : vector<8x8xf32> to vector<8xf32>
    %511 = vector.shape_cast %510 : vector<8xf32> to vector<1x8xf32>
    %512 = math.log %511 : vector<1x8xf32>
    %513 = arith.addf %512, %506 : vector<1x8xf32>
    %514 = arith.addf %513, %494 : vector<1x8xf32>
    %515 = vector.broadcast %502 : vector<8x1xf32> to vector<8x8xf32>
    %516 = arith.addf %515, %108 : vector<8x8xf32>
    %cst_186 = arith.constant dense<0xFF800000> : vector<8xf32>
    %517 = vector.multi_reduction <maximumf>, %516, %cst_186 [0] : vector<8x8xf32> to vector<8xf32>
    %518 = vector.shape_cast %517 : vector<8xf32> to vector<1x8xf32>
    %519 = vector.broadcast %518 : vector<1x8xf32> to vector<8x8xf32>
    %520 = arith.cmpf oeq, %516, %519 : vector<8x8xf32>
    %cst_187 = arith.constant 8.000000e+00 : f32
    %521 = vector.broadcast %cst_187 : f32 to vector<8x8xf32>
    %522 = arith.select %520, %10, %521 : vector<8x8xi1>, vector<8x8xf32>
    %cst_188 = arith.constant dense<0x7F800000> : vector<8xf32>
    %523 = vector.multi_reduction <minimumf>, %522, %cst_188 [0] : vector<8x8xf32> to vector<8xf32>
    %524 = vector.shape_cast %523 : vector<8xf32> to vector<1x8xf32>
    %525 = arith.addf %518, %494 : vector<1x8xf32>
    %c13 = arith.constant 13 : index
    %c0_189 = arith.constant 0 : index
    %526 = vector.load %arg25[%c13, %c0_189] : memref<16x8xf32, #tpu.memory_space<vmem>>, vector<1x8xf32>
    %527 = vector.broadcast %514 : vector<1x8xf32> to vector<8x8xf32>
    %528 = arith.mulf %527, %9 : vector<8x8xf32>
    %cst_190 = arith.constant dense<0.000000e+00> : vector<8xf32>
    %529 = vector.multi_reduction <add>, %528, %cst_190 [1] : vector<8x8xf32> to vector<8xf32>
    %530 = vector.shape_cast %529 : vector<8xf32> to vector<8x1xf32>
    %531 = vector.broadcast %525 : vector<1x8xf32> to vector<8x8xf32>
    %532 = arith.mulf %531, %9 : vector<8x8xf32>
    %cst_191 = arith.constant dense<0.000000e+00> : vector<8xf32>
    %533 = vector.multi_reduction <add>, %532, %cst_191 [1] : vector<8x8xf32> to vector<8xf32>
    %534 = vector.shape_cast %533 : vector<8xf32> to vector<8x1xf32>
    %535 = vector.broadcast %530 : vector<8x1xf32> to vector<8x8xf32>
    %536 = arith.addf %535, %108 : vector<8x8xf32>
    %cst_192 = arith.constant dense<0xFF800000> : vector<8xf32>
    %537 = vector.multi_reduction <maximumf>, %536, %cst_192 [0] : vector<8x8xf32> to vector<8xf32>
    %538 = vector.shape_cast %537 : vector<8xf32> to vector<1x8xf32>
    %539 = vector.broadcast %538 : vector<1x8xf32> to vector<8x8xf32>
    %540 = arith.subf %536, %539 : vector<8x8xf32>
    %541 = math.exp %540 : vector<8x8xf32>
    %cst_193 = arith.constant dense<0.000000e+00> : vector<8xf32>
    %542 = vector.multi_reduction <add>, %541, %cst_193 [0] : vector<8x8xf32> to vector<8xf32>
    %543 = vector.shape_cast %542 : vector<8xf32> to vector<1x8xf32>
    %544 = math.log %543 : vector<1x8xf32>
    %545 = arith.addf %544, %538 : vector<1x8xf32>
    %546 = arith.addf %545, %526 : vector<1x8xf32>
    %547 = vector.broadcast %534 : vector<8x1xf32> to vector<8x8xf32>
    %548 = arith.addf %547, %108 : vector<8x8xf32>
    %cst_194 = arith.constant dense<0xFF800000> : vector<8xf32>
    %549 = vector.multi_reduction <maximumf>, %548, %cst_194 [0] : vector<8x8xf32> to vector<8xf32>
    %550 = vector.shape_cast %549 : vector<8xf32> to vector<1x8xf32>
    %551 = vector.broadcast %550 : vector<1x8xf32> to vector<8x8xf32>
    %552 = arith.cmpf oeq, %548, %551 : vector<8x8xf32>
    %cst_195 = arith.constant 8.000000e+00 : f32
    %553 = vector.broadcast %cst_195 : f32 to vector<8x8xf32>
    %554 = arith.select %552, %10, %553 : vector<8x8xi1>, vector<8x8xf32>
    %cst_196 = arith.constant dense<0x7F800000> : vector<8xf32>
    %555 = vector.multi_reduction <minimumf>, %554, %cst_196 [0] : vector<8x8xf32> to vector<8xf32>
    %556 = vector.shape_cast %555 : vector<8xf32> to vector<1x8xf32>
    %557 = arith.addf %550, %526 : vector<1x8xf32>
    %c14 = arith.constant 14 : index
    %c0_197 = arith.constant 0 : index
    %558 = vector.load %arg25[%c14, %c0_197] : memref<16x8xf32, #tpu.memory_space<vmem>>, vector<1x8xf32>
    %559 = vector.broadcast %546 : vector<1x8xf32> to vector<8x8xf32>
    %560 = arith.mulf %559, %9 : vector<8x8xf32>
    %cst_198 = arith.constant dense<0.000000e+00> : vector<8xf32>
    %561 = vector.multi_reduction <add>, %560, %cst_198 [1] : vector<8x8xf32> to vector<8xf32>
    %562 = vector.shape_cast %561 : vector<8xf32> to vector<8x1xf32>
    %563 = vector.broadcast %557 : vector<1x8xf32> to vector<8x8xf32>
    %564 = arith.mulf %563, %9 : vector<8x8xf32>
    %cst_199 = arith.constant dense<0.000000e+00> : vector<8xf32>
    %565 = vector.multi_reduction <add>, %564, %cst_199 [1] : vector<8x8xf32> to vector<8xf32>
    %566 = vector.shape_cast %565 : vector<8xf32> to vector<8x1xf32>
    %567 = vector.broadcast %562 : vector<8x1xf32> to vector<8x8xf32>
    %568 = arith.addf %567, %108 : vector<8x8xf32>
    %cst_200 = arith.constant dense<0xFF800000> : vector<8xf32>
    %569 = vector.multi_reduction <maximumf>, %568, %cst_200 [0] : vector<8x8xf32> to vector<8xf32>
    %570 = vector.shape_cast %569 : vector<8xf32> to vector<1x8xf32>
    %571 = vector.broadcast %570 : vector<1x8xf32> to vector<8x8xf32>
    %572 = arith.subf %568, %571 : vector<8x8xf32>
    %573 = math.exp %572 : vector<8x8xf32>
    %cst_201 = arith.constant dense<0.000000e+00> : vector<8xf32>
    %574 = vector.multi_reduction <add>, %573, %cst_201 [0] : vector<8x8xf32> to vector<8xf32>
    %575 = vector.shape_cast %574 : vector<8xf32> to vector<1x8xf32>
    %576 = math.log %575 : vector<1x8xf32>
    %577 = arith.addf %576, %570 : vector<1x8xf32>
    %578 = arith.addf %577, %558 : vector<1x8xf32>
    %579 = vector.broadcast %566 : vector<8x1xf32> to vector<8x8xf32>
    %580 = arith.addf %579, %108 : vector<8x8xf32>
    %cst_202 = arith.constant dense<0xFF800000> : vector<8xf32>
    %581 = vector.multi_reduction <maximumf>, %580, %cst_202 [0] : vector<8x8xf32> to vector<8xf32>
    %582 = vector.shape_cast %581 : vector<8xf32> to vector<1x8xf32>
    %583 = vector.broadcast %582 : vector<1x8xf32> to vector<8x8xf32>
    %584 = arith.cmpf oeq, %580, %583 : vector<8x8xf32>
    %cst_203 = arith.constant 8.000000e+00 : f32
    %585 = vector.broadcast %cst_203 : f32 to vector<8x8xf32>
    %586 = arith.select %584, %10, %585 : vector<8x8xi1>, vector<8x8xf32>
    %cst_204 = arith.constant dense<0x7F800000> : vector<8xf32>
    %587 = vector.multi_reduction <minimumf>, %586, %cst_204 [0] : vector<8x8xf32> to vector<8xf32>
    %588 = vector.shape_cast %587 : vector<8xf32> to vector<1x8xf32>
    %589 = arith.addf %582, %558 : vector<1x8xf32>
    %c15 = arith.constant 15 : index
    %c0_205 = arith.constant 0 : index
    %590 = vector.load %arg25[%c15, %c0_205] : memref<16x8xf32, #tpu.memory_space<vmem>>, vector<1x8xf32>
    %591 = vector.broadcast %578 : vector<1x8xf32> to vector<8x8xf32>
    %592 = arith.mulf %591, %9 : vector<8x8xf32>
    %cst_206 = arith.constant dense<0.000000e+00> : vector<8xf32>
    %593 = vector.multi_reduction <add>, %592, %cst_206 [1] : vector<8x8xf32> to vector<8xf32>
    %594 = vector.shape_cast %593 : vector<8xf32> to vector<8x1xf32>
    %595 = vector.broadcast %589 : vector<1x8xf32> to vector<8x8xf32>
    %596 = arith.mulf %595, %9 : vector<8x8xf32>
    %cst_207 = arith.constant dense<0.000000e+00> : vector<8xf32>
    %597 = vector.multi_reduction <add>, %596, %cst_207 [1] : vector<8x8xf32> to vector<8xf32>
    %598 = vector.shape_cast %597 : vector<8xf32> to vector<8x1xf32>
    %599 = vector.broadcast %594 : vector<8x1xf32> to vector<8x8xf32>
    %600 = arith.addf %599, %108 : vector<8x8xf32>
    %cst_208 = arith.constant dense<0xFF800000> : vector<8xf32>
    %601 = vector.multi_reduction <maximumf>, %600, %cst_208 [0] : vector<8x8xf32> to vector<8xf32>
    %602 = vector.shape_cast %601 : vector<8xf32> to vector<1x8xf32>
    %603 = vector.broadcast %602 : vector<1x8xf32> to vector<8x8xf32>
    %604 = arith.subf %600, %603 : vector<8x8xf32>
    %605 = math.exp %604 : vector<8x8xf32>
    %cst_209 = arith.constant dense<0.000000e+00> : vector<8xf32>
    %606 = vector.multi_reduction <add>, %605, %cst_209 [0] : vector<8x8xf32> to vector<8xf32>
    %607 = vector.shape_cast %606 : vector<8xf32> to vector<1x8xf32>
    %608 = math.log %607 : vector<1x8xf32>
    %609 = arith.addf %608, %602 : vector<1x8xf32>
    %610 = arith.addf %609, %590 : vector<1x8xf32>
    %611 = vector.broadcast %598 : vector<8x1xf32> to vector<8x8xf32>
    %612 = arith.addf %611, %108 : vector<8x8xf32>
    %cst_210 = arith.constant dense<0xFF800000> : vector<8xf32>
    %613 = vector.multi_reduction <maximumf>, %612, %cst_210 [0] : vector<8x8xf32> to vector<8xf32>
    %614 = vector.shape_cast %613 : vector<8xf32> to vector<1x8xf32>
    %615 = vector.broadcast %614 : vector<1x8xf32> to vector<8x8xf32>
    %616 = arith.cmpf oeq, %612, %615 : vector<8x8xf32>
    %cst_211 = arith.constant 8.000000e+00 : f32
    %617 = vector.broadcast %cst_211 : f32 to vector<8x8xf32>
    %618 = arith.select %616, %10, %617 : vector<8x8xi1>, vector<8x8xf32>
    %cst_212 = arith.constant dense<0x7F800000> : vector<8xf32>
    %619 = vector.multi_reduction <minimumf>, %618, %cst_212 [0] : vector<8x8xf32> to vector<8xf32>
    %620 = vector.shape_cast %619 : vector<8xf32> to vector<1x8xf32>
    %621 = arith.addf %614, %590 : vector<1x8xf32>
    %622 = arith.addf %610, %107 : vector<1x8xf32>
    %cst_213 = arith.constant dense<0xFF800000> : vector<1xf32>
    %623 = vector.multi_reduction <maximumf>, %622, %cst_213 [1] : vector<1x8xf32> to vector<1xf32>
    %624 = vector.shape_cast %623 : vector<1xf32> to vector<1x1xf32>
    %625 = vector.broadcast %624 : vector<1x1xf32> to vector<1x8xf32>
    %626 = arith.subf %622, %625 : vector<1x8xf32>
    %627 = math.exp %626 : vector<1x8xf32>
    %cst_214 = arith.constant dense<0.000000e+00> : vector<1xf32>
    %628 = vector.multi_reduction <add>, %627, %cst_214 [1] : vector<1x8xf32> to vector<1xf32>
    %629 = vector.shape_cast %628 : vector<1xf32> to vector<1x1xf32>
    %630 = math.log %629 : vector<1x1xf32>
    %631 = arith.addf %630, %624 : vector<1x1xf32>
    %632 = arith.subf %631, %138 : vector<1x1xf32>
    %c0_215 = arith.constant 0 : index
    %c0_216 = arith.constant 0 : index
    %633 = vector.load %arg22[%c0_215, %c0_216] : memref<1x1xf32, #tpu.memory_space<vmem>>, vector<1x1xf32>
    tpu.vector_store %arg22[%c0_215, %c0_216], %632 {strides = array<i32>} : memref<1x1xf32, #tpu.memory_space<vmem>>, vector<1x1xf32>,
    %634 = arith.addf %621, %107 : vector<1x8xf32>
    %cst_217 = arith.constant dense<0xFF800000> : vector<1xf32>
    %635 = vector.multi_reduction <maximumf>, %634, %cst_217 [1] : vector<1x8xf32> to vector<1xf32>
    %636 = vector.shape_cast %635 : vector<1xf32> to vector<1x1xf32>
    %637 = vector.broadcast %636 : vector<1x1xf32> to vector<1x8xf32>
    %638 = arith.cmpf oeq, %634, %637 : vector<1x8xf32>
    %cst_218 = arith.constant 8.000000e+00 : f32
    %639 = vector.broadcast %cst_218 : f32 to vector<1x8xf32>
    %640 = arith.select %638, %11, %639 : vector<1x8xi1>, vector<1x8xf32>
    %cst_219 = arith.constant dense<0x7F800000> : vector<1xf32>
    %641 = vector.multi_reduction <minimumf>, %640, %cst_219 [1] : vector<1x8xf32> to vector<1xf32>
    %642 = vector.shape_cast %641 : vector<1xf32> to vector<1x1xf32>
    %643 = vector.broadcast %642 : vector<1x1xf32> to vector<1x8xf32>
    %644 = arith.cmpf oeq, %11, %643 : vector<1x8xf32>
    %cst_220 = arith.constant 0.000000e+00 : f32
    %645 = vector.broadcast %cst_220 : f32 to vector<1x8xf32>
    %646 = arith.select %644, %620, %645 : vector<1x8xi1>, vector<1x8xf32>
    %cst_221 = arith.constant dense<0.000000e+00> : vector<1xf32>
    %647 = vector.multi_reduction <add>, %646, %cst_221 [1] : vector<1x8xf32> to vector<1xf32>
    %648 = vector.shape_cast %647 : vector<1xf32> to vector<1x1xf32>
    %649 = vector.broadcast %648 : vector<1x1xf32> to vector<1x8xf32>
    %650 = arith.cmpf oeq, %11, %649 : vector<1x8xf32>
    %cst_222 = arith.constant 0.000000e+00 : f32
    %651 = vector.broadcast %cst_222 : f32 to vector<1x8xf32>
    %652 = arith.select %650, %588, %651 : vector<1x8xi1>, vector<1x8xf32>
    %cst_223 = arith.constant dense<0.000000e+00> : vector<1xf32>
    %653 = vector.multi_reduction <add>, %652, %cst_223 [1] : vector<1x8xf32> to vector<1xf32>
    %654 = vector.shape_cast %653 : vector<1xf32> to vector<1x1xf32>
    %655 = vector.broadcast %654 : vector<1x1xf32> to vector<1x8xf32>
    %656 = arith.cmpf oeq, %11, %655 : vector<1x8xf32>
    %cst_224 = arith.constant 0.000000e+00 : f32
    %657 = vector.broadcast %cst_224 : f32 to vector<1x8xf32>
    %658 = arith.select %656, %556, %657 : vector<1x8xi1>, vector<1x8xf32>
    %cst_225 = arith.constant dense<0.000000e+00> : vector<1xf32>
    %659 = vector.multi_reduction <add>, %658, %cst_225 [1] : vector<1x8xf32> to vector<1xf32>
    %660 = vector.shape_cast %659 : vector<1xf32> to vector<1x1xf32>
    %661 = vector.broadcast %660 : vector<1x1xf32> to vector<1x8xf32>
    %662 = arith.cmpf oeq, %11, %661 : vector<1x8xf32>
    %cst_226 = arith.constant 0.000000e+00 : f32
    %663 = vector.broadcast %cst_226 : f32 to vector<1x8xf32>
    %664 = arith.select %662, %524, %663 : vector<1x8xi1>, vector<1x8xf32>
    %cst_227 = arith.constant dense<0.000000e+00> : vector<1xf32>
    %665 = vector.multi_reduction <add>, %664, %cst_227 [1] : vector<1x8xf32> to vector<1xf32>
    %666 = vector.shape_cast %665 : vector<1xf32> to vector<1x1xf32>
    %667 = vector.broadcast %666 : vector<1x1xf32> to vector<1x8xf32>
    %668 = arith.cmpf oeq, %11, %667 : vector<1x8xf32>
    %cst_228 = arith.constant 0.000000e+00 : f32
    %669 = vector.broadcast %cst_228 : f32 to vector<1x8xf32>
    %670 = arith.select %668, %492, %669 : vector<1x8xi1>, vector<1x8xf32>
    %cst_229 = arith.constant dense<0.000000e+00> : vector<1xf32>
    %671 = vector.multi_reduction <add>, %670, %cst_229 [1] : vector<1x8xf32> to vector<1xf32>
    %672 = vector.shape_cast %671 : vector<1xf32> to vector<1x1xf32>
    %673 = vector.broadcast %672 : vector<1x1xf32> to vector<1x8xf32>
    %674 = arith.cmpf oeq, %11, %673 : vector<1x8xf32>
    %cst_230 = arith.constant 0.000000e+00 : f32
    %675 = vector.broadcast %cst_230 : f32 to vector<1x8xf32>
    %676 = arith.select %674, %460, %675 : vector<1x8xi1>, vector<1x8xf32>
    %cst_231 = arith.constant dense<0.000000e+00> : vector<1xf32>
    %677 = vector.multi_reduction <add>, %676, %cst_231 [1] : vector<1x8xf32> to vector<1xf32>
    %678 = vector.shape_cast %677 : vector<1xf32> to vector<1x1xf32>
    %679 = vector.broadcast %678 : vector<1x1xf32> to vector<1x8xf32>
    %680 = arith.cmpf oeq, %11, %679 : vector<1x8xf32>
    %cst_232 = arith.constant 0.000000e+00 : f32
    %681 = vector.broadcast %cst_232 : f32 to vector<1x8xf32>
    %682 = arith.select %680, %428, %681 : vector<1x8xi1>, vector<1x8xf32>
    %cst_233 = arith.constant dense<0.000000e+00> : vector<1xf32>
    %683 = vector.multi_reduction <add>, %682, %cst_233 [1] : vector<1x8xf32> to vector<1xf32>
    %684 = vector.shape_cast %683 : vector<1xf32> to vector<1x1xf32>
    %685 = vector.broadcast %684 : vector<1x1xf32> to vector<1x8xf32>
    %686 = arith.cmpf oeq, %11, %685 : vector<1x8xf32>
    %cst_234 = arith.constant 0.000000e+00 : f32
    %687 = vector.broadcast %cst_234 : f32 to vector<1x8xf32>
    %688 = arith.select %686, %396, %687 : vector<1x8xi1>, vector<1x8xf32>
    %cst_235 = arith.constant dense<0.000000e+00> : vector<1xf32>
    %689 = vector.multi_reduction <add>, %688, %cst_235 [1] : vector<1x8xf32> to vector<1xf32>
    %690 = vector.shape_cast %689 : vector<1xf32> to vector<1x1xf32>
    %691 = vector.broadcast %690 : vector<1x1xf32> to vector<1x8xf32>
    %692 = arith.cmpf oeq, %11, %691 : vector<1x8xf32>
    %cst_236 = arith.constant 0.000000e+00 : f32
    %693 = vector.broadcast %cst_236 : f32 to vector<1x8xf32>
    %694 = arith.select %692, %364, %693 : vector<1x8xi1>, vector<1x8xf32>
    %cst_237 = arith.constant dense<0.000000e+00> : vector<1xf32>
    %695 = vector.multi_reduction <add>, %694, %cst_237 [1] : vector<1x8xf32> to vector<1xf32>
    %696 = vector.shape_cast %695 : vector<1xf32> to vector<1x1xf32>
    %697 = vector.broadcast %696 : vector<1x1xf32> to vector<1x8xf32>
    %698 = arith.cmpf oeq, %11, %697 : vector<1x8xf32>
    %cst_238 = arith.constant 0.000000e+00 : f32
    %699 = vector.broadcast %cst_238 : f32 to vector<1x8xf32>
    %700 = arith.select %698, %332, %699 : vector<1x8xi1>, vector<1x8xf32>
    %cst_239 = arith.constant dense<0.000000e+00> : vector<1xf32>
    %701 = vector.multi_reduction <add>, %700, %cst_239 [1] : vector<1x8xf32> to vector<1xf32>
    %702 = vector.shape_cast %701 : vector<1xf32> to vector<1x1xf32>
    %703 = vector.broadcast %702 : vector<1x1xf32> to vector<1x8xf32>
    %704 = arith.cmpf oeq, %11, %703 : vector<1x8xf32>
    %cst_240 = arith.constant 0.000000e+00 : f32
    %705 = vector.broadcast %cst_240 : f32 to vector<1x8xf32>
    %706 = arith.select %704, %300, %705 : vector<1x8xi1>, vector<1x8xf32>
    %cst_241 = arith.constant dense<0.000000e+00> : vector<1xf32>
    %707 = vector.multi_reduction <add>, %706, %cst_241 [1] : vector<1x8xf32> to vector<1xf32>
    %708 = vector.shape_cast %707 : vector<1xf32> to vector<1x1xf32>
    %709 = vector.broadcast %708 : vector<1x1xf32> to vector<1x8xf32>
    %710 = arith.cmpf oeq, %11, %709 : vector<1x8xf32>
    %cst_242 = arith.constant 0.000000e+00 : f32
    %711 = vector.broadcast %cst_242 : f32 to vector<1x8xf32>
    %712 = arith.select %710, %268, %711 : vector<1x8xi1>, vector<1x8xf32>
    %cst_243 = arith.constant dense<0.000000e+00> : vector<1xf32>
    %713 = vector.multi_reduction <add>, %712, %cst_243 [1] : vector<1x8xf32> to vector<1xf32>
    %714 = vector.shape_cast %713 : vector<1xf32> to vector<1x1xf32>
    %715 = vector.broadcast %714 : vector<1x1xf32> to vector<1x8xf32>
    %716 = arith.cmpf oeq, %11, %715 : vector<1x8xf32>
    %cst_244 = arith.constant 0.000000e+00 : f32
    %717 = vector.broadcast %cst_244 : f32 to vector<1x8xf32>
    %718 = arith.select %716, %236, %717 : vector<1x8xi1>, vector<1x8xf32>
    %cst_245 = arith.constant dense<0.000000e+00> : vector<1xf32>
    %719 = vector.multi_reduction <add>, %718, %cst_245 [1] : vector<1x8xf32> to vector<1xf32>
    %720 = vector.shape_cast %719 : vector<1xf32> to vector<1x1xf32>
    %721 = vector.broadcast %720 : vector<1x1xf32> to vector<1x8xf32>
    %722 = arith.cmpf oeq, %11, %721 : vector<1x8xf32>
    %cst_246 = arith.constant 0.000000e+00 : f32
    %723 = vector.broadcast %cst_246 : f32 to vector<1x8xf32>
    %724 = arith.select %722, %204, %723 : vector<1x8xi1>, vector<1x8xf32>
    %cst_247 = arith.constant dense<0.000000e+00> : vector<1xf32>
    %725 = vector.multi_reduction <add>, %724, %cst_247 [1] : vector<1x8xf32> to vector<1xf32>
    %726 = vector.shape_cast %725 : vector<1xf32> to vector<1x1xf32>
    %727 = vector.broadcast %726 : vector<1x1xf32> to vector<1x8xf32>
    %728 = arith.cmpf oeq, %11, %727 : vector<1x8xf32>
    %cst_248 = arith.constant 0.000000e+00 : f32
    %729 = vector.broadcast %cst_248 : f32 to vector<1x8xf32>
    %730 = arith.select %728, %172, %729 : vector<1x8xi1>, vector<1x8xf32>
    %cst_249 = arith.constant dense<0.000000e+00> : vector<1xf32>
    %731 = vector.multi_reduction <add>, %730, %cst_249 [1] : vector<1x8xf32> to vector<1xf32>
    %732 = vector.shape_cast %731 : vector<1xf32> to vector<1x1xf32>
    %cst_250 = arith.constant 0.000000e+00 : f32
    %733 = vector.broadcast %cst_250 : f32 to vector<1x16xf32>
    %c0_i32_251 = arith.constant 0 : i32
    %734 = vector.broadcast %c0_i32_251 : i32 to vector<1x16xi32>
    %735 = arith.cmpi eq, %6, %734 : vector<1x16xi32>
    %cst_252 = arith.constant 0.000000e+00 : f32
    %736 = vector.shape_cast %732 : vector<1x1xf32> to vector<1x1xf32>
    %737 = vector.broadcast %736 : vector<1x1xf32> to vector<1x16xf32>
    %738 = vector.broadcast %cst_252 : f32 to vector<1x16xf32>
    %739 = arith.select %735, %737, %738 : vector<1x16xi1>, vector<1x16xf32>
    %740 = arith.addf %733, %739 : vector<1x16xf32>
    %c1_i32 = arith.constant 1 : i32
    %741 = vector.broadcast %c1_i32 : i32 to vector<1x16xi32>
    %742 = arith.cmpi eq, %6, %741 : vector<1x16xi32>
    %cst_253 = arith.constant 0.000000e+00 : f32
    %743 = vector.shape_cast %726 : vector<1x1xf32> to vector<1x1xf32>
    %744 = vector.broadcast %743 : vector<1x1xf32> to vector<1x16xf32>
    %745 = vector.broadcast %cst_253 : f32 to vector<1x16xf32>
    %746 = arith.select %742, %744, %745 : vector<1x16xi1>, vector<1x16xf32>
    %747 = arith.addf %740, %746 : vector<1x16xf32>
    %c2_i32 = arith.constant 2 : i32
    %748 = vector.broadcast %c2_i32 : i32 to vector<1x16xi32>
    %749 = arith.cmpi eq, %6, %748 : vector<1x16xi32>
    %cst_254 = arith.constant 0.000000e+00 : f32
    %750 = vector.shape_cast %720 : vector<1x1xf32> to vector<1x1xf32>
    %751 = vector.broadcast %750 : vector<1x1xf32> to vector<1x16xf32>
    %752 = vector.broadcast %cst_254 : f32 to vector<1x16xf32>
    %753 = arith.select %749, %751, %752 : vector<1x16xi1>, vector<1x16xf32>
    %754 = arith.addf %747, %753 : vector<1x16xf32>
    %c3_i32 = arith.constant 3 : i32
    %755 = vector.broadcast %c3_i32 : i32 to vector<1x16xi32>
    %756 = arith.cmpi eq, %6, %755 : vector<1x16xi32>
    %cst_255 = arith.constant 0.000000e+00 : f32
    %757 = vector.shape_cast %714 : vector<1x1xf32> to vector<1x1xf32>
    %758 = vector.broadcast %757 : vector<1x1xf32> to vector<1x16xf32>
    %759 = vector.broadcast %cst_255 : f32 to vector<1x16xf32>
    %760 = arith.select %756, %758, %759 : vector<1x16xi1>, vector<1x16xf32>
    %761 = arith.addf %754, %760 : vector<1x16xf32>
    %c4_i32 = arith.constant 4 : i32
    %762 = vector.broadcast %c4_i32 : i32 to vector<1x16xi32>
    %763 = arith.cmpi eq, %6, %762 : vector<1x16xi32>
    %cst_256 = arith.constant 0.000000e+00 : f32
    %764 = vector.shape_cast %708 : vector<1x1xf32> to vector<1x1xf32>
    %765 = vector.broadcast %764 : vector<1x1xf32> to vector<1x16xf32>
    %766 = vector.broadcast %cst_256 : f32 to vector<1x16xf32>
    %767 = arith.select %763, %765, %766 : vector<1x16xi1>, vector<1x16xf32>
    %768 = arith.addf %761, %767 : vector<1x16xf32>
    %c5_i32 = arith.constant 5 : i32
    %769 = vector.broadcast %c5_i32 : i32 to vector<1x16xi32>
    %770 = arith.cmpi eq, %6, %769 : vector<1x16xi32>
    %cst_257 = arith.constant 0.000000e+00 : f32
    %771 = vector.shape_cast %702 : vector<1x1xf32> to vector<1x1xf32>
    %772 = vector.broadcast %771 : vector<1x1xf32> to vector<1x16xf32>
    %773 = vector.broadcast %cst_257 : f32 to vector<1x16xf32>
    %774 = arith.select %770, %772, %773 : vector<1x16xi1>, vector<1x16xf32>
    %775 = arith.addf %768, %774 : vector<1x16xf32>
    %c6_i32 = arith.constant 6 : i32
    %776 = vector.broadcast %c6_i32 : i32 to vector<1x16xi32>
    %777 = arith.cmpi eq, %6, %776 : vector<1x16xi32>
    %cst_258 = arith.constant 0.000000e+00 : f32
    %778 = vector.shape_cast %696 : vector<1x1xf32> to vector<1x1xf32>
    %779 = vector.broadcast %778 : vector<1x1xf32> to vector<1x16xf32>
    %780 = vector.broadcast %cst_258 : f32 to vector<1x16xf32>
    %781 = arith.select %777, %779, %780 : vector<1x16xi1>, vector<1x16xf32>
    %782 = arith.addf %775, %781 : vector<1x16xf32>
    %c7_i32 = arith.constant 7 : i32
    %783 = vector.broadcast %c7_i32 : i32 to vector<1x16xi32>
    %784 = arith.cmpi eq, %6, %783 : vector<1x16xi32>
    %cst_259 = arith.constant 0.000000e+00 : f32
    %785 = vector.shape_cast %690 : vector<1x1xf32> to vector<1x1xf32>
    %786 = vector.broadcast %785 : vector<1x1xf32> to vector<1x16xf32>
    %787 = vector.broadcast %cst_259 : f32 to vector<1x16xf32>
    %788 = arith.select %784, %786, %787 : vector<1x16xi1>, vector<1x16xf32>
    %789 = arith.addf %782, %788 : vector<1x16xf32>
    %c8_i32 = arith.constant 8 : i32
    %790 = vector.broadcast %c8_i32 : i32 to vector<1x16xi32>
    %791 = arith.cmpi eq, %6, %790 : vector<1x16xi32>
    %cst_260 = arith.constant 0.000000e+00 : f32
    %792 = vector.shape_cast %684 : vector<1x1xf32> to vector<1x1xf32>
    %793 = vector.broadcast %792 : vector<1x1xf32> to vector<1x16xf32>
    %794 = vector.broadcast %cst_260 : f32 to vector<1x16xf32>
    %795 = arith.select %791, %793, %794 : vector<1x16xi1>, vector<1x16xf32>
    %796 = arith.addf %789, %795 : vector<1x16xf32>
    %c9_i32 = arith.constant 9 : i32
    %797 = vector.broadcast %c9_i32 : i32 to vector<1x16xi32>
    %798 = arith.cmpi eq, %6, %797 : vector<1x16xi32>
    %cst_261 = arith.constant 0.000000e+00 : f32
    %799 = vector.shape_cast %678 : vector<1x1xf32> to vector<1x1xf32>
    %800 = vector.broadcast %799 : vector<1x1xf32> to vector<1x16xf32>
    %801 = vector.broadcast %cst_261 : f32 to vector<1x16xf32>
    %802 = arith.select %798, %800, %801 : vector<1x16xi1>, vector<1x16xf32>
    %803 = arith.addf %796, %802 : vector<1x16xf32>
    %c10_i32 = arith.constant 10 : i32
    %804 = vector.broadcast %c10_i32 : i32 to vector<1x16xi32>
    %805 = arith.cmpi eq, %6, %804 : vector<1x16xi32>
    %cst_262 = arith.constant 0.000000e+00 : f32
    %806 = vector.shape_cast %672 : vector<1x1xf32> to vector<1x1xf32>
    %807 = vector.broadcast %806 : vector<1x1xf32> to vector<1x16xf32>
    %808 = vector.broadcast %cst_262 : f32 to vector<1x16xf32>
    %809 = arith.select %805, %807, %808 : vector<1x16xi1>, vector<1x16xf32>
    %810 = arith.addf %803, %809 : vector<1x16xf32>
    %c11_i32 = arith.constant 11 : i32
    %811 = vector.broadcast %c11_i32 : i32 to vector<1x16xi32>
    %812 = arith.cmpi eq, %6, %811 : vector<1x16xi32>
    %cst_263 = arith.constant 0.000000e+00 : f32
    %813 = vector.shape_cast %666 : vector<1x1xf32> to vector<1x1xf32>
    %814 = vector.broadcast %813 : vector<1x1xf32> to vector<1x16xf32>
    %815 = vector.broadcast %cst_263 : f32 to vector<1x16xf32>
    %816 = arith.select %812, %814, %815 : vector<1x16xi1>, vector<1x16xf32>
    %817 = arith.addf %810, %816 : vector<1x16xf32>
    %c12_i32 = arith.constant 12 : i32
    %818 = vector.broadcast %c12_i32 : i32 to vector<1x16xi32>
    %819 = arith.cmpi eq, %6, %818 : vector<1x16xi32>
    %cst_264 = arith.constant 0.000000e+00 : f32
    %820 = vector.shape_cast %660 : vector<1x1xf32> to vector<1x1xf32>
    %821 = vector.broadcast %820 : vector<1x1xf32> to vector<1x16xf32>
    %822 = vector.broadcast %cst_264 : f32 to vector<1x16xf32>
    %823 = arith.select %819, %821, %822 : vector<1x16xi1>, vector<1x16xf32>
    %824 = arith.addf %817, %823 : vector<1x16xf32>
    %c13_i32 = arith.constant 13 : i32
    %825 = vector.broadcast %c13_i32 : i32 to vector<1x16xi32>
    %826 = arith.cmpi eq, %6, %825 : vector<1x16xi32>
    %cst_265 = arith.constant 0.000000e+00 : f32
    %827 = vector.shape_cast %654 : vector<1x1xf32> to vector<1x1xf32>
    %828 = vector.broadcast %827 : vector<1x1xf32> to vector<1x16xf32>
    %829 = vector.broadcast %cst_265 : f32 to vector<1x16xf32>
    %830 = arith.select %826, %828, %829 : vector<1x16xi1>, vector<1x16xf32>
    %831 = arith.addf %824, %830 : vector<1x16xf32>
    %c14_i32 = arith.constant 14 : i32
    %832 = vector.broadcast %c14_i32 : i32 to vector<1x16xi32>
    %833 = arith.cmpi eq, %6, %832 : vector<1x16xi32>
    %cst_266 = arith.constant 0.000000e+00 : f32
    %834 = vector.shape_cast %648 : vector<1x1xf32> to vector<1x1xf32>
    %835 = vector.broadcast %834 : vector<1x1xf32> to vector<1x16xf32>
    %836 = vector.broadcast %cst_266 : f32 to vector<1x16xf32>
    %837 = arith.select %833, %835, %836 : vector<1x16xi1>, vector<1x16xf32>
    %838 = arith.addf %831, %837 : vector<1x16xf32>
    %c15_i32_267 = arith.constant 15 : i32
    %839 = vector.broadcast %c15_i32_267 : i32 to vector<1x16xi32>
    %840 = arith.cmpi eq, %6, %839 : vector<1x16xi32>
    %cst_268 = arith.constant 0.000000e+00 : f32
    %841 = vector.shape_cast %642 : vector<1x1xf32> to vector<1x1xf32>
    %842 = vector.broadcast %841 : vector<1x1xf32> to vector<1x16xf32>
    %843 = vector.broadcast %cst_268 : f32 to vector<1x16xf32>
    %844 = arith.select %840, %842, %843 : vector<1x16xi1>, vector<1x16xf32>
    %845 = arith.addf %838, %844 : vector<1x16xf32>
    %846 = arith.fptosi %845 : vector<1x16xf32> to vector<1x16xi32>
    %c0_269 = arith.constant 0 : index
    %c0_270 = arith.constant 0 : index
    %847 = vector.load %arg23[%c0_269, %c0_270] : memref<1x16xi32, #tpu.memory_space<vmem>>, vector<1x16xi32>
    tpu.vector_store %arg23[%c0_269, %c0_270], %846 {strides = array<i32>} : memref<1x16xi32, #tpu.memory_space<vmem>>, vector<1x16xi32>,
    return
  }
}

</mosaic_0001>

<llo_original>
// kernel: tpu_custom_call.1
$region0: #{tpu_custom_call.1}
  #allocation0 [shape = 'u32[]', space=smem, size = 0x4, offset = 0x4, fixed_abs, tag = 'smem constant byte address 0x4 - core index']
  #allocation1 [shape = 'u32[72,128]{1,0:T(1,128)}', space=vmem, size = 0x9000, scoped, tag = 'internal scratch']
  #allocation2 [shape = 'f32[18,32]{1,0:T(8,128)}', space=vmem, size = 0x3000, scoped, tag = 'scratch operand']
  #allocation3 [shape = 'f32[16,8]{1,0:T(8,128)}', space=vmem, size = 0x2000, scoped, tag = 'scratch operand']
  %s0 = inlined_call_operand.vmem [shape: s32[16,1], index: 0, kind: input, shape index: {}]
  %s1 = inlined_call_operand.vmem [shape: s32[16,1], index: 1, kind: input, shape index: {}]
  %s2 = inlined_call_operand.vmem [shape: f32[50,16], index: 2, kind: input, shape index: {}]
  %s3 = inlined_call_operand.vmem [shape: f32[16,32], index: 3, kind: input, shape index: {}]
  %s4 = inlined_call_operand.hbm [shape: f32[16,32], index: 4, kind: input, shape index: {}]
  %s5 = inlined_call_operand.hbm [shape: f32[1,32], index: 5, kind: input, shape index: {}]
  %s6 = inlined_call_operand.vmem [shape: f32[32,32], index: 6, kind: input, shape index: {}]
  %s7 = inlined_call_operand.vmem [shape: f32[32,32], index: 7, kind: input, shape index: {}]
  %s8 = inlined_call_operand.hbm [shape: f32[1,32], index: 8, kind: input, shape index: {}]
  %s9 = inlined_call_operand.vmem [shape: f32[16,32], index: 9, kind: input, shape index: {}]
  %s10 = inlined_call_operand.hbm [shape: f32[1,32], index: 10, kind: input, shape index: {}]
  %s11 = inlined_call_operand.vmem [shape: f32[32,32], index: 11, kind: input, shape index: {}]
  %s12 = inlined_call_operand.hbm [shape: f32[32,32], index: 12, kind: input, shape index: {}]
  %s13 = inlined_call_operand.hbm [shape: f32[1,32], index: 13, kind: input, shape index: {}]
  %s14 = inlined_call_operand.hbm [shape: f32[32,32], index: 14, kind: input, shape index: {}]
  %s15 = inlined_call_operand.hbm [shape: f32[32,32], index: 15, kind: input, shape index: {}]
  %s16 = inlined_call_operand.hbm [shape: f32[1,32], index: 16, kind: input, shape index: {}]
  %s17 = inlined_call_operand.vmem [shape: f32[32,8], index: 17, kind: input, shape index: {}]
  %s18 = inlined_call_operand.vmem [shape: f32[1,8], index: 18, kind: input, shape index: {}]
  %s19 = inlined_call_operand.vmem [shape: f32[1,8], index: 19, kind: input, shape index: {}]
  %s20 = inlined_call_operand.vmem [shape: f32[1,8], index: 20, kind: input, shape index: {}]
  %s21 = inlined_call_operand.vmem [shape: f32[8,8], index: 21, kind: input, shape index: {}]
  %s22 = inlined_call_operand.hbm [shape: f32[1,1], index: 22, kind: output, shape index: {0}]
  %s23 = inlined_call_operand.hbm [shape: s32[1,16], index: 23, kind: output, shape index: {1}]
  %24 = xla_tuple %s22, %s23
  %s25 = sld [smem:[#allocation0]]
  $region142: #{tpu_custom_call.1} parent=0
    _
  %s27 = ssub.s32 1, %s25
  %s28 = scalar_select 0, %s27, %s25
  $region1: #{tpu_custom_call.1} parent=0
    #allocation4 [shape = 'u8[8192]{0}', space=vmem, size = 0x2000, scoped, tag = 'input window, operand 4, single buffered']
    #allocation5 [shape = 's32[1]{0}', space=sflag, size = 0x4, scoped, tag = 'scoped memory for tpu_custom_call.1']
    #allocation6 [shape = 's32[1]{0}', space=sflag, size = 0x4, scoped, tag = 'scoped memory for tpu_custom_call.1']
    #allocation7 [shape = 'u8[512]{0}', space=vmem, size = 0x400, scoped, tag = 'input window, operand 5, single buffered']
    #allocation8 [shape = 's32[1]{0}', space=sflag, size = 0x4, scoped, tag = 'scoped memory for tpu_custom_call.1']
    #allocation9 [shape = 'u8[512]{0}', space=vmem, size = 0x400, scoped, tag = 'input window, operand 8, single buffered']
    #allocation10 [shape = 'u8[512]{0}', space=vmem, size = 0x400, scoped, tag = 'input window, operand 10, single buffered']
    #allocation11 [shape = 's32[1]{0}', space=sflag, size = 0x4, scoped, tag = 'scoped memory for tpu_custom_call.1']
    #allocation12 [shape = 'u8[16384]{0}', space=vmem, size = 0x4000, scoped, tag = 'input window, operand 12, single buffered']
    #allocation13 [shape = 'u8[512]{0}', space=vmem, size = 0x400, scoped, tag = 'input window, operand 13, single buffered']
    #allocation14 [shape = 's32[1]{0}', space=sflag, size = 0x4, scoped, tag = 'scoped memory for tpu_custom_call.1']
    #allocation15 [shape = 'u8[16384]{0}', space=vmem, size = 0x4000, scoped, tag = 'input window, operand 14, single buffered']
    #allocation16 [shape = 'u8[16384]{0}', space=vmem, size = 0x4000, scoped, tag = 'input window, operand 15, single buffered']
    #allocation17 [shape = 's32[1]{0}', space=sflag, size = 0x4, scoped, tag = 'scoped memory for tpu_custom_call.1']
    #allocation18 [shape = 'u8[512]{0}', space=vmem, size = 0x400, scoped, tag = 'input window, operand 16, single buffered']
    #allocation19 [shape = 'u8[512]{0}', space=vmem, size = 0x400, scoped, tag = 'output window, operand 0, single buffered']
    #allocation20 [shape = 'u8[512]{0}', space=vmem, size = 0x400, scoped, tag = 'output window, operand 1, single buffered']
    #allocation21 [shape = 's32[1]{0}', space=sflag, size = 0x4, scoped, tag = 'scoped memory for tpu_custom_call.1']
    %29 = vsyncpa [#allocation5], 0
    %30 = vsyncpa [#allocation8], 0
    %31 = vsyncpa [#allocation11], 0
    %32 = vsyncpa [#allocation14], 0
    %33 = vsyncpa [#allocation17], 0
    %34 = vsyncpa [#allocation6], 0
    %35 = vsyncpa [#allocation21], 0
    // Predicated region
    $region2: #{tpu_custom_call.1} parent=1 // pred_check
      _
    $region3: #{tpu_custom_call.1} parent=1 // pred_check_branch
      %37 = sbr.rel (0) target = $region5
    $region4: #{tpu_custom_call.1} parent=1 // pred_region
      _
    $region5: #{tpu_custom_call.1} parent=1 // pred_fallthru
      _
    // Predicated region
    $region6: #{tpu_custom_call.1} parent=1 // pred_check
      _
    $region7: #{tpu_custom_call.1} parent=1 // pred_check_branch
      %39 = sbr.rel (0) target = $region9
    $region8: #{tpu_custom_call.1} parent=1 // pred_region
      _
    $region9: #{tpu_custom_call.1} parent=1 // pred_fallthru
      _
    // Predicated region
    $region10: #{tpu_custom_call.1} parent=1 // pred_check
      _
    $region11: #{tpu_custom_call.1} parent=1 // pred_check_branch
      %41 = sbr.rel (0) target = $region13
    $region12: #{tpu_custom_call.1} parent=1 // pred_region
      _
    $region13: #{tpu_custom_call.1} parent=1 // pred_fallthru
      _
    // Predicated region
    $region14: #{tpu_custom_call.1} parent=1 // pred_check
      _
    $region15: #{tpu_custom_call.1} parent=1 // pred_check_branch
      %43 = sbr.rel (0) target = $region17
    $region16: #{tpu_custom_call.1} parent=1 // pred_region
      _
    $region17: #{tpu_custom_call.1} parent=1 // pred_fallthru
      _
    // Predicated region
    $region18: #{tpu_custom_call.1} parent=1 // pred_check
      _
    $region19: #{tpu_custom_call.1} parent=1 // pred_check_branch
      %45 = sbr.rel (0) target = $region21
    $region20: #{tpu_custom_call.1} parent=1 // pred_region
      %47 = vsyncadd [#allocation5], 0
      %s48 = sshll.u32 %s4, 4
      %s49 = int_to_ptr.hbm [resolvable:$true] %s48
      %s50 = sshll.u32 [#allocation4], 4
      %s51 = int_to_ptr.vmem [resolvable:$true] %s50
      %56 = dma.hbm_to_vmem [thread:$0]  %s49, 256, %s51, [#allocation5], 128, 128, 8
    $region21: #{tpu_custom_call.1} parent=1 // pred_fallthru
      _
    // Predicated region
    $region22: #{tpu_custom_call.1} parent=1 // pred_check
      _
    $region23: #{tpu_custom_call.1} parent=1 // pred_check_branch
      %58 = sbr.rel (0) target = $region25
    $region24: #{tpu_custom_call.1} parent=1 // pred_region
      %60 = vsyncadd [#allocation8], 0
      %s62 = sshll.u32 %s5, 4
      %s63 = int_to_ptr.hbm [resolvable:$true] %s62
      %s64 = sshll.u32 [#allocation7], 4
      %s65 = int_to_ptr.vmem [resolvable:$true] %s64
      %67 = dma.hbm_to_vmem [thread:$0]  %s63, 16, %s65, [#allocation8]
    $region25: #{tpu_custom_call.1} parent=1 // pred_fallthru
      _
    // Predicated region
    $region26: #{tpu_custom_call.1} parent=1 // pred_check
      _
    $region27: #{tpu_custom_call.1} parent=1 // pred_check_branch
      %69 = sbr.rel (0) target = $region29
    $region28: #{tpu_custom_call.1} parent=1 // pred_region
      _
    $region29: #{tpu_custom_call.1} parent=1 // pred_fallthru
      _
    // Predicated region
    $region30: #{tpu_custom_call.1} parent=1 // pred_check
      _
    $region31: #{tpu_custom_call.1} parent=1 // pred_check_branch
      %71 = sbr.rel (0) target = $region33
    $region32: #{tpu_custom_call.1} parent=1 // pred_region
      _
    $region33: #{tpu_custom_call.1} parent=1 // pred_fallthru
      _
    // Predicated region
    $region34: #{tpu_custom_call.1} parent=1 // pred_check
      _
    $region35: #{tpu_custom_call.1} parent=1 // pred_check_branch
      %73 = sbr.rel (0) target = $region37
    $region36: #{tpu_custom_call.1} parent=1 // pred_region
      %75 = vsyncadd [#allocation8], 0
      %s77 = sshll.u32 %s8, 4
      %s78 = int_to_ptr.hbm [resolvable:$true] %s77
      %s79 = sshll.u32 [#allocation9], 4
      %s80 = int_to_ptr.vmem [resolvable:$true] %s79
      %82 = dma.hbm_to_vmem [thread:$0]  %s78, 16, %s80, [#allocation8]
    $region37: #{tpu_custom_call.1} parent=1 // pred_fallthru
      _
    // Predicated region
    $region38: #{tpu_custom_call.1} parent=1 // pred_check
      _
    $region39: #{tpu_custom_call.1} parent=1 // pred_check_branch
      %84 = sbr.rel (0) target = $region41
    $region40: #{tpu_custom_call.1} parent=1 // pred_region
      _
    $region41: #{tpu_custom_call.1} parent=1 // pred_fallthru
      _
    // Predicated region
    $region42: #{tpu_custom_call.1} parent=1 // pred_check
      _
    $region43: #{tpu_custom_call.1} parent=1 // pred_check_branch
      %86 = sbr.rel (0) target = $region45
    $region44: #{tpu_custom_call.1} parent=1 // pred_region
      %88 = vsyncadd [#allocation11], 0
      %s90 = sshll.u32 %s10, 4
      %s91 = int_to_ptr.hbm [resolvable:$true] %s90
      %s92 = sshll.u32 [#allocation10], 4
      %s93 = int_to_ptr.vmem [resolvable:$true] %s92
      %95 = dma.hbm_to_vmem [thread:$0]  %s91, 16, %s93, [#allocation11]
    $region45: #{tpu_custom_call.1} parent=1 // pred_fallthru
      _
    // Predicated region
    $region46: #{tpu_custom_call.1} parent=1 // pred_check
      _
    $region47: #{tpu_custom_call.1} parent=1 // pred_check_branch
      %97 = sbr.rel (0) target = $region49
    $region48: #{tpu_custom_call.1} parent=1 // pred_region
      _
    $region49: #{tpu_custom_call.1} parent=1 // pred_fallthru
      _
    // Predicated region
    $region50: #{tpu_custom_call.1} parent=1 // pred_check
      _
    $region51: #{tpu_custom_call.1} parent=1 // pred_check_branch
      %99 = sbr.rel (0) target = $region53
    $region52: #{tpu_custom_call.1} parent=1 // pred_region
      %101 = vsyncadd [#allocation11], 0
      %s102 = sshll.u32 %s12, 4
      %s103 = int_to_ptr.hbm [resolvable:$true] %s102
      %s104 = sshll.u32 [#allocation12], 4
      %s105 = int_to_ptr.vmem [resolvable:$true] %s104
      %110 = dma.hbm_to_vmem [thread:$0]  %s103, 512, %s105, [#allocation11], 128, 128, 8
    $region53: #{tpu_custom_call.1} parent=1 // pred_fallthru
      _
    // Predicated region
    $region54: #{tpu_custom_call.1} parent=1 // pred_check
      _
    $region55: #{tpu_custom_call.1} parent=1 // pred_check_branch
      %112 = sbr.rel (0) target = $region57
    $region56: #{tpu_custom_call.1} parent=1 // pred_region
      %114 = vsyncadd [#allocation14], 0
      %s116 = sshll.u32 %s13, 4
      %s117 = int_to_ptr.hbm [resolvable:$true] %s116
      %s118 = sshll.u32 [#allocation13], 4
      %s119 = int_to_ptr.vmem [resolvable:$true] %s118
      %121 = dma.hbm_to_vmem [thread:$0]  %s117, 16, %s119, [#allocation14]
    $region57: #{tpu_custom_call.1} parent=1 // pred_fallthru
      _
    // Predicated region
    $region58: #{tpu_custom_call.1} parent=1 // pred_check
      _
    $region59: #{tpu_custom_call.1} parent=1 // pred_check_branch
      %123 = sbr.rel (0) target = $region61
    $region60: #{tpu_custom_call.1} parent=1 // pred_region
      %125 = vsyncadd [#allocation14], 0
      %s126 = sshll.u32 %s14, 4
      %s127 = int_to_ptr.hbm [resolvable:$true] %s126
      %s128 = sshll.u32 [#allocation15], 4
      %s129 = int_to_ptr.vmem [resolvable:$true] %s128
      %134 = dma.hbm_to_vmem [thread:$0]  %s127, 512, %s129, [#allocation14], 128, 128, 8
    $region61: #{tpu_custom_call.1} parent=1 // pred_fallthru
      _
    // Predicated region
    $region62: #{tpu_custom_call.1} parent=1 // pred_check
      _
    $region63: #{tpu_custom_call.1} parent=1 // pred_check_branch
      %136 = sbr.rel (0) target = $region65
    $region64: #{tpu_custom_call.1} parent=1 // pred_region
      %138 = vsyncadd [#allocation17], 0
      %s139 = sshll.u32 %s15, 4
      %s140 = int_to_ptr.hbm [resolvable:$true] %s139
      %s141 = sshll.u32 [#allocation16], 4
      %s142 = int_to_ptr.vmem [resolvable:$true] %s141
      %147 = dma.hbm_to_vmem [thread:$0]  %s140, 512, %s142, [#allocation17], 128, 128, 8
    $region65: #{tpu_custom_call.1} parent=1 // pred_fallthru
      _
    // Predicated region
    $region66: #{tpu_custom_call.1} parent=1 // pred_check
      _
    $region67: #{tpu_custom_call.1} parent=1 // pred_check_branch
      %149 = sbr.rel (0) target = $region69
    $region68: #{tpu_custom_call.1} parent=1 // pred_region
      %151 = vsyncadd [#allocation17], 0
      %s153 = sshll.u32 %s16, 4
      %s154 = int_to_ptr.hbm [resolvable:$true] %s153
      %s155 = sshll.u32 [#allocation18], 4
      %s156 = int_to_ptr.vmem [resolvable:$true] %s155
      %158 = dma.hbm_to_vmem [thread:$0]  %s154, 16, %s156, [#allocation17]
    $region69: #{tpu_custom_call.1} parent=1 // pred_fallthru
      _
    // Predicated region
    $region70: #{tpu_custom_call.1} parent=1 // pred_check
      _
    $region71: #{tpu_custom_call.1} parent=1 // pred_check_branch
      %160 = sbr.rel (0) target = $region73
    $region72: #{tpu_custom_call.1} parent=1 // pred_region
      _
    $region73: #{tpu_custom_call.1} parent=1 // pred_fallthru
      _
    // Predicated region
    $region74: #{tpu_custom_call.1} parent=1 // pred_check
      _
    $region75: #{tpu_custom_call.1} parent=1 // pred_check_branch
      %162 = sbr.rel (0) target = $region77
    $region76: #{tpu_custom_call.1} parent=1 // pred_region
      _
    $region77: #{tpu_custom_call.1} parent=1 // pred_fallthru
      _
    // Predicated region
    $region78: #{tpu_custom_call.1} parent=1 // pred_check
      _
    $region79: #{tpu_custom_call.1} parent=1 // pred_check_branch
      %164 = sbr.rel (0) target = $region81
    $region80: #{tpu_custom_call.1} parent=1 // pred_region
      _
    $region81: #{tpu_custom_call.1} parent=1 // pred_fallthru
      _
    // Predicated region
    $region82: #{tpu_custom_call.1} parent=1 // pred_check
      _
    $region83: #{tpu_custom_call.1} parent=1 // pred_check_branch
      %166 = sbr.rel (0) target = $region85
    $region84: #{tpu_custom_call.1} parent=1 // pred_region
      _
    $region85: #{tpu_custom_call.1} parent=1 // pred_fallthru
      _
    // Predicated region
    $region86: #{tpu_custom_call.1} parent=1 // pred_check
      _
    $region87: #{tpu_custom_call.1} parent=1 // pred_check_branch
      %168 = sbr.rel (0) target = $region89
    $region88: #{tpu_custom_call.1} parent=1 // pred_region
      _
    $region89: #{tpu_custom_call.1} parent=1 // pred_fallthru
      _
    // Predicated region
    $region90: #{tpu_custom_call.1} parent=1 // pred_check
      _
    $region91: #{tpu_custom_call.1} parent=1 // pred_check_branch
      %170 = sbr.rel (0) target = $region93
    $region92: #{tpu_custom_call.1} parent=1 // pred_region
      %172 = dma.done [#allocation5], 256
    $region93: #{tpu_custom_call.1} parent=1 // pred_fallthru
      _
    // Predicated region
    $region94: #{tpu_custom_call.1} parent=1 // pred_check
      _
    $region95: #{tpu_custom_call.1} parent=1 // pred_check_branch
      %174 = sbr.rel (0) target = $region97
    $region96: #{tpu_custom_call.1} parent=1 // pred_region
      %176 = dma.done [#allocation8], 16
    $region97: #{tpu_custom_call.1} parent=1 // pred_fallthru
      _
    // Predicated region
    $region98: #{tpu_custom_call.1} parent=1 // pred_check
      _
    $region99: #{tpu_custom_call.1} parent=1 // pred_check_branch
      %178 = sbr.rel (0) target = $region101
    $region100: #{tpu_custom_call.1} parent=1 // pred_region
      %180 = dma.done [#allocation8], 16
    $region101: #{tpu_custom_call.1} parent=1 // pred_fallthru
      _
    // Predicated region
    $region102: #{tpu_custom_call.1} parent=1 // pred_check
      _
    $region103: #{tpu_custom_call.1} parent=1 // pred_check_branch
      %182 = sbr.rel (0) target = $region105
    $region104: #{tpu_custom_call.1} parent=1 // pred_region
      %184 = dma.done [#allocation11], 16
    $region105: #{tpu_custom_call.1} parent=1 // pred_fallthru
      _
    // Predicated region
    $region106: #{tpu_custom_call.1} parent=1 // pred_check
      _
    $region107: #{tpu_custom_call.1} parent=1 // pred_check_branch
      %186 = sbr.rel (0) target = $region109
    $region108: #{tpu_custom_call.1} parent=1 // pred_region
      %188 = dma.done [#allocation11], 512
    $region109: #{tpu_custom_call.1} parent=1 // pred_fallthru
      _
    // Predicated region
    $region110: #{tpu_custom_call.1} parent=1 // pred_check
      _
    $region111: #{tpu_custom_call.1} parent=1 // pred_check_branch
      %190 = sbr.rel (0) target = $region113
    $region112: #{tpu_custom_call.1} parent=1 // pred_region
      %192 = dma.done [#allocation14], 16
    $region113: #{tpu_custom_call.1} parent=1 // pred_fallthru
      _
    // Predicated region
    $region114: #{tpu_custom_call.1} parent=1 // pred_check
      _
    $region115: #{tpu_custom_call.1} parent=1 // pred_check_branch
      %194 = sbr.rel (0) target = $region117
    $region116: #{tpu_custom_call.1} parent=1 // pred_region
      %196 = dma.done [#allocation14], 512
    $region117: #{tpu_custom_call.1} parent=1 // pred_fallthru
      _
    // Predicated region
    $region118: #{tpu_custom_call.1} parent=1 // pred_check
      _
    $region119: #{tpu_custom_call.1} parent=1 // pred_check_branch
      %198 = sbr.rel (0) target = $region121
    $region120: #{tpu_custom_call.1} parent=1 // pred_region
      %200 = dma.done [#allocation17], 512
    $region121: #{tpu_custom_call.1} parent=1 // pred_fallthru
      _
    // Predicated region
    $region122: #{tpu_custom_call.1} parent=1 // pred_check
      _
    $region123: #{tpu_custom_call.1} parent=1 // pred_check_branch
      %202 = sbr.rel (0) target = $region125
    $region124: #{tpu_custom_call.1} parent=1 // pred_region
      %204 = dma.done [#allocation17], 16
    $region125: #{tpu_custom_call.1} parent=1 // pred_fallthru
      _
    %v206 = vlaneseq
    %v207 = vand.u32 %v206, 127
    %v208 = vlaneseq
    %v209 = vshrl.u32 %v208, 7
    %v210 = vadd.s32 %v209, 8
    %vm211 = vcmp.eq.s32.totalorder %v209, %v207
    %v212 = vsel %vm211, 1, 0
    %v213 = vcvt.s32.f32 %v212
    %v214 = vcvt.s32.f32 %v209
    %v215 = vcvt.s32.f32 %v207
    %vm216 = vcmask 254976
    %217 = vst.msk [vmem:[#allocation2] sm:$0x3] %vm216, 0.0
    %v218 = vld [vmem:[%s0] sm:$0xff]
    %v219 = vld [vmem:[%s0 + $0x8] sm:$0xff]
    %220 = vset.pattern.permute.xlu0 0
    %221 = vperm.xlu0 %220, %v218
    %v222 = vpop.permute.xlu0 %221
    %223 = vset.pattern.permute.xlu0 0
    %224 = vperm.xlu0 %223, %v219
    %v225 = vpop.permute.xlu0 %224
    %vm226 = vcmp.eq.s32.totalorder %v207, %v222
    %vm227 = vcmp.eq.s32.totalorder %v207, %v225
    %v228 = vsel %vm226, 1, 0
    %v229 = vsel %vm227, 1, 0
    %v230 = vcvt.s32.f32 %v228
    %v231 = vcvt.s32.f32 %v229
    %v232 = vld [vmem:[%s2] sm:$0xff]
    %v233 = vld [vmem:[%s2 + $0x8] sm:$0xff]
    %v234 = vld [vmem:[%s2 + $0x10] sm:$0xff]
    %v235 = vld [vmem:[%s2 + $0x18] sm:$0xff]
    %v236 = vld [vmem:[%s2 + $0x20] sm:$0xff]
    %v237 = vld [vmem:[%s2 + $0x28] sm:$0xff]
    %v238 = vld [vmem:[%s2 + $0x30] sm:$0x3]
    %vm239 = vcmask 408576
    %v241 = vsel %vm239, %v230, 0
    %v244 = vsel %vm239, %v231, 0
    %vm246 = vcmask 1041408
    %v248 = vsel %vm246, %v238, 0
    %250 = vmatpush.msra.mxu0 0.0
    %251 = vmatpush.msra.mxu0 0.0
    %252 = vmatpush.msra.mxu0 0.0
    %253 = vmatpush.msra.mxu0 0.0
    %254 = vmatpush.msra.mxu0 0.0
    %255 = vmatpush.msra.mxu0 0.0
    %256 = vmatpush.msra.mxu0 0.0
    %257 = vmatpush.msra.mxu0 0.0
    %258 = vmatpush.msra.mxu0 0.0
    %v259 = vand.u32 %v248, 4294901760
    %260 = vmatpush.msra.mxu0 %v259
    %v261 = vand.u32 %v237, 4294901760
    %262 = vmatpush.msra.mxu0 %v261
    %v263 = vand.u32 %v236, 4294901760
    %264 = vmatpush.msra.mxu0 %v263
    %v265 = vand.u32 %v235, 4294901760
    %266 = vmatpush.msra.mxu0 %v265
    %v267 = vand.u32 %v234, 4294901760
    %268 = vmatpush.msra.mxu0 %v267
    %v269 = vand.u32 %v233, 4294901760
    %270 = vmatpush.msra.mxu0 %v269
    %v271 = vand.u32 %v232, 4294901760
    %272 = vmatpush.msra.mxu0 %v271
    %v273 = vand.u32 %v241, 4294901760
    %v274 = vsub.f32 %v241, %v273
    %v275 = vand.u32 %v274, 4294901760
    %v276 = vsub.f32 %v274, %v275
    %v277 = vand.u32 %v276, 4294901760
    %278 = vmatmul.f32.gmra.mxu0 %v277
    %v279 = vpop.f32.mrf.mxu0
    %v280 = vadd.f32 0.0, %v279
    %v281 = vand.u32 %v244, 4294901760
    %v282 = vsub.f32 %v244, %v281
    %v283 = vand.u32 %v282, 4294901760
    %v284 = vsub.f32 %v282, %v283
    %v285 = vand.u32 %v284, 4294901760
    %286 = vmatmul.f32.gmra.mxu0 %v285
    %v287 = vpop.f32.mrf.mxu0
    %v288 = vadd.f32 0.0, %v287
    %289 = vdwg.mxu0
    %290 = vmatpush.msra.mxu0 0.0
    %291 = vmatpush.msra.mxu0 0.0
    %292 = vmatpush.msra.mxu0 0.0
    %293 = vmatpush.msra.mxu0 0.0
    %294 = vmatpush.msra.mxu0 0.0
    %295 = vmatpush.msra.mxu0 0.0
    %296 = vmatpush.msra.mxu0 0.0
    %297 = vmatpush.msra.mxu0 0.0
    %298 = vmatpush.msra.mxu0 0.0
    %v299 = vand.u32 %v248, 4294901760
    %v300 = vsub.f32 %v248, %v299
    %v301 = vand.u32 %v300, 4294901760
    %v302 = vsub.f32 %v300, %v301
    %v303 = vand.u32 %v302, 4294901760
    %304 = vmatpush.msra.mxu0 %v303
    %v305 = vand.u32 %v237, 4294901760
    %v306 = vsub.f32 %v237, %v305
    %v307 = vand.u32 %v306, 4294901760
    %v308 = vsub.f32 %v306, %v307
    %v309 = vand.u32 %v308, 4294901760
    %310 = vmatpush.msra.mxu0 %v309
    %v311 = vand.u32 %v236, 4294901760
    %v312 = vsub.f32 %v236, %v311
    %v313 = vand.u32 %v312, 4294901760
    %v314 = vsub.f32 %v312, %v313
    %v315 = vand.u32 %v314, 4294901760
    %316 = vmatpush.msra.mxu0 %v315
    %v317 = vand.u32 %v235, 4294901760
    %v318 = vsub.f32 %v235, %v317
    %v319 = vand.u32 %v318, 4294901760
    %v320 = vsub.f32 %v318, %v319
    %v321 = vand.u32 %v320, 4294901760
    %322 = vmatpush.msra.mxu0 %v321
    %v323 = vand.u32 %v234, 4294901760
    %v324 = vsub.f32 %v234, %v323
    %v325 = vand.u32 %v324, 4294901760
    %v326 = vsub.f32 %v324, %v325
    %v327 = vand.u32 %v326, 4294901760
    %328 = vmatpush.msra.mxu0 %v327
    %v329 = vand.u32 %v233, 4294901760
    %v330 = vsub.f32 %v233, %v329
    %v331 = vand.u32 %v330, 4294901760
    %v332 = vsub.f32 %v330, %v331
    %v333 = vand.u32 %v332, 4294901760
    %334 = vmatpush.msra.mxu0 %v333
    %v335 = vand.u32 %v232, 4294901760
    %v336 = vsub.f32 %v232, %v335
    %v337 = vand.u32 %v336, 4294901760
    %v338 = vsub.f32 %v336, %v337
    %v339 = vand.u32 %v338, 4294901760
    %340 = vmatpush.msra.mxu0 %v339
    %v341 = vand.u32 %v241, 4294901760
    %342 = vmatmul.f32.gmra.mxu0 %v341
    %v343 = vpop.f32.mrf.mxu0
    %v344 = vadd.f32 %v280, %v343
    %v345 = vand.u32 %v244, 4294901760
    %346 = vmatmul.f32.gmra.mxu0 %v345
    %v347 = vpop.f32.mrf.mxu0
    %v348 = vadd.f32 %v288, %v347
    %349 = vdwg.mxu0
    %350 = vmatpush.msra.mxu0 0.0
    %351 = vmatpush.msra.mxu0 0.0
    %352 = vmatpush.msra.mxu0 0.0
    %353 = vmatpush.msra.mxu0 0.0
    %354 = vmatpush.msra.mxu0 0.0
    %355 = vmatpush.msra.mxu0 0.0
    %356 = vmatpush.msra.mxu0 0.0
    %357 = vmatpush.msra.mxu0 0.0
    %358 = vmatpush.msra.mxu0 0.0
    %v359 = vand.u32 %v248, 4294901760
    %v360 = vsub.f32 %v248, %v359
    %361 = vmatpush.msra.mxu0 %v360
    %v362 = vand.u32 %v237, 4294901760
    %v363 = vsub.f32 %v237, %v362
    %364 = vmatpush.msra.mxu0 %v363
    %v365 = vand.u32 %v236, 4294901760
    %v366 = vsub.f32 %v236, %v365
    %367 = vmatpush.msra.mxu0 %v366
    %v368 = vand.u32 %v235, 4294901760
    %v369 = vsub.f32 %v235, %v368
    %370 = vmatpush.msra.mxu0 %v369
    %v371 = vand.u32 %v234, 4294901760
    %v372 = vsub.f32 %v234, %v371
    %373 = vmatpush.msra.mxu0 %v372
    %v374 = vand.u32 %v233, 4294901760
    %v375 = vsub.f32 %v233, %v374
    %376 = vmatpush.msra.mxu0 %v375
    %v377 = vand.u32 %v232, 4294901760
    %v378 = vsub.f32 %v232, %v377
    %379 = vmatpush.msra.mxu0 %v378
    %v380 = vand.u32 %v241, 4294901760
    %v381 = vsub.f32 %v241, %v380
    %382 = vmatmul.f32.gmra.mxu0 %v381
    %v383 = vpop.f32.mrf.mxu0
    %v384 = vadd.f32 %v344, %v383
    %v385 = vand.u32 %v244, 4294901760
    %v386 = vsub.f32 %v244, %v385
    %387 = vmatmul.f32.gmra.mxu0 %v386
    %v388 = vpop.f32.mrf.mxu0
    %v389 = vadd.f32 %v348, %v388
    %390 = vdwg.mxu0
    %391 = vmatpush.msra.mxu0 0.0
    %392 = vmatpush.msra.mxu0 0.0
    %393 = vmatpush.msra.mxu0 0.0
    %394 = vmatpush.msra.mxu0 0.0
    %395 = vmatpush.msra.mxu0 0.0
    %396 = vmatpush.msra.mxu0 0.0
    %397 = vmatpush.msra.mxu0 0.0
    %398 = vmatpush.msra.mxu0 0.0
    %399 = vmatpush.msra.mxu0 0.0
    %v400 = vand.u32 %v248, 4294901760
    %401 = vmatpush.msra.mxu0 %v400
    %v402 = vand.u32 %v237, 4294901760
    %403 = vmatpush.msra.mxu0 %v402
    %v404 = vand.u32 %v236, 4294901760
    %405 = vmatpush.msra.mxu0 %v404
    %v406 = vand.u32 %v235, 4294901760
    %407 = vmatpush.msra.mxu0 %v406
    %v408 = vand.u32 %v234, 4294901760
    %409 = vmatpush.msra.mxu0 %v408
    %v410 = vand.u32 %v233, 4294901760
    %411 = vmatpush.msra.mxu0 %v410
    %v412 = vand.u32 %v232, 4294901760
    %413 = vmatpush.msra.mxu0 %v412
    %v414 = vand.u32 %v241, 4294901760
    %v415 = vsub.f32 %v241, %v414
    %v416 = vand.u32 %v415, 4294901760
    %417 = vmatmul.f32.gmra.mxu0 %v416
    %v418 = vpop.f32.mrf.mxu0
    %v419 = vadd.f32 %v384, %v418
    %v420 = vand.u32 %v244, 4294901760
    %v421 = vsub.f32 %v244, %v420
    %v422 = vand.u32 %v421, 4294901760
    %423 = vmatmul.f32.gmra.mxu0 %v422
    %v424 = vpop.f32.mrf.mxu0
    %v425 = vadd.f32 %v389, %v424
    %426 = vdwg.mxu0
    %427 = vmatpush.msra.mxu0 0.0
    %428 = vmatpush.msra.mxu0 0.0
    %429 = vmatpush.msra.mxu0 0.0
    %430 = vmatpush.msra.mxu0 0.0
    %431 = vmatpush.msra.mxu0 0.0
    %432 = vmatpush.msra.mxu0 0.0
    %433 = vmatpush.msra.mxu0 0.0
    %434 = vmatpush.msra.mxu0 0.0
    %435 = vmatpush.msra.mxu0 0.0
    %v436 = vand.u32 %v248, 4294901760
    %v437 = vsub.f32 %v248, %v436
    %v438 = vand.u32 %v437, 4294901760
    %439 = vmatpush.msra.mxu0 %v438
    %v440 = vand.u32 %v237, 4294901760
    %v441 = vsub.f32 %v237, %v440
    %v442 = vand.u32 %v441, 4294901760
    %443 = vmatpush.msra.mxu0 %v442
    %v444 = vand.u32 %v236, 4294901760
    %v445 = vsub.f32 %v236, %v444
    %v446 = vand.u32 %v445, 4294901760
    %447 = vmatpush.msra.mxu0 %v446
    %v448 = vand.u32 %v235, 4294901760
    %v449 = vsub.f32 %v235, %v448
    %v450 = vand.u32 %v449, 4294901760
    %451 = vmatpush.msra.mxu0 %v450
    %v452 = vand.u32 %v234, 4294901760
    %v453 = vsub.f32 %v234, %v452
    %v454 = vand.u32 %v453, 4294901760
    %455 = vmatpush.msra.mxu0 %v454
    %v456 = vand.u32 %v233, 4294901760
    %v457 = vsub.f32 %v233, %v456
    %v458 = vand.u32 %v457, 4294901760
    %459 = vmatpush.msra.mxu0 %v458
    %v460 = vand.u32 %v232, 4294901760
    %v461 = vsub.f32 %v232, %v460
    %v462 = vand.u32 %v461, 4294901760
    %463 = vmatpush.msra.mxu0 %v462
    %v464 = vand.u32 %v241, 4294901760
    %465 = vmatmul.f32.gmra.mxu0 %v464
    %v466 = vpop.f32.mrf.mxu0
    %v467 = vadd.f32 %v419, %v466
    %v468 = vand.u32 %v244, 4294901760
    %469 = vmatmul.f32.gmra.mxu0 %v468
    %v470 = vpop.f32.mrf.mxu0
    %v471 = vadd.f32 %v425, %v470
    %472 = vdwg.mxu0
    %473 = vmatpush.msra.mxu0 0.0
    %474 = vmatpush.msra.mxu0 0.0
    %475 = vmatpush.msra.mxu0 0.0
    %476 = vmatpush.msra.mxu0 0.0
    %477 = vmatpush.msra.mxu0 0.0
    %478 = vmatpush.msra.mxu0 0.0
    %479 = vmatpush.msra.mxu0 0.0
    %480 = vmatpush.msra.mxu0 0.0
    %481 = vmatpush.msra.mxu0 0.0
    %v482 = vand.u32 %v248, 4294901760
    %483 = vmatpush.msra.mxu0 %v482
    %v484 = vand.u32 %v237, 4294901760
    %485 = vmatpush.msra.mxu0 %v484
    %v486 = vand.u32 %v236, 4294901760
    %487 = vmatpush.msra.mxu0 %v486
    %v488 = vand.u32 %v235, 4294901760
    %489 = vmatpush.msra.mxu0 %v488
    %v490 = vand.u32 %v234, 4294901760
    %491 = vmatpush.msra.mxu0 %v490
    %v492 = vand.u32 %v233, 4294901760
    %493 = vmatpush.msra.mxu0 %v492
    %v494 = vand.u32 %v232, 4294901760
    %495 = vmatpush.msra.mxu0 %v494
    %v496 = vand.u32 %v241, 4294901760
    %497 = vmatmul.f32.gmra.mxu0 %v496
    %v498 = vpop.f32.mrf.mxu0
    %v499 = vadd.f32 %v467, %v498
    %v500 = vand.u32 %v244, 4294901760
    %501 = vmatmul.f32.gmra.mxu0 %v500
    %v502 = vpop.f32.mrf.mxu0
    %v503 = vadd.f32 %v471, %v502
    %504 = vdwg.mxu0
    %vm505 = vcmask 130048
    %506 = vst.msk [vmem:[#allocation2 + $0x2] sm:$0xff] %vm505, %v499
    %507 = vst.msk [vmem:[#allocation2 + $0xa] sm:$0xff] %vm505, %v503
    %v508 = vld [vmem:[#allocation2 + $0x1] sm:$0xff]
    %v509 = vld [vmem:[#allocation2 + $0x9] sm:$0xff]
    %v510 = vld [vmem:[%s3] sm:$0xff]
    %v511 = vld [vmem:[%s3 + $0x8] sm:$0xff]
    %v512 = vpack.c.bf16 %v509, %v508
    %v513 = vpack.c.bf16 %v511, %v510
    %v514 = vld [vmem:[#allocation4] sm:$0xff]
    %v515 = vld [vmem:[#allocation4 + $0x8] sm:$0xff]
    %v516 = vpack.c.bf16 %v503, %v499
    %v517 = vpack.c.bf16 %v515, %v514
    %v519 = vsel %vm505, %v516, 0
    %521 = vmatpush.bf16.msra.mxu0 0
    %522 = vmatpush.bf16.msra.mxu0 0
    %523 = vmatpush.bf16.msra.mxu0 0
    %524 = vmatpush.bf16.msra.mxu0 0
    %525 = vmatpush.bf16.msra.mxu0 0
    %526 = vmatpush.bf16.msra.mxu0 0
    %527 = vmatpush.bf16.msra.mxu0 0
    %528 = vmatpush.bf16.msra.mxu0 %v517
    %529 = vmatmul.bf16.gmra.mxu0 %v519
    %v530 = vpop.f32.mrf.mxu0
    %v531 = vadd.f32 0.0, %v530
    %v532 = vpop.f32.mrf.mxu0
    %v533 = vadd.f32 0.0, %v532
    %534 = vdwg.mxu0
    %v536 = vsel %vm505, %v512, 0
    %538 = vmatpush.bf16.msra.mxu0 0
    %539 = vmatpush.bf16.msra.mxu0 0
    %540 = vmatpush.bf16.msra.mxu0 0
    %541 = vmatpush.bf16.msra.mxu0 0
    %542 = vmatpush.bf16.msra.mxu0 0
    %543 = vmatpush.bf16.msra.mxu0 0
    %544 = vmatpush.bf16.msra.mxu0 0
    %545 = vmatpush.bf16.msra.mxu0 %v513
    %546 = vmatmul.bf16.gmra.mxu0 %v536
    %v547 = vpop.f32.mrf.mxu0
    %v548 = vadd.f32 %v531, %v547
    %v549 = vpop.f32.mrf.mxu0
    %v550 = vadd.f32 %v533, %v549
    %551 = vdwg.mxu0
    %v552 = vld [vmem:[#allocation7] sm:$0x1]
    %v554 = vperm.slane %v552, 0
    %v556 = vadd.f32 %v548, %v554
    %v557 = vadd.f32 %v550, %v554
    %v558 = vmax.f32 %v556, 0.0
    %v559 = vmax.f32 %v557, 0.0
    %vm560 = vcmask 261120
    %561 = vst.msk [vmem:[#allocation2 + $0x2] sm:$0xff] %vm560, %v558
    %562 = vst.msk [vmem:[#allocation2 + $0xa] sm:$0xff] %vm560, %v559
    %v563 = vld [vmem:[#allocation2 + $0x1] sm:$0xff]
    %v564 = vld [vmem:[#allocation2 + $0x9] sm:$0xff]
    %v565 = vld [vmem:[%s6] sm:$0xff]
    %v566 = vld [vmem:[%s6 + $0x8] sm:$0xff]
    %v567 = vld [vmem:[%s6 + $0x10] sm:$0xff]
    %v568 = vld [vmem:[%s6 + $0x18] sm:$0xff]
    %v569 = vpack.c.bf16 %v564, %v563
    %v570 = vpack.c.bf16 %v566, %v565
    %v571 = vpack.c.bf16 %v568, %v567
    %v572 = vld [vmem:[%s7] sm:$0xff]
    %v573 = vld [vmem:[%s7 + $0x8] sm:$0xff]
    %v574 = vld [vmem:[%s7 + $0x10] sm:$0xff]
    %v575 = vld [vmem:[%s7 + $0x18] sm:$0xff]
    %v576 = vpack.c.bf16 %v559, %v558
    %v577 = vpack.c.bf16 %v573, %v572
    %v578 = vpack.c.bf16 %v575, %v574
    %v580 = vsel %vm560, %v576, 0
    %582 = vmatpush.bf16.msra.mxu0 0
    %583 = vmatpush.bf16.msra.mxu0 0
    %584 = vmatpush.bf16.msra.mxu0 0
    %585 = vmatpush.bf16.msra.mxu0 0
    %586 = vmatpush.bf16.msra.mxu0 0
    %587 = vmatpush.bf16.msra.mxu0 0
    %588 = vmatpush.bf16.msra.mxu0 %v578
    %589 = vmatpush.bf16.msra.mxu0 %v577
    %590 = vmatmul.bf16.gmra.mxu0 %v580
    %v591 = vpop.f32.mrf.mxu0
    %v592 = vadd.f32 0.0, %v591
    %v593 = vpop.f32.mrf.mxu0
    %v594 = vadd.f32 0.0, %v593
    %595 = vdwg.mxu0
    %v597 = vsel %vm560, %v569, 0
    %599 = vmatpush.bf16.msra.mxu0 0
    %600 = vmatpush.bf16.msra.mxu0 0
    %601 = vmatpush.bf16.msra.mxu0 0
    %602 = vmatpush.bf16.msra.mxu0 0
    %603 = vmatpush.bf16.msra.mxu0 0
    %604 = vmatpush.bf16.msra.mxu0 0
    %605 = vmatpush.bf16.msra.mxu0 %v571
    %606 = vmatpush.bf16.msra.mxu0 %v570
    %607 = vmatmul.bf16.gmra.mxu0 %v597
    %v608 = vpop.f32.mrf.mxu0
    %v609 = vadd.f32 %v592, %v608
    %v610 = vpop.f32.mrf.mxu0
    %v611 = vadd.f32 %v594, %v610
    %612 = vdwg.mxu0
    %v613 = vld [vmem:[#allocation9] sm:$0x1]
    %v615 = vperm.slane %v613, 0
    %v617 = vadd.f32 %v609, %v615
    %v618 = vadd.f32 %v611, %v615
    %v619 = vmax.f32 %v617, 0.0
    %v620 = vmax.f32 %v618, 0.0
    %v621 = vld [vmem:[%s9] sm:$0xff]
    %v622 = vld [vmem:[%s9 + $0x8] sm:$0xff]
    %v623 = vpack.c.bf16 %v622, %v621
    %v624 = vld [vmem:[#allocation10] sm:$0x1]
    %v626 = vperm.slane %v624, 0
    %628 = vmatpush.bf16.msra.mxu0 0
    %629 = vmatpush.bf16.msra.mxu0 0
    %630 = vmatpush.bf16.msra.mxu0 0
    %631 = vmatpush.bf16.msra.mxu0 0
    %632 = vmatpush.bf16.msra.mxu0 0
    %633 = vmatpush.bf16.msra.mxu0 0
    %634 = vmatpush.bf16.msra.mxu0 0
    %635 = vmatpush.bf16.msra.mxu0 %v623
    %636 = vmatmul.bf16.gmra.mxu0 %v519
    %v637 = vpop.f32.mrf.mxu0
    %v638 = vadd.f32 %v626, %v637
    %v639 = vpop.f32.mrf.mxu0
    %v640 = vadd.f32 %v626, %v639
    %641 = vdwg.mxu0
    %v642 = vadd.f32 %v619, %v638
    %v643 = vadd.f32 %v620, %v640
    %v644 = vmax.f32 %v642, 0.0
    %v645 = vmax.f32 %v643, 0.0
    %646 = vst.msk [vmem:[#allocation2 + $0x2] sm:$0xff] %vm560, %v644
    %647 = vst.msk [vmem:[#allocation2 + $0xa] sm:$0xff] %vm560, %v645
    %v648 = vld [vmem:[#allocation2] sm:$0xff]
    %v649 = vld [vmem:[#allocation2 + $0x8] sm:$0xff]
    %v650 = vld [vmem:[%s11] sm:$0xff]
    %v651 = vld [vmem:[%s11 + $0x8] sm:$0xff]
    %v652 = vld [vmem:[%s11 + $0x10] sm:$0xff]
    %v653 = vld [vmem:[%s11 + $0x18] sm:$0xff]
    %v654 = vpack.c.bf16 %v649, %v648
    %v655 = vpack.c.bf16 %v651, %v650
    %v656 = vpack.c.bf16 %v653, %v652
    %v657 = vld [vmem:[#allocation12] sm:$0xff]
    %v658 = vld [vmem:[#allocation12 + $0x8] sm:$0xff]
    %v659 = vld [vmem:[#allocation12 + $0x10] sm:$0xff]
    %v660 = vld [vmem:[#allocation12 + $0x18] sm:$0xff]
    %v661 = vpack.c.bf16 %v645, %v644
    %v662 = vpack.c.bf16 %v658, %v657
    %v663 = vpack.c.bf16 %v660, %v659
    %v665 = vsel %vm560, %v661, 0
    %667 = vmatpush.bf16.msra.mxu0 0
    %668 = vmatpush.bf16.msra.mxu0 0
    %669 = vmatpush.bf16.msra.mxu0 0
    %670 = vmatpush.bf16.msra.mxu0 0
    %671 = vmatpush.bf16.msra.mxu0 0
    %672 = vmatpush.bf16.msra.mxu0 0
    %673 = vmatpush.bf16.msra.mxu0 %v663
    %674 = vmatpush.bf16.msra.mxu0 %v662
    %675 = vmatmul.bf16.gmra.mxu0 %v665
    %v676 = vpop.f32.mrf.mxu0
    %v677 = vadd.f32 0.0, %v676
    %v678 = vpop.f32.mrf.mxu0
    %v679 = vadd.f32 0.0, %v678
    %680 = vdwg.mxu0
    %v682 = vsel %vm560, %v654, 0
    %684 = vmatpush.bf16.msra.mxu0 0
    %685 = vmatpush.bf16.msra.mxu0 0
    %686 = vmatpush.bf16.msra.mxu0 0
    %687 = vmatpush.bf16.msra.mxu0 0
    %688 = vmatpush.bf16.msra.mxu0 0
    %689 = vmatpush.bf16.msra.mxu0 0
    %690 = vmatpush.bf16.msra.mxu0 %v656
    %691 = vmatpush.bf16.msra.mxu0 %v655
    %692 = vmatmul.bf16.gmra.mxu0 %v682
    %v693 = vpop.f32.mrf.mxu0
    %v694 = vadd.f32 %v677, %v693
    %v695 = vpop.f32.mrf.mxu0
    %v696 = vadd.f32 %v679, %v695
    %697 = vdwg.mxu0
    %v698 = vld [vmem:[#allocation13] sm:$0x1]
    %v700 = vperm.slane %v698, 0
    %v702 = vadd.f32 %v694, %v700
    %v703 = vadd.f32 %v696, %v700
    %v704 = vmax.f32 %v702, 0.0
    %v705 = vmax.f32 %v703, 0.0
    %706 = vst.msk [vmem:[#allocation2 + $0x2] sm:$0xff] %vm560, %v704
    %707 = vst.msk [vmem:[#allocation2 + $0xa] sm:$0xff] %vm560, %v705
    %v708 = vld [vmem:[#allocation2] sm:$0xff]
    %v709 = vld [vmem:[#allocation2 + $0x8] sm:$0xff]
    %v710 = vld [vmem:[#allocation15] sm:$0xff]
    %v711 = vld [vmem:[#allocation15 + $0x8] sm:$0xff]
    %v712 = vld [vmem:[#allocation15 + $0x10] sm:$0xff]
    %v713 = vld [vmem:[#allocation15 + $0x18] sm:$0xff]
    %v714 = vpack.c.bf16 %v709, %v708
    %v715 = vpack.c.bf16 %v711, %v710
    %v716 = vpack.c.bf16 %v713, %v712
    %v717 = vld [vmem:[#allocation16] sm:$0xff]
    %v718 = vld [vmem:[#allocation16 + $0x8] sm:$0xff]
    %v719 = vld [vmem:[#allocation16 + $0x10] sm:$0xff]
    %v720 = vld [vmem:[#allocation16 + $0x18] sm:$0xff]
    %v721 = vpack.c.bf16 %v705, %v704
    %v722 = vpack.c.bf16 %v718, %v717
    %v723 = vpack.c.bf16 %v720, %v719
    %v725 = vsel %vm560, %v721, 0
    %727 = vmatpush.bf16.msra.mxu0 0
    %728 = vmatpush.bf16.msra.mxu0 0
    %729 = vmatpush.bf16.msra.mxu0 0
    %730 = vmatpush.bf16.msra.mxu0 0
    %731 = vmatpush.bf16.msra.mxu0 0
    %732 = vmatpush.bf16.msra.mxu0 0
    %733 = vmatpush.bf16.msra.mxu0 %v723
    %734 = vmatpush.bf16.msra.mxu0 %v722
    %735 = vmatmul.bf16.gmra.mxu0 %v725
    %v736 = vpop.f32.mrf.mxu0
    %v737 = vadd.f32 0.0, %v736
    %v738 = vpop.f32.mrf.mxu0
    %v739 = vadd.f32 0.0, %v738
    %740 = vdwg.mxu0
    %v742 = vsel %vm560, %v714, 0
    %744 = vmatpush.bf16.msra.mxu0 0
    %745 = vmatpush.bf16.msra.mxu0 0
    %746 = vmatpush.bf16.msra.mxu0 0
    %747 = vmatpush.bf16.msra.mxu0 0
    %748 = vmatpush.bf16.msra.mxu0 0
    %749 = vmatpush.bf16.msra.mxu0 0
    %750 = vmatpush.bf16.msra.mxu0 %v716
    %751 = vmatpush.bf16.msra.mxu0 %v715
    %752 = vmatmul.bf16.gmra.mxu0 %v742
    %v753 = vpop.f32.mrf.mxu0
    %v754 = vadd.f32 %v737, %v753
    %v755 = vpop.f32.mrf.mxu0
    %v756 = vadd.f32 %v739, %v755
    %757 = vdwg.mxu0
    %v758 = vld [vmem:[#allocation18] sm:$0x1]
    %v760 = vperm.slane %v758, 0
    %v762 = vadd.f32 %v754, %v760
    %v763 = vadd.f32 %v756, %v760
    %v764 = vmax.f32 %v762, 0.0
    %v765 = vmax.f32 %v763, 0.0
    %v766 = vadd.f32 %v764, %v644
    %v767 = vadd.f32 %v765, %v645
    %v768 = vmax.f32 %v766, 0.0
    %v769 = vmax.f32 %v767, 0.0
    %v770 = vld [vmem:[%s17] sm:$0xff]
    %v771 = vld [vmem:[%s17 + $0x8] sm:$0xff]
    %v772 = vld [vmem:[%s17 + $0x10] sm:$0xff]
    %v773 = vld [vmem:[%s17 + $0x18] sm:$0xff]
    %v774 = vpack.c.bf16 %v769, %v768
    %v775 = vpack.c.bf16 %v771, %v770
    %v776 = vpack.c.bf16 %v773, %v772
    %v777 = vld [vmem:[%s18] sm:$0x1]
    %v779 = vperm.slane %v777, 0
    %v782 = vsel %vm560, %v774, 0
    %784 = vmatpush.bf16.msra.mxu0 0
    %785 = vmatpush.bf16.msra.mxu0 0
    %786 = vmatpush.bf16.msra.mxu0 0
    %787 = vmatpush.bf16.msra.mxu0 0
    %788 = vmatpush.bf16.msra.mxu0 0
    %789 = vmatpush.bf16.msra.mxu0 0
    %790 = vmatpush.bf16.msra.mxu0 %v776
    %791 = vmatpush.bf16.msra.mxu0 %v775
    %792 = vmatmul.bf16.gmra.mxu0 %v782
    %v793 = vpop.f32.mrf.mxu0
    %v794 = vadd.f32 %v779, %v793
    %v795 = vpop.f32.mrf.mxu0
    %v796 = vadd.f32 %v779, %v795
    %797 = vdwg.mxu0
    %vm798 = vcmask 64512
    %799 = vst.msk [vmem:[#allocation3] sm:$0xff] %vm798, %v794
    %800 = vst.msk [vmem:[#allocation3 + $0x8] sm:$0xff] %vm798, %v796
    %v801 = vld [vmem:[%s19] sm:$0x1]
    %v802 = vld [vmem:[%s20] sm:$0x1]
    %v803 = vld [vmem:[%s21] sm:$0xff]
    %v804 = vld [vmem:[%s1] sm:$0xff]
    %v805 = vld [vmem:[%s1 + $0x8] sm:$0xff]
    %806 = vset.pattern.permute.xlu0 0
    %807 = vperm.xlu0 %806, %v804
    %v808 = vpop.permute.xlu0 %807
    %809 = vset.pattern.permute.xlu0 0
    %810 = vperm.xlu0 %809, %v805
    %v811 = vpop.permute.xlu0 %810
    %vm812 = vcmp.eq.s32.totalorder %v207, %v808
    %vm813 = vcmp.eq.s32.totalorder %v207, %v811
    %v814 = vsel %vm812, 1, 0
    %v815 = vsel %vm813, 1, 0
    %v816 = vcvt.s32.f32 %v814
    %v817 = vcvt.s32.f32 %v815
    %818 = vst.msk [vmem:[#allocation2 + $0x2] sm:$0xff] %vm798, %v816
    %819 = vst.msk [vmem:[#allocation2 + $0xa] sm:$0xff] %vm798, %v817
    %v820 = vld [vmem:[#allocation2 + $0x1] sm:$0xff]
    %v821 = vld [vmem:[#allocation2 + $0x9] sm:$0xff]
    %v823 = vsel %vm798, %v820, 0
    %v826 = vsel %vm798, %v821, 0
    %828 = vmatpush.msra.mxu0 0.0
    %829 = vmatpush.msra.mxu0 0.0
    %830 = vmatpush.msra.mxu0 0.0
    %831 = vmatpush.msra.mxu0 0.0
    %832 = vmatpush.msra.mxu0 0.0
    %833 = vmatpush.msra.mxu0 0.0
    %834 = vmatpush.msra.mxu0 0.0
    %835 = vmatpush.msra.mxu0 0.0
    %836 = vmatpush.msra.mxu0 0.0
    %837 = vmatpush.msra.mxu0 0.0
    %838 = vmatpush.msra.mxu0 0.0
    %839 = vmatpush.msra.mxu0 0.0
    %840 = vmatpush.msra.mxu0 0.0
    %841 = vmatpush.msra.mxu0 0.0
    %842 = vmatpush.msra.mxu0 0.0
    %v843 = vand.u32 %v803, 4294901760
    %844 = vmatpush.msra.mxu0 %v843
    %v845 = vand.u32 %v823, 4294901760
    %v846 = vsub.f32 %v823, %v845
    %v847 = vand.u32 %v846, 4294901760
    %v848 = vsub.f32 %v846, %v847
    %v849 = vand.u32 %v848, 4294901760
    %850 = vmatmul.f32.gmra.mxu0 %v849
    %v851 = vpop.f32.mrf.mxu0
    %v852 = vadd.f32 0.0, %v851
    %v853 = vand.u32 %v826, 4294901760
    %v854 = vsub.f32 %v826, %v853
    %v855 = vand.u32 %v854, 4294901760
    %v856 = vsub.f32 %v854, %v855
    %v857 = vand.u32 %v856, 4294901760
    %858 = vmatmul.f32.gmra.mxu0 %v857
    %v859 = vpop.f32.mrf.mxu0
    %v860 = vadd.f32 0.0, %v859
    %861 = vdwg.mxu0
    %862 = vmatpush.msra.mxu0 0.0
    %863 = vmatpush.msra.mxu0 0.0
    %864 = vmatpush.msra.mxu0 0.0
    %865 = vmatpush.msra.mxu0 0.0
    %866 = vmatpush.msra.mxu0 0.0
    %867 = vmatpush.msra.mxu0 0.0
    %868 = vmatpush.msra.mxu0 0.0
    %869 = vmatpush.msra.mxu0 0.0
    %870 = vmatpush.msra.mxu0 0.0
    %871 = vmatpush.msra.mxu0 0.0
    %872 = vmatpush.msra.mxu0 0.0
    %873 = vmatpush.msra.mxu0 0.0
    %874 = vmatpush.msra.mxu0 0.0
    %875 = vmatpush.msra.mxu0 0.0
    %876 = vmatpush.msra.mxu0 0.0
    %v877 = vand.u32 %v803, 4294901760
    %v878 = vsub.f32 %v803, %v877
    %v879 = vand.u32 %v878, 4294901760
    %v880 = vsub.f32 %v878, %v879
    %v881 = vand.u32 %v880, 4294901760
    %882 = vmatpush.msra.mxu0 %v881
    %v883 = vand.u32 %v823, 4294901760
    %884 = vmatmul.f32.gmra.mxu0 %v883
    %v885 = vpop.f32.mrf.mxu0
    %v886 = vadd.f32 %v852, %v885
    %v887 = vand.u32 %v826, 4294901760
    %888 = vmatmul.f32.gmra.mxu0 %v887
    %v889 = vpop.f32.mrf.mxu0
    %v890 = vadd.f32 %v860, %v889
    %891 = vdwg.mxu0
    %892 = vmatpush.msra.mxu0 0.0
    %893 = vmatpush.msra.mxu0 0.0
    %894 = vmatpush.msra.mxu0 0.0
    %895 = vmatpush.msra.mxu0 0.0
    %896 = vmatpush.msra.mxu0 0.0
    %897 = vmatpush.msra.mxu0 0.0
    %898 = vmatpush.msra.mxu0 0.0
    %899 = vmatpush.msra.mxu0 0.0
    %900 = vmatpush.msra.mxu0 0.0
    %901 = vmatpush.msra.mxu0 0.0
    %902 = vmatpush.msra.mxu0 0.0
    %903 = vmatpush.msra.mxu0 0.0
    %904 = vmatpush.msra.mxu0 0.0
    %905 = vmatpush.msra.mxu0 0.0
    %906 = vmatpush.msra.mxu0 0.0
    %v907 = vand.u32 %v803, 4294901760
    %v908 = vsub.f32 %v803, %v907
    %909 = vmatpush.msra.mxu0 %v908
    %v910 = vand.u32 %v823, 4294901760
    %v911 = vsub.f32 %v823, %v910
    %912 = vmatmul.f32.gmra.mxu0 %v911
    %v913 = vpop.f32.mrf.mxu0
    %v914 = vadd.f32 %v886, %v913
    %v915 = vand.u32 %v826, 4294901760
    %v916 = vsub.f32 %v826, %v915
    %917 = vmatmul.f32.gmra.mxu0 %v916
    %v918 = vpop.f32.mrf.mxu0
    %v919 = vadd.f32 %v890, %v918
    %920 = vdwg.mxu0
    %921 = vmatpush.msra.mxu0 0.0
    %922 = vmatpush.msra.mxu0 0.0
    %923 = vmatpush.msra.mxu0 0.0
    %924 = vmatpush.msra.mxu0 0.0
    %925 = vmatpush.msra.mxu0 0.0
    %926 = vmatpush.msra.mxu0 0.0
    %927 = vmatpush.msra.mxu0 0.0
    %928 = vmatpush.msra.mxu0 0.0
    %929 = vmatpush.msra.mxu0 0.0
    %930 = vmatpush.msra.mxu0 0.0
    %931 = vmatpush.msra.mxu0 0.0
    %932 = vmatpush.msra.mxu0 0.0
    %933 = vmatpush.msra.mxu0 0.0
    %934 = vmatpush.msra.mxu0 0.0
    %935 = vmatpush.msra.mxu0 0.0
    %v936 = vand.u32 %v803, 4294901760
    %937 = vmatpush.msra.mxu0 %v936
    %v938 = vand.u32 %v823, 4294901760
    %v939 = vsub.f32 %v823, %v938
    %v940 = vand.u32 %v939, 4294901760
    %941 = vmatmul.f32.gmra.mxu0 %v940
    %v942 = vpop.f32.mrf.mxu0
    %v943 = vadd.f32 %v914, %v942
    %v944 = vand.u32 %v826, 4294901760
    %v945 = vsub.f32 %v826, %v944
    %v946 = vand.u32 %v945, 4294901760
    %947 = vmatmul.f32.gmra.mxu0 %v946
    %v948 = vpop.f32.mrf.mxu0
    %v949 = vadd.f32 %v919, %v948
    %950 = vdwg.mxu0
    %951 = vmatpush.msra.mxu0 0.0
    %952 = vmatpush.msra.mxu0 0.0
    %953 = vmatpush.msra.mxu0 0.0
    %954 = vmatpush.msra.mxu0 0.0
    %955 = vmatpush.msra.mxu0 0.0
    %956 = vmatpush.msra.mxu0 0.0
    %957 = vmatpush.msra.mxu0 0.0
    %958 = vmatpush.msra.mxu0 0.0
    %959 = vmatpush.msra.mxu0 0.0
    %960 = vmatpush.msra.mxu0 0.0
    %961 = vmatpush.msra.mxu0 0.0
    %962 = vmatpush.msra.mxu0 0.0
    %963 = vmatpush.msra.mxu0 0.0
    %964 = vmatpush.msra.mxu0 0.0
    %965 = vmatpush.msra.mxu0 0.0
    %v966 = vand.u32 %v803, 4294901760
    %v967 = vsub.f32 %v803, %v966
    %v968 = vand.u32 %v967, 4294901760
    %969 = vmatpush.msra.mxu0 %v968
    %v970 = vand.u32 %v823, 4294901760
    %971 = vmatmul.f32.gmra.mxu0 %v970
    %v972 = vpop.f32.mrf.mxu0
    %v973 = vadd.f32 %v943, %v972
    %v974 = vand.u32 %v826, 4294901760
    %975 = vmatmul.f32.gmra.mxu0 %v974
    %v976 = vpop.f32.mrf.mxu0
    %v977 = vadd.f32 %v949, %v976
    %978 = vdwg.mxu0
    %979 = vmatpush.msra.mxu0 0.0
    %980 = vmatpush.msra.mxu0 0.0
    %981 = vmatpush.msra.mxu0 0.0
    %982 = vmatpush.msra.mxu0 0.0
    %983 = vmatpush.msra.mxu0 0.0
    %984 = vmatpush.msra.mxu0 0.0
    %985 = vmatpush.msra.mxu0 0.0
    %986 = vmatpush.msra.mxu0 0.0
    %987 = vmatpush.msra.mxu0 0.0
    %988 = vmatpush.msra.mxu0 0.0
    %989 = vmatpush.msra.mxu0 0.0
    %990 = vmatpush.msra.mxu0 0.0
    %991 = vmatpush.msra.mxu0 0.0
    %992 = vmatpush.msra.mxu0 0.0
    %993 = vmatpush.msra.mxu0 0.0
    %v994 = vand.u32 %v803, 4294901760
    %995 = vmatpush.msra.mxu0 %v994
    %v996 = vand.u32 %v823, 4294901760
    %997 = vmatmul.f32.gmra.mxu0 %v996
    %v998 = vpop.f32.mrf.mxu0
    %v999 = vadd.f32 %v973, %v998
    %v1000 = vand.u32 %v826, 4294901760
    %1001 = vmatmul.f32.gmra.mxu0 %v1000
    %v1002 = vpop.f32.mrf.mxu0
    %v1003 = vadd.f32 %v977, %v1002
    %1004 = vdwg.mxu0
    %v1005 = vadd.f32 %v794, %v999
    %v1006 = vadd.f32 %v796, %v1003
    %v1007 = vmul.f32 %v1005, %v816
    %v1008 = vmul.f32 %v1006, %v817
    %v1009 = vsel %vm798, %v1007, 0.0
    %v1010 = vsel %vm798, %v1008, 0.0
    %v1011 = vadd.f32 %v1009, %v1010
    %v1012 = vrot.slane %v1011, 4
    %v1013 = vadd.f32 %v1011, %v1012
    %v1014 = vrot.slane %v1013, 2
    %v1015 = vadd.f32 %v1013, %v1014
    %v1016 = vrot.slane %v1015, 1
    %v1017 = vadd.f32 %v1015, %v1016
    %vm1018 = vcmp.eq.s32.totalorder %v209, 0
    %vm1019 = vcmp.eq.s32.totalorder %v210, 0
    %v1020 = vsel %vm1018, %v816, 0.0
    %v1021 = vsel %vm1019, %v817, 0.0
    %v1022 = vsel %vm798, %v1020, 0.0
    %v1023 = vsel %vm798, %v1021, 0.0
    %v1024 = vadd.f32 %v1022, %v1023
    %v1025 = vrot.slane %v1024, 4
    %v1026 = vadd.f32 %v1024, %v1025
    %v1027 = vrot.slane %v1026, 2
    %v1028 = vadd.f32 %v1026, %v1027
    %v1029 = vrot.slane %v1028, 1
    %v1030 = vadd.f32 %v1028, %v1029
    %v1031 = vmul.f32 %v801, %v1030
    %v1032 = vadd.f32 %v1017, %v1031
    %vm1033 = vcmp.eq.s32.totalorder %v209, 15
    %vm1034 = vcmp.eq.s32.totalorder %v210, 15
    %v1035 = vsel %vm1033, %v816, 0.0
    %v1036 = vsel %vm1034, %v817, 0.0
    %v1037 = vsel %vm798, %v1035, 0.0
    %v1038 = vsel %vm798, %v1036, 0.0
    %v1039 = vadd.f32 %v1037, %v1038
    %v1040 = vrot.slane %v1039, 4
    %v1041 = vadd.f32 %v1039, %v1040
    %v1042 = vrot.slane %v1041, 2
    %v1043 = vadd.f32 %v1041, %v1042
    %v1044 = vrot.slane %v1043, 1
    %v1045 = vadd.f32 %v1043, %v1044
    %v1046 = vmul.f32 %v802, %v1045
    %v1047 = vadd.f32 %v1032, %v1046
    %vm1048 = vcmask 57344
    %v1049 = vsel %vm1048, %v1047, 0.0
    %1050 = vadd.xlane.f32.xlu0 %v1049
    %v1051 = vpop.xlane.xlu0 %1050
    %v1052 = vld [vmem:[#allocation3] sm:$0x1]
    %v1053 = vadd.f32 %v801, %v1052
    %v1054 = vld [vmem:[#allocation3 + $0x1] sm:$0x1]
    %v1056 = vperm.slane %v1053, 0
    %v1058 = vmul.f32 %v1056, %v213
    %v1059 = vsel %vm798, %v1058, 0.0
    %1060 = vadd.xlane.f32.xlu0 %v1059
    %v1061 = vpop.xlane.xlu0 %1060
    %v1062 = vadd.f32 %v1061, %v803
    %v1063 = vsel %vm798, %v1062, -inf
    %v1064 = vrot.slane %v1063, 4
    %v1065 = vmax.f32 %v1063, %v1064
    %v1066 = vrot.slane %v1065, 2
    %v1067 = vmax.f32 %v1065, %v1066
    %v1068 = vrot.slane %v1067, 1
    %v1069 = vmax.f32 %v1067, %v1068
    %v1070 = vsub.f32 %v1062, %v1069
    %v1071 = vmul.f32 %v1070, 1.442695
    %v1072 = vpow.pop %v1071
    %v1073 = vsel %vm798, %v1072, 0.0
    %v1074 = vrot.slane %v1073, 4
    %v1075 = vadd.f32 %v1073, %v1074
    %v1076 = vrot.slane %v1075, 2
    %v1077 = vadd.f32 %v1075, %v1076
    %v1078 = vrot.slane %v1077, 1
    %v1079 = vadd.f32 %v1077, %v1078
    %v1080 = vlog2.pop %v1079
    %v1081 = vmul.f32 %v1080, 0.6931472
    %v1082 = vadd.f32 %v1081, %v1069
    %v1083 = vadd.f32 %v1082, %v1054
    %vm1084 = vcmp.eq.f32.partialorder %v1062, %v1069
    %v1085 = vsel %vm1084, %v214, 8.0
    %v1086 = vsel %vm798, %v1085, inf
    %v1087 = vrot.slane %v1086, 4
    %v1088 = vmin.f32 %v1086, %v1087
    %v1089 = vrot.slane %v1088, 2
    %v1090 = vmin.f32 %v1088, %v1089
    %v1091 = vrot.slane %v1090, 1
    %v1092 = vmin.f32 %v1090, %v1091
    %v1093 = vadd.f32 %v1069, %v1054
    %v1094 = vld [vmem:[#allocation3 + $0x2] sm:$0x1]
    %v1095 = vperm.slane %v1083, 0
    %v1096 = vmul.f32 %v1095, %v213
    %v1097 = vsel %vm798, %v1096, 0.0
    %1098 = vadd.xlane.f32.xlu0 %v1097
    %v1099 = vpop.xlane.xlu0 %1098
    %v1100 = vperm.slane %v1093, 0
    %v1101 = vmul.f32 %v1100, %v213
    %v1102 = vsel %vm798, %v1101, 0.0
    %1103 = vadd.xlane.f32.xlu0 %v1102
    %v1104 = vpop.xlane.xlu0 %1103
    %v1105 = vadd.f32 %v1099, %v803
    %v1106 = vsel %vm798, %v1105, -inf
    %v1107 = vrot.slane %v1106, 4
    %v1108 = vmax.f32 %v1106, %v1107
    %v1109 = vrot.slane %v1108, 2
    %v1110 = vmax.f32 %v1108, %v1109
    %v1111 = vrot.slane %v1110, 1
    %v1112 = vmax.f32 %v1110, %v1111
    %v1113 = vsub.f32 %v1105, %v1112
    %v1114 = vmul.f32 %v1113, 1.442695
    %v1115 = vpow.pop %v1114
    %v1116 = vsel %vm798, %v1115, 0.0
    %v1117 = vrot.slane %v1116, 4
    %v1118 = vadd.f32 %v1116, %v1117
    %v1119 = vrot.slane %v1118, 2
    %v1120 = vadd.f32 %v1118, %v1119
    %v1121 = vrot.slane %v1120, 1
    %v1122 = vadd.f32 %v1120, %v1121
    %v1123 = vlog2.pop %v1122
    %v1124 = vmul.f32 %v1123, 0.6931472
    %v1125 = vadd.f32 %v1124, %v1112
    %v1126 = vadd.f32 %v1125, %v1094
    %v1127 = vadd.f32 %v1104, %v803
    %v1128 = vsel %vm798, %v1127, -inf
    %v1129 = vrot.slane %v1128, 4
    %v1130 = vmax.f32 %v1128, %v1129
    %v1131 = vrot.slane %v1130, 2
    %v1132 = vmax.f32 %v1130, %v1131
    %v1133 = vrot.slane %v1132, 1
    %v1134 = vmax.f32 %v1132, %v1133
    %vm1135 = vcmp.eq.f32.partialorder %v1127, %v1134
    %v1136 = vsel %vm1135, %v214, 8.0
    %v1137 = vsel %vm798, %v1136, inf
    %v1138 = vrot.slane %v1137, 4
    %v1139 = vmin.f32 %v1137, %v1138
    %v1140 = vrot.slane %v1139, 2
    %v1141 = vmin.f32 %v1139, %v1140
    %v1142 = vrot.slane %v1141, 1
    %v1143 = vmin.f32 %v1141, %v1142
    %v1144 = vadd.f32 %v1134, %v1094
    %v1145 = vld [vmem:[#allocation3 + $0x3] sm:$0x1]
    %v1146 = vperm.slane %v1126, 0
    %v1147 = vmul.f32 %v1146, %v213
    %v1148 = vsel %vm798, %v1147, 0.0
    %1149 = vadd.xlane.f32.xlu0 %v1148
    %v1150 = vpop.xlane.xlu0 %1149
    %v1151 = vperm.slane %v1144, 0
    %v1152 = vmul.f32 %v1151, %v213
    %v1153 = vsel %vm798, %v1152, 0.0
    %1154 = vadd.xlane.f32.xlu0 %v1153
    %v1155 = vpop.xlane.xlu0 %1154
    %v1156 = vadd.f32 %v1150, %v803
    %v1157 = vsel %vm798, %v1156, -inf
    %v1158 = vrot.slane %v1157, 4
    %v1159 = vmax.f32 %v1157, %v1158
    %v1160 = vrot.slane %v1159, 2
    %v1161 = vmax.f32 %v1159, %v1160
    %v1162 = vrot.slane %v1161, 1
    %v1163 = vmax.f32 %v1161, %v1162
    %v1164 = vsub.f32 %v1156, %v1163
    %v1165 = vmul.f32 %v1164, 1.442695
    %v1166 = vpow.pop %v1165
    %v1167 = vsel %vm798, %v1166, 0.0
    %v1168 = vrot.slane %v1167, 4
    %v1169 = vadd.f32 %v1167, %v1168
    %v1170 = vrot.slane %v1169, 2
    %v1171 = vadd.f32 %v1169, %v1170
    %v1172 = vrot.slane %v1171, 1
    %v1173 = vadd.f32 %v1171, %v1172
    %v1174 = vlog2.pop %v1173
    %v1175 = vmul.f32 %v1174, 0.6931472
    %v1176 = vadd.f32 %v1175, %v1163
    %v1177 = vadd.f32 %v1176, %v1145
    %v1178 = vadd.f32 %v1155, %v803
    %v1179 = vsel %vm798, %v1178, -inf
    %v1180 = vrot.slane %v1179, 4
    %v1181 = vmax.f32 %v1179, %v1180
    %v1182 = vrot.slane %v1181, 2
    %v1183 = vmax.f32 %v1181, %v1182
    %v1184 = vrot.slane %v1183, 1
    %v1185 = vmax.f32 %v1183, %v1184
    %vm1186 = vcmp.eq.f32.partialorder %v1178, %v1185
    %v1187 = vsel %vm1186, %v214, 8.0
    %v1188 = vsel %vm798, %v1187, inf
    %v1189 = vrot.slane %v1188, 4
    %v1190 = vmin.f32 %v1188, %v1189
    %v1191 = vrot.slane %v1190, 2
    %v1192 = vmin.f32 %v1190, %v1191
    %v1193 = vrot.slane %v1192, 1
    %v1194 = vmin.f32 %v1192, %v1193
    %v1195 = vadd.f32 %v1185, %v1145
    %v1196 = vld [vmem:[#allocation3 + $0x4] sm:$0x1]
    %v1197 = vperm.slane %v1177, 0
    %v1198 = vmul.f32 %v1197, %v213
    %v1199 = vsel %vm798, %v1198, 0.0
    %1200 = vadd.xlane.f32.xlu0 %v1199
    %v1201 = vpop.xlane.xlu0 %1200
    %v1202 = vperm.slane %v1195, 0
    %v1203 = vmul.f32 %v1202, %v213
    %v1204 = vsel %vm798, %v1203, 0.0
    %1205 = vadd.xlane.f32.xlu0 %v1204
    %v1206 = vpop.xlane.xlu0 %1205
    %v1207 = vadd.f32 %v1201, %v803
    %v1208 = vsel %vm798, %v1207, -inf
    %v1209 = vrot.slane %v1208, 4
    %v1210 = vmax.f32 %v1208, %v1209
    %v1211 = vrot.slane %v1210, 2
    %v1212 = vmax.f32 %v1210, %v1211
    %v1213 = vrot.slane %v1212, 1
    %v1214 = vmax.f32 %v1212, %v1213
    %v1215 = vsub.f32 %v1207, %v1214
    %v1216 = vmul.f32 %v1215, 1.442695
    %v1217 = vpow.pop %v1216
    %v1218 = vsel %vm798, %v1217, 0.0
    %v1219 = vrot.slane %v1218, 4
    %v1220 = vadd.f32 %v1218, %v1219
    %v1221 = vrot.slane %v1220, 2
    %v1222 = vadd.f32 %v1220, %v1221
    %v1223 = vrot.slane %v1222, 1
    %v1224 = vadd.f32 %v1222, %v1223
    %v1225 = vlog2.pop %v1224
    %v1226 = vmul.f32 %v1225, 0.6931472
    %v1227 = vadd.f32 %v1226, %v1214
    %v1228 = vadd.f32 %v1227, %v1196
    %v1229 = vadd.f32 %v1206, %v803
    %v1230 = vsel %vm798, %v1229, -inf
    %v1231 = vrot.slane %v1230, 4
    %v1232 = vmax.f32 %v1230, %v1231
    %v1233 = vrot.slane %v1232, 2
    %v1234 = vmax.f32 %v1232, %v1233
    %v1235 = vrot.slane %v1234, 1
    %v1236 = vmax.f32 %v1234, %v1235
    %vm1237 = vcmp.eq.f32.partialorder %v1229, %v1236
    %v1238 = vsel %vm1237, %v214, 8.0
    %v1239 = vsel %vm798, %v1238, inf
    %v1240 = vrot.slane %v1239, 4
    %v1241 = vmin.f32 %v1239, %v1240
    %v1242 = vrot.slane %v1241, 2
    %v1243 = vmin.f32 %v1241, %v1242
    %v1244 = vrot.slane %v1243, 1
    %v1245 = vmin.f32 %v1243, %v1244
    %v1246 = vadd.f32 %v1236, %v1196
    %v1247 = vld [vmem:[#allocation3 + $0x5] sm:$0x1]
    %v1248 = vperm.slane %v1228, 0
    %v1249 = vmul.f32 %v1248, %v213
    %v1250 = vsel %vm798, %v1249, 0.0
    %1251 = vadd.xlane.f32.xlu0 %v1250
    %v1252 = vpop.xlane.xlu0 %1251
    %v1253 = vperm.slane %v1246, 0
    %v1254 = vmul.f32 %v1253, %v213
    %v1255 = vsel %vm798, %v1254, 0.0
    %1256 = vadd.xlane.f32.xlu0 %v1255
    %v1257 = vpop.xlane.xlu0 %1256
    %v1258 = vadd.f32 %v1252, %v803
    %v1259 = vsel %vm798, %v1258, -inf
    %v1260 = vrot.slane %v1259, 4
    %v1261 = vmax.f32 %v1259, %v1260
    %v1262 = vrot.slane %v1261, 2
    %v1263 = vmax.f32 %v1261, %v1262
    %v1264 = vrot.slane %v1263, 1
    %v1265 = vmax.f32 %v1263, %v1264
    %v1266 = vsub.f32 %v1258, %v1265
    %v1267 = vmul.f32 %v1266, 1.442695
    %v1268 = vpow.pop %v1267
    %v1269 = vsel %vm798, %v1268, 0.0
    %v1270 = vrot.slane %v1269, 4
    %v1271 = vadd.f32 %v1269, %v1270
    %v1272 = vrot.slane %v1271, 2
    %v1273 = vadd.f32 %v1271, %v1272
    %v1274 = vrot.slane %v1273, 1
    %v1275 = vadd.f32 %v1273, %v1274
    %v1276 = vlog2.pop %v1275
    %v1277 = vmul.f32 %v1276, 0.6931472
    %v1278 = vadd.f32 %v1277, %v1265
    %v1279 = vadd.f32 %v1278, %v1247
    %v1280 = vadd.f32 %v1257, %v803
    %v1281 = vsel %vm798, %v1280, -inf
    %v1282 = vrot.slane %v1281, 4
    %v1283 = vmax.f32 %v1281, %v1282
    %v1284 = vrot.slane %v1283, 2
    %v1285 = vmax.f32 %v1283, %v1284
    %v1286 = vrot.slane %v1285, 1
    %v1287 = vmax.f32 %v1285, %v1286
    %vm1288 = vcmp.eq.f32.partialorder %v1280, %v1287
    %v1289 = vsel %vm1288, %v214, 8.0
    %v1290 = vsel %vm798, %v1289, inf
    %v1291 = vrot.slane %v1290, 4
    %v1292 = vmin.f32 %v1290, %v1291
    %v1293 = vrot.slane %v1292, 2
    %v1294 = vmin.f32 %v1292, %v1293
    %v1295 = vrot.slane %v1294, 1
    %v1296 = vmin.f32 %v1294, %v1295
    %v1297 = vadd.f32 %v1287, %v1247
    %v1298 = vld [vmem:[#allocation3 + $0x6] sm:$0x1]
    %v1299 = vperm.slane %v1279, 0
    %v1300 = vmul.f32 %v1299, %v213
    %v1301 = vsel %vm798, %v1300, 0.0
    %1302 = vadd.xlane.f32.xlu0 %v1301
    %v1303 = vpop.xlane.xlu0 %1302
    %v1304 = vperm.slane %v1297, 0
    %v1305 = vmul.f32 %v1304, %v213
    %v1306 = vsel %vm798, %v1305, 0.0
    %1307 = vadd.xlane.f32.xlu0 %v1306
    %v1308 = vpop.xlane.xlu0 %1307
    %v1309 = vadd.f32 %v1303, %v803
    %v1310 = vsel %vm798, %v1309, -inf
    %v1311 = vrot.slane %v1310, 4
    %v1312 = vmax.f32 %v1310, %v1311
    %v1313 = vrot.slane %v1312, 2
    %v1314 = vmax.f32 %v1312, %v1313
    %v1315 = vrot.slane %v1314, 1
    %v1316 = vmax.f32 %v1314, %v1315
    %v1317 = vsub.f32 %v1309, %v1316
    %v1318 = vmul.f32 %v1317, 1.442695
    %v1319 = vpow.pop %v1318
    %v1320 = vsel %vm798, %v1319, 0.0
    %v1321 = vrot.slane %v1320, 4
    %v1322 = vadd.f32 %v1320, %v1321
    %v1323 = vrot.slane %v1322, 2
    %v1324 = vadd.f32 %v1322, %v1323
    %v1325 = vrot.slane %v1324, 1
    %v1326 = vadd.f32 %v1324, %v1325
    %v1327 = vlog2.pop %v1326
    %v1328 = vmul.f32 %v1327, 0.6931472
    %v1329 = vadd.f32 %v1328, %v1316
    %v1330 = vadd.f32 %v1329, %v1298
    %v1331 = vadd.f32 %v1308, %v803
    %v1332 = vsel %vm798, %v1331, -inf
    %v1333 = vrot.slane %v1332, 4
    %v1334 = vmax.f32 %v1332, %v1333
    %v1335 = vrot.slane %v1334, 2
    %v1336 = vmax.f32 %v1334, %v1335
    %v1337 = vrot.slane %v1336, 1
    %v1338 = vmax.f32 %v1336, %v1337
    %vm1339 = vcmp.eq.f32.partialorder %v1331, %v1338
    %v1340 = vsel %vm1339, %v214, 8.0
    %v1341 = vsel %vm798, %v1340, inf
    %v1342 = vrot.slane %v1341, 4
    %v1343 = vmin.f32 %v1341, %v1342
    %v1344 = vrot.slane %v1343, 2
    %v1345 = vmin.f32 %v1343, %v1344
    %v1346 = vrot.slane %v1345, 1
    %v1347 = vmin.f32 %v1345, %v1346
    %v1348 = vadd.f32 %v1338, %v1298
    %v1349 = vld [vmem:[#allocation3 + $0x7] sm:$0x1]
    %v1350 = vperm.slane %v1330, 0
    %v1351 = vmul.f32 %v1350, %v213
    %v1352 = vsel %vm798, %v1351, 0.0
    %1353 = vadd.xlane.f32.xlu0 %v1352
    %v1354 = vpop.xlane.xlu0 %1353
    %v1355 = vperm.slane %v1348, 0
    %v1356 = vmul.f32 %v1355, %v213
    %v1357 = vsel %vm798, %v1356, 0.0
    %1358 = vadd.xlane.f32.xlu0 %v1357
    %v1359 = vpop.xlane.xlu0 %1358
    %v1360 = vadd.f32 %v1354, %v803
    %v1361 = vsel %vm798, %v1360, -inf
    %v1362 = vrot.slane %v1361, 4
    %v1363 = vmax.f32 %v1361, %v1362
    %v1364 = vrot.slane %v1363, 2
    %v1365 = vmax.f32 %v1363, %v1364
    %v1366 = vrot.slane %v1365, 1
    %v1367 = vmax.f32 %v1365, %v1366
    %v1368 = vsub.f32 %v1360, %v1367
    %v1369 = vmul.f32 %v1368, 1.442695
    %v1370 = vpow.pop %v1369
    %v1371 = vsel %vm798, %v1370, 0.0
    %v1372 = vrot.slane %v1371, 4
    %v1373 = vadd.f32 %v1371, %v1372
    %v1374 = vrot.slane %v1373, 2
    %v1375 = vadd.f32 %v1373, %v1374
    %v1376 = vrot.slane %v1375, 1
    %v1377 = vadd.f32 %v1375, %v1376
    %v1378 = vlog2.pop %v1377
    %v1379 = vmul.f32 %v1378, 0.6931472
    %v1380 = vadd.f32 %v1379, %v1367
    %v1381 = vadd.f32 %v1380, %v1349
    %v1382 = vadd.f32 %v1359, %v803
    %v1383 = vsel %vm798, %v1382, -inf
    %v1384 = vrot.slane %v1383, 4
    %v1385 = vmax.f32 %v1383, %v1384
    %v1386 = vrot.slane %v1385, 2
    %v1387 = vmax.f32 %v1385, %v1386
    %v1388 = vrot.slane %v1387, 1
    %v1389 = vmax.f32 %v1387, %v1388
    %vm1390 = vcmp.eq.f32.partialorder %v1382, %v1389
    %v1391 = vsel %vm1390, %v214, 8.0
    %v1392 = vsel %vm798, %v1391, inf
    %v1393 = vrot.slane %v1392, 4
    %v1394 = vmin.f32 %v1392, %v1393
    %v1395 = vrot.slane %v1394, 2
    %v1396 = vmin.f32 %v1394, %v1395
    %v1397 = vrot.slane %v1396, 1
    %v1398 = vmin.f32 %v1396, %v1397
    %v1399 = vadd.f32 %v1389, %v1349
    %v1400 = vld [vmem:[#allocation3 + $0x8] sm:$0x1]
    %v1401 = vperm.slane %v1381, 0
    %v1402 = vmul.f32 %v1401, %v213
    %v1403 = vsel %vm798, %v1402, 0.0
    %1404 = vadd.xlane.f32.xlu0 %v1403
    %v1405 = vpop.xlane.xlu0 %1404
    %v1406 = vperm.slane %v1399, 0
    %v1407 = vmul.f32 %v1406, %v213
    %v1408 = vsel %vm798, %v1407, 0.0
    %1409 = vadd.xlane.f32.xlu0 %v1408
    %v1410 = vpop.xlane.xlu0 %1409
    %v1411 = vadd.f32 %v1405, %v803
    %v1412 = vsel %vm798, %v1411, -inf
    %v1413 = vrot.slane %v1412, 4
    %v1414 = vmax.f32 %v1412, %v1413
    %v1415 = vrot.slane %v1414, 2
    %v1416 = vmax.f32 %v1414, %v1415
    %v1417 = vrot.slane %v1416, 1
    %v1418 = vmax.f32 %v1416, %v1417
    %v1419 = vsub.f32 %v1411, %v1418
    %v1420 = vmul.f32 %v1419, 1.442695
    %v1421 = vpow.pop %v1420
    %v1422 = vsel %vm798, %v1421, 0.0
    %v1423 = vrot.slane %v1422, 4
    %v1424 = vadd.f32 %v1422, %v1423
    %v1425 = vrot.slane %v1424, 2
    %v1426 = vadd.f32 %v1424, %v1425
    %v1427 = vrot.slane %v1426, 1
    %v1428 = vadd.f32 %v1426, %v1427
    %v1429 = vlog2.pop %v1428
    %v1430 = vmul.f32 %v1429, 0.6931472
    %v1431 = vadd.f32 %v1430, %v1418
    %v1432 = vadd.f32 %v1431, %v1400
    %v1433 = vadd.f32 %v1410, %v803
    %v1434 = vsel %vm798, %v1433, -inf
    %v1435 = vrot.slane %v1434, 4
    %v1436 = vmax.f32 %v1434, %v1435
    %v1437 = vrot.slane %v1436, 2
    %v1438 = vmax.f32 %v1436, %v1437
    %v1439 = vrot.slane %v1438, 1
    %v1440 = vmax.f32 %v1438, %v1439
    %vm1441 = vcmp.eq.f32.partialorder %v1433, %v1440
    %v1442 = vsel %vm1441, %v214, 8.0
    %v1443 = vsel %vm798, %v1442, inf
    %v1444 = vrot.slane %v1443, 4
    %v1445 = vmin.f32 %v1443, %v1444
    %v1446 = vrot.slane %v1445, 2
    %v1447 = vmin.f32 %v1445, %v1446
    %v1448 = vrot.slane %v1447, 1
    %v1449 = vmin.f32 %v1447, %v1448
    %v1450 = vadd.f32 %v1440, %v1400
    %v1451 = vld [vmem:[#allocation3 + $0x9] sm:$0x1]
    %v1452 = vperm.slane %v1432, 0
    %v1453 = vmul.f32 %v1452, %v213
    %v1454 = vsel %vm798, %v1453, 0.0
    %1455 = vadd.xlane.f32.xlu0 %v1454
    %v1456 = vpop.xlane.xlu0 %1455
    %v1457 = vperm.slane %v1450, 0
    %v1458 = vmul.f32 %v1457, %v213
    %v1459 = vsel %vm798, %v1458, 0.0
    %1460 = vadd.xlane.f32.xlu0 %v1459
    %v1461 = vpop.xlane.xlu0 %1460
    %v1462 = vadd.f32 %v1456, %v803
    %v1463 = vsel %vm798, %v1462, -inf
    %v1464 = vrot.slane %v1463, 4
    %v1465 = vmax.f32 %v1463, %v1464
    %v1466 = vrot.slane %v1465, 2
    %v1467 = vmax.f32 %v1465, %v1466
    %v1468 = vrot.slane %v1467, 1
    %v1469 = vmax.f32 %v1467, %v1468
    %v1470 = vsub.f32 %v1462, %v1469
    %v1471 = vmul.f32 %v1470, 1.442695
    %v1472 = vpow.pop %v1471
    %v1473 = vsel %vm798, %v1472, 0.0
    %v1474 = vrot.slane %v1473, 4
    %v1475 = vadd.f32 %v1473, %v1474
    %v1476 = vrot.slane %v1475, 2
    %v1477 = vadd.f32 %v1475, %v1476
    %v1478 = vrot.slane %v1477, 1
    %v1479 = vadd.f32 %v1477, %v1478
    %v1480 = vlog2.pop %v1479
    %v1481 = vmul.f32 %v1480, 0.6931472
    %v1482 = vadd.f32 %v1481, %v1469
    %v1483 = vadd.f32 %v1482, %v1451
    %v1484 = vadd.f32 %v1461, %v803
    %v1485 = vsel %vm798, %v1484, -inf
    %v1486 = vrot.slane %v1485, 4
    %v1487 = vmax.f32 %v1485, %v1486
    %v1488 = vrot.slane %v1487, 2
    %v1489 = vmax.f32 %v1487, %v1488
    %v1490 = vrot.slane %v1489, 1
    %v1491 = vmax.f32 %v1489, %v1490
    %vm1492 = vcmp.eq.f32.partialorder %v1484, %v1491
    %v1493 = vsel %vm1492, %v214, 8.0
    %v1494 = vsel %vm798, %v1493, inf
    %v1495 = vrot.slane %v1494, 4
    %v1496 = vmin.f32 %v1494, %v1495
    %v1497 = vrot.slane %v1496, 2
    %v1498 = vmin.f32 %v1496, %v1497
    %v1499 = vrot.slane %v1498, 1
    %v1500 = vmin.f32 %v1498, %v1499
    %v1501 = vadd.f32 %v1491, %v1451
    %v1502 = vld [vmem:[#allocation3 + $0xa] sm:$0x1]
    %v1503 = vperm.slane %v1483, 0
    %v1504 = vmul.f32 %v1503, %v213
    %v1505 = vsel %vm798, %v1504, 0.0
    %1506 = vadd.xlane.f32.xlu0 %v1505
    %v1507 = vpop.xlane.xlu0 %1506
    %v1508 = vperm.slane %v1501, 0
    %v1509 = vmul.f32 %v1508, %v213
    %v1510 = vsel %vm798, %v1509, 0.0
    %1511 = vadd.xlane.f32.xlu0 %v1510
    %v1512 = vpop.xlane.xlu0 %1511
    %v1513 = vadd.f32 %v1507, %v803
    %v1514 = vsel %vm798, %v1513, -inf
    %v1515 = vrot.slane %v1514, 4
    %v1516 = vmax.f32 %v1514, %v1515
    %v1517 = vrot.slane %v1516, 2
    %v1518 = vmax.f32 %v1516, %v1517
    %v1519 = vrot.slane %v1518, 1
    %v1520 = vmax.f32 %v1518, %v1519
    %v1521 = vsub.f32 %v1513, %v1520
    %v1522 = vmul.f32 %v1521, 1.442695
    %v1523 = vpow.pop %v1522
    %v1524 = vsel %vm798, %v1523, 0.0
    %v1525 = vrot.slane %v1524, 4
    %v1526 = vadd.f32 %v1524, %v1525
    %v1527 = vrot.slane %v1526, 2
    %v1528 = vadd.f32 %v1526, %v1527
    %v1529 = vrot.slane %v1528, 1
    %v1530 = vadd.f32 %v1528, %v1529
    %v1531 = vlog2.pop %v1530
    %v1532 = vmul.f32 %v1531, 0.6931472
    %v1533 = vadd.f32 %v1532, %v1520
    %v1534 = vadd.f32 %v1533, %v1502
    %v1535 = vadd.f32 %v1512, %v803
    %v1536 = vsel %vm798, %v1535, -inf
    %v1537 = vrot.slane %v1536, 4
    %v1538 = vmax.f32 %v1536, %v1537
    %v1539 = vrot.slane %v1538, 2
    %v1540 = vmax.f32 %v1538, %v1539
    %v1541 = vrot.slane %v1540, 1
    %v1542 = vmax.f32 %v1540, %v1541
    %vm1543 = vcmp.eq.f32.partialorder %v1535, %v1542
    %v1544 = vsel %vm1543, %v214, 8.0
    %v1545 = vsel %vm798, %v1544, inf
    %v1546 = vrot.slane %v1545, 4
    %v1547 = vmin.f32 %v1545, %v1546
    %v1548 = vrot.slane %v1547, 2
    %v1549 = vmin.f32 %v1547, %v1548
    %v1550 = vrot.slane %v1549, 1
    %v1551 = vmin.f32 %v1549, %v1550
    %v1552 = vadd.f32 %v1542, %v1502
    %v1553 = vld [vmem:[#allocation3 + $0xb] sm:$0x1]
    %v1554 = vperm.slane %v1534, 0
    %v1555 = vmul.f32 %v1554, %v213
    %v1556 = vsel %vm798, %v1555, 0.0
    %1557 = vadd.xlane.f32.xlu0 %v1556
    %v1558 = vpop.xlane.xlu0 %1557
    %v1559 = vperm.slane %v1552, 0
    %v1560 = vmul.f32 %v1559, %v213
    %v1561 = vsel %vm798, %v1560, 0.0
    %1562 = vadd.xlane.f32.xlu0 %v1561
    %v1563 = vpop.xlane.xlu0 %1562
    %v1564 = vadd.f32 %v1558, %v803
    %v1565 = vsel %vm798, %v1564, -inf
    %v1566 = vrot.slane %v1565, 4
    %v1567 = vmax.f32 %v1565, %v1566
    %v1568 = vrot.slane %v1567, 2
    %v1569 = vmax.f32 %v1567, %v1568
    %v1570 = vrot.slane %v1569, 1
    %v1571 = vmax.f32 %v1569, %v1570
    %v1572 = vsub.f32 %v1564, %v1571
    %v1573 = vmul.f32 %v1572, 1.442695
    %v1574 = vpow.pop %v1573
    %v1575 = vsel %vm798, %v1574, 0.0
    %v1576 = vrot.slane %v1575, 4
    %v1577 = vadd.f32 %v1575, %v1576
    %v1578 = vrot.slane %v1577, 2
    %v1579 = vadd.f32 %v1577, %v1578
    %v1580 = vrot.slane %v1579, 1
    %v1581 = vadd.f32 %v1579, %v1580
    %v1582 = vlog2.pop %v1581
    %v1583 = vmul.f32 %v1582, 0.6931472
    %v1584 = vadd.f32 %v1583, %v1571
    %v1585 = vadd.f32 %v1584, %v1553
    %v1586 = vadd.f32 %v1563, %v803
    %v1587 = vsel %vm798, %v1586, -inf
    %v1588 = vrot.slane %v1587, 4
    %v1589 = vmax.f32 %v1587, %v1588
    %v1590 = vrot.slane %v1589, 2
    %v1591 = vmax.f32 %v1589, %v1590
    %v1592 = vrot.slane %v1591, 1
    %v1593 = vmax.f32 %v1591, %v1592
    %vm1594 = vcmp.eq.f32.partialorder %v1586, %v1593
    %v1595 = vsel %vm1594, %v214, 8.0
    %v1596 = vsel %vm798, %v1595, inf
    %v1597 = vrot.slane %v1596, 4
    %v1598 = vmin.f32 %v1596, %v1597
    %v1599 = vrot.slane %v1598, 2
    %v1600 = vmin.f32 %v1598, %v1599
    %v1601 = vrot.slane %v1600, 1
    %v1602 = vmin.f32 %v1600, %v1601
    %v1603 = vadd.f32 %v1593, %v1553
    %v1604 = vld [vmem:[#allocation3 + $0xc] sm:$0x1]
    %v1605 = vperm.slane %v1585, 0
    %v1606 = vmul.f32 %v1605, %v213
    %v1607 = vsel %vm798, %v1606, 0.0
    %1608 = vadd.xlane.f32.xlu0 %v1607
    %v1609 = vpop.xlane.xlu0 %1608
    %v1610 = vperm.slane %v1603, 0
    %v1611 = vmul.f32 %v1610, %v213
    %v1612 = vsel %vm798, %v1611, 0.0
    %1613 = vadd.xlane.f32.xlu0 %v1612
    %v1614 = vpop.xlane.xlu0 %1613
    %v1615 = vadd.f32 %v1609, %v803
    %v1616 = vsel %vm798, %v1615, -inf
    %v1617 = vrot.slane %v1616, 4
    %v1618 = vmax.f32 %v1616, %v1617
    %v1619 = vrot.slane %v1618, 2
    %v1620 = vmax.f32 %v1618, %v1619
    %v1621 = vrot.slane %v1620, 1
    %v1622 = vmax.f32 %v1620, %v1621
    %v1623 = vsub.f32 %v1615, %v1622
    %v1624 = vmul.f32 %v1623, 1.442695
    %v1625 = vpow.pop %v1624
    %v1626 = vsel %vm798, %v1625, 0.0
    %v1627 = vrot.slane %v1626, 4
    %v1628 = vadd.f32 %v1626, %v1627
    %v1629 = vrot.slane %v1628, 2
    %v1630 = vadd.f32 %v1628, %v1629
    %v1631 = vrot.slane %v1630, 1
    %v1632 = vadd.f32 %v1630, %v1631
    %v1633 = vlog2.pop %v1632
    %v1634 = vmul.f32 %v1633, 0.6931472
    %v1635 = vadd.f32 %v1634, %v1622
    %v1636 = vadd.f32 %v1635, %v1604
    %v1637 = vadd.f32 %v1614, %v803
    %v1638 = vsel %vm798, %v1637, -inf
    %v1639 = vrot.slane %v1638, 4
    %v1640 = vmax.f32 %v1638, %v1639
    %v1641 = vrot.slane %v1640, 2
    %v1642 = vmax.f32 %v1640, %v1641
    %v1643 = vrot.slane %v1642, 1
    %v1644 = vmax.f32 %v1642, %v1643
    %vm1645 = vcmp.eq.f32.partialorder %v1637, %v1644
    %v1646 = vsel %vm1645, %v214, 8.0
    %v1647 = vsel %vm798, %v1646, inf
    %v1648 = vrot.slane %v1647, 4
    %v1649 = vmin.f32 %v1647, %v1648
    %v1650 = vrot.slane %v1649, 2
    %v1651 = vmin.f32 %v1649, %v1650
    %v1652 = vrot.slane %v1651, 1
    %v1653 = vmin.f32 %v1651, %v1652
    %v1654 = vadd.f32 %v1644, %v1604
    %v1655 = vld [vmem:[#allocation3 + $0xd] sm:$0x1]
    %v1656 = vperm.slane %v1636, 0
    %v1657 = vmul.f32 %v1656, %v213
    %v1658 = vsel %vm798, %v1657, 0.0
    %1659 = vadd.xlane.f32.xlu0 %v1658
    %v1660 = vpop.xlane.xlu0 %1659
    %v1661 = vperm.slane %v1654, 0
    %v1662 = vmul.f32 %v1661, %v213
    %v1663 = vsel %vm798, %v1662, 0.0
    %1664 = vadd.xlane.f32.xlu0 %v1663
    %v1665 = vpop.xlane.xlu0 %1664
    %v1666 = vadd.f32 %v1660, %v803
    %v1667 = vsel %vm798, %v1666, -inf
    %v1668 = vrot.slane %v1667, 4
    %v1669 = vmax.f32 %v1667, %v1668
    %v1670 = vrot.slane %v1669, 2
    %v1671 = vmax.f32 %v1669, %v1670
    %v1672 = vrot.slane %v1671, 1
    %v1673 = vmax.f32 %v1671, %v1672
    %v1674 = vsub.f32 %v1666, %v1673
    %v1675 = vmul.f32 %v1674, 1.442695
    %v1676 = vpow.pop %v1675
    %v1677 = vsel %vm798, %v1676, 0.0
    %v1678 = vrot.slane %v1677, 4
    %v1679 = vadd.f32 %v1677, %v1678
    %v1680 = vrot.slane %v1679, 2
    %v1681 = vadd.f32 %v1679, %v1680
    %v1682 = vrot.slane %v1681, 1
    %v1683 = vadd.f32 %v1681, %v1682
    %v1684 = vlog2.pop %v1683
    %v1685 = vmul.f32 %v1684, 0.6931472
    %v1686 = vadd.f32 %v1685, %v1673
    %v1687 = vadd.f32 %v1686, %v1655
    %v1688 = vadd.f32 %v1665, %v803
    %v1689 = vsel %vm798, %v1688, -inf
    %v1690 = vrot.slane %v1689, 4
    %v1691 = vmax.f32 %v1689, %v1690
    %v1692 = vrot.slane %v1691, 2
    %v1693 = vmax.f32 %v1691, %v1692
    %v1694 = vrot.slane %v1693, 1
    %v1695 = vmax.f32 %v1693, %v1694
    %vm1696 = vcmp.eq.f32.partialorder %v1688, %v1695
    %v1697 = vsel %vm1696, %v214, 8.0
    %v1698 = vsel %vm798, %v1697, inf
    %v1699 = vrot.slane %v1698, 4
    %v1700 = vmin.f32 %v1698, %v1699
    %v1701 = vrot.slane %v1700, 2
    %v1702 = vmin.f32 %v1700, %v1701
    %v1703 = vrot.slane %v1702, 1
    %v1704 = vmin.f32 %v1702, %v1703
    %v1705 = vadd.f32 %v1695, %v1655
    %v1706 = vld [vmem:[#allocation3 + $0xe] sm:$0x1]
    %v1707 = vperm.slane %v1687, 0
    %v1708 = vmul.f32 %v1707, %v213
    %v1709 = vsel %vm798, %v1708, 0.0
    %1710 = vadd.xlane.f32.xlu0 %v1709
    %v1711 = vpop.xlane.xlu0 %1710
    %v1712 = vperm.slane %v1705, 0
    %v1713 = vmul.f32 %v1712, %v213
    %v1714 = vsel %vm798, %v1713, 0.0
    %1715 = vadd.xlane.f32.xlu0 %v1714
    %v1716 = vpop.xlane.xlu0 %1715
    %v1717 = vadd.f32 %v1711, %v803
    %v1718 = vsel %vm798, %v1717, -inf
    %v1719 = vrot.slane %v1718, 4
    %v1720 = vmax.f32 %v1718, %v1719
    %v1721 = vrot.slane %v1720, 2
    %v1722 = vmax.f32 %v1720, %v1721
    %v1723 = vrot.slane %v1722, 1
    %v1724 = vmax.f32 %v1722, %v1723
    %v1725 = vsub.f32 %v1717, %v1724
    %v1726 = vmul.f32 %v1725, 1.442695
    %v1727 = vpow.pop %v1726
    %v1728 = vsel %vm798, %v1727, 0.0
    %v1729 = vrot.slane %v1728, 4
    %v1730 = vadd.f32 %v1728, %v1729
    %v1731 = vrot.slane %v1730, 2
    %v1732 = vadd.f32 %v1730, %v1731
    %v1733 = vrot.slane %v1732, 1
    %v1734 = vadd.f32 %v1732, %v1733
    %v1735 = vlog2.pop %v1734
    %v1736 = vmul.f32 %v1735, 0.6931472
    %v1737 = vadd.f32 %v1736, %v1724
    %v1738 = vadd.f32 %v1737, %v1706
    %v1739 = vadd.f32 %v1716, %v803
    %v1740 = vsel %vm798, %v1739, -inf
    %v1741 = vrot.slane %v1740, 4
    %v1742 = vmax.f32 %v1740, %v1741
    %v1743 = vrot.slane %v1742, 2
    %v1744 = vmax.f32 %v1742, %v1743
    %v1745 = vrot.slane %v1744, 1
    %v1746 = vmax.f32 %v1744, %v1745
    %vm1747 = vcmp.eq.f32.partialorder %v1739, %v1746
    %v1748 = vsel %vm1747, %v214, 8.0
    %v1749 = vsel %vm798, %v1748, inf
    %v1750 = vrot.slane %v1749, 4
    %v1751 = vmin.f32 %v1749, %v1750
    %v1752 = vrot.slane %v1751, 2
    %v1753 = vmin.f32 %v1751, %v1752
    %v1754 = vrot.slane %v1753, 1
    %v1755 = vmin.f32 %v1753, %v1754
    %v1756 = vadd.f32 %v1746, %v1706
    %v1757 = vld [vmem:[#allocation3 + $0xf] sm:$0x1]
    %v1758 = vperm.slane %v1738, 0
    %v1759 = vmul.f32 %v1758, %v213
    %v1760 = vsel %vm798, %v1759, 0.0
    %1761 = vadd.xlane.f32.xlu0 %v1760
    %v1762 = vpop.xlane.xlu0 %1761
    %v1763 = vperm.slane %v1756, 0
    %v1764 = vmul.f32 %v1763, %v213
    %v1765 = vsel %vm798, %v1764, 0.0
    %1766 = vadd.xlane.f32.xlu0 %v1765
    %v1767 = vpop.xlane.xlu0 %1766
    %v1768 = vadd.f32 %v1762, %v803
    %v1769 = vsel %vm798, %v1768, -inf
    %v1770 = vrot.slane %v1769, 4
    %v1771 = vmax.f32 %v1769, %v1770
    %v1772 = vrot.slane %v1771, 2
    %v1773 = vmax.f32 %v1771, %v1772
    %v1774 = vrot.slane %v1773, 1
    %v1775 = vmax.f32 %v1773, %v1774
    %v1776 = vsub.f32 %v1768, %v1775
    %v1777 = vmul.f32 %v1776, 1.442695
    %v1778 = vpow.pop %v1777
    %v1779 = vsel %vm798, %v1778, 0.0
    %v1780 = vrot.slane %v1779, 4
    %v1781 = vadd.f32 %v1779, %v1780
    %v1782 = vrot.slane %v1781, 2
    %v1783 = vadd.f32 %v1781, %v1782
    %v1784 = vrot.slane %v1783, 1
    %v1785 = vadd.f32 %v1783, %v1784
    %v1786 = vlog2.pop %v1785
    %v1787 = vmul.f32 %v1786, 0.6931472
    %v1788 = vadd.f32 %v1787, %v1775
    %v1789 = vadd.f32 %v1788, %v1757
    %v1790 = vadd.f32 %v1767, %v803
    %v1791 = vsel %vm798, %v1790, -inf
    %v1792 = vrot.slane %v1791, 4
    %v1793 = vmax.f32 %v1791, %v1792
    %v1794 = vrot.slane %v1793, 2
    %v1795 = vmax.f32 %v1793, %v1794
    %v1796 = vrot.slane %v1795, 1
    %v1797 = vmax.f32 %v1795, %v1796
    %vm1798 = vcmp.eq.f32.partialorder %v1790, %v1797
    %v1799 = vsel %vm1798, %v214, 8.0
    %v1800 = vsel %vm798, %v1799, inf
    %v1801 = vrot.slane %v1800, 4
    %v1802 = vmin.f32 %v1800, %v1801
    %v1803 = vrot.slane %v1802, 2
    %v1804 = vmin.f32 %v1802, %v1803
    %v1805 = vrot.slane %v1804, 1
    %v1806 = vmin.f32 %v1804, %v1805
    %v1807 = vadd.f32 %v1797, %v1757
    %v1808 = vadd.f32 %v1789, %v802
    %v1809 = vsel %vm1048, %v1808, -inf
    %1810 = vmax.xlane.f32.xlu0 %v1809
    %v1811 = vpop.xlane.xlu0 %1810
    %v1812 = vsub.f32 %v1808, %v1811
    %v1813 = vmul.f32 %v1812, 1.442695
    %v1814 = vpow.pop %v1813
    %v1815 = vsel %vm1048, %v1814, 0.0
    %1816 = vadd.xlane.f32.xlu0 %v1815
    %v1817 = vpop.xlane.xlu0 %1816
    %v1818 = vlog2.pop %v1817
    %v1819 = vmul.f32 %v1818, 0.6931472
    %v1820 = vadd.f32 %v1819, %v1811
    %v1821 = vsub.f32 %v1820, %v1051
    %vm1822 = vcmask 0
    %1823 = vst.msk [vmem:[#allocation19] sm:$0x1] %vm1822, %v1821
    %v1824 = vadd.f32 %v1807, %v802
    %v1825 = vsel %vm1048, %v1824, -inf
    %1826 = vmax.xlane.f32.xlu0 %v1825
    %v1827 = vpop.xlane.xlu0 %1826
    %vm1828 = vcmp.eq.f32.partialorder %v1824, %v1827
    %v1829 = vsel %vm1828, %v215, 8.0
    %v1830 = vsel %vm1048, %v1829, inf
    %1831 = vmin.xlane.f32.xlu0 %v1830
    %v1832 = vpop.xlane.xlu0 %1831
    %vm1833 = vcmp.eq.f32.partialorder %v215, %v1832
    %v1834 = vsel %vm1833, %v1806, 0.0
    %v1835 = vsel %vm1048, %v1834, 0.0
    %1836 = vadd.xlane.f32.xlu0 %v1835
    %v1837 = vpop.xlane.xlu0 %1836
    %vm1838 = vcmp.eq.f32.partialorder %v215, %v1837
    %v1839 = vsel %vm1838, %v1755, 0.0
    %v1840 = vsel %vm1048, %v1839, 0.0
    %1841 = vadd.xlane.f32.xlu0 %v1840
    %v1842 = vpop.xlane.xlu0 %1841
    %vm1843 = vcmp.eq.f32.partialorder %v215, %v1842
    %v1844 = vsel %vm1843, %v1704, 0.0
    %v1845 = vsel %vm1048, %v1844, 0.0
    %1846 = vadd.xlane.f32.xlu0 %v1845
    %v1847 = vpop.xlane.xlu0 %1846
    %vm1848 = vcmp.eq.f32.partialorder %v215, %v1847
    %v1849 = vsel %vm1848, %v1653, 0.0
    %v1850 = vsel %vm1048, %v1849, 0.0
    %1851 = vadd.xlane.f32.xlu0 %v1850
    %v1852 = vpop.xlane.xlu0 %1851
    %vm1853 = vcmp.eq.f32.partialorder %v215, %v1852
    %v1854 = vsel %vm1853, %v1602, 0.0
    %v1855 = vsel %vm1048, %v1854, 0.0
    %1856 = vadd.xlane.f32.xlu0 %v1855
    %v1857 = vpop.xlane.xlu0 %1856
    %vm1858 = vcmp.eq.f32.partialorder %v215, %v1857
    %v1859 = vsel %vm1858, %v1551, 0.0
    %v1860 = vsel %vm1048, %v1859, 0.0
    %1861 = vadd.xlane.f32.xlu0 %v1860
    %v1862 = vpop.xlane.xlu0 %1861
    %vm1863 = vcmp.eq.f32.partialorder %v215, %v1862
    %v1864 = vsel %vm1863, %v1500, 0.0
    %v1865 = vsel %vm1048, %v1864, 0.0
    %1866 = vadd.xlane.f32.xlu0 %v1865
    %v1867 = vpop.xlane.xlu0 %1866
    %vm1868 = vcmp.eq.f32.partialorder %v215, %v1867
    %v1869 = vsel %vm1868, %v1449, 0.0
    %v1870 = vsel %vm1048, %v1869, 0.0
    %1871 = vadd.xlane.f32.xlu0 %v1870
    %v1872 = vpop.xlane.xlu0 %1871
    %vm1873 = vcmp.eq.f32.partialorder %v215, %v1872
    %v1874 = vsel %vm1873, %v1398, 0.0
    %v1875 = vsel %vm1048, %v1874, 0.0
    %1876 = vadd.xlane.f32.xlu0 %v1875
    %v1877 = vpop.xlane.xlu0 %1876
    %vm1878 = vcmp.eq.f32.partialorder %v215, %v1877
    %v1879 = vsel %vm1878, %v1347, 0.0
    %v1880 = vsel %vm1048, %v1879, 0.0
    %1881 = vadd.xlane.f32.xlu0 %v1880
    %v1882 = vpop.xlane.xlu0 %1881
    %vm1883 = vcmp.eq.f32.partialorder %v215, %v1882
    %v1884 = vsel %vm1883, %v1296, 0.0
    %v1885 = vsel %vm1048, %v1884, 0.0
    %1886 = vadd.xlane.f32.xlu0 %v1885
    %v1887 = vpop.xlane.xlu0 %1886
    %vm1888 = vcmp.eq.f32.partialorder %v215, %v1887
    %v1889 = vsel %vm1888, %v1245, 0.0
    %v1890 = vsel %vm1048, %v1889, 0.0
    %1891 = vadd.xlane.f32.xlu0 %v1890
    %v1892 = vpop.xlane.xlu0 %1891
    %vm1893 = vcmp.eq.f32.partialorder %v215, %v1892
    %v1894 = vsel %vm1893, %v1194, 0.0
    %v1895 = vsel %vm1048, %v1894, 0.0
    %1896 = vadd.xlane.f32.xlu0 %v1895
    %v1897 = vpop.xlane.xlu0 %1896
    %vm1898 = vcmp.eq.f32.partialorder %v215, %v1897
    %v1899 = vsel %vm1898, %v1143, 0.0
    %v1900 = vsel %vm1048, %v1899, 0.0
    %1901 = vadd.xlane.f32.xlu0 %v1900
    %v1902 = vpop.xlane.xlu0 %1901
    %vm1903 = vcmp.eq.f32.partialorder %v215, %v1902
    %v1904 = vsel %vm1903, %v1092, 0.0
    %v1905 = vsel %vm1048, %v1904, 0.0
    %1906 = vadd.xlane.f32.xlu0 %v1905
    %v1907 = vpop.xlane.xlu0 %1906
    %vm1908 = vcmp.eq.s32.totalorder %v207, 0
    %v1909 = vsel %vm1908, %v1907, 0.0
    %v1910 = vadd.f32 %v1909, 0.0
    %vm1911 = vcmp.eq.s32.totalorder %v207, 1
    %v1912 = vsel %vm1911, %v1902, 0.0
    %v1913 = vadd.f32 %v1910, %v1912
    %vm1914 = vcmp.eq.s32.totalorder %v207, 2
    %v1915 = vsel %vm1914, %v1897, 0.0
    %v1916 = vadd.f32 %v1913, %v1915
    %vm1917 = vcmp.eq.s32.totalorder %v207, 3
    %v1918 = vsel %vm1917, %v1892, 0.0
    %v1919 = vadd.f32 %v1916, %v1918
    %vm1920 = vcmp.eq.s32.totalorder %v207, 4
    %v1921 = vsel %vm1920, %v1887, 0.0
    %v1922 = vadd.f32 %v1919, %v1921
    %vm1923 = vcmp.eq.s32.totalorder %v207, 5
    %v1924 = vsel %vm1923, %v1882, 0.0
    %v1925 = vadd.f32 %v1922, %v1924
    %vm1926 = vcmp.eq.s32.totalorder %v207, 6
    %v1927 = vsel %vm1926, %v1877, 0.0
    %v1928 = vadd.f32 %v1925, %v1927
    %vm1929 = vcmp.eq.s32.totalorder %v207, 7
    %v1930 = vsel %vm1929, %v1872, 0.0
    %v1931 = vadd.f32 %v1928, %v1930
    %vm1932 = vcmp.eq.s32.totalorder %v207, 8
    %v1933 = vsel %vm1932, %v1867, 0.0
    %v1934 = vadd.f32 %v1931, %v1933
    %vm1935 = vcmp.eq.s32.totalorder %v207, 9
    %v1936 = vsel %vm1935, %v1862, 0.0
    %v1937 = vadd.f32 %v1934, %v1936
    %vm1938 = vcmp.eq.s32.totalorder %v207, 10
    %v1939 = vsel %vm1938, %v1857, 0.0
    %v1940 = vadd.f32 %v1937, %v1939
    %vm1941 = vcmp.eq.s32.totalorder %v207, 11
    %v1942 = vsel %vm1941, %v1852, 0.0
    %v1943 = vadd.f32 %v1940, %v1942
    %vm1944 = vcmp.eq.s32.totalorder %v207, 12
    %v1945 = vsel %vm1944, %v1847, 0.0
    %v1946 = vadd.f32 %v1943, %v1945
    %vm1947 = vcmp.eq.s32.totalorder %v207, 13
    %v1948 = vsel %vm1947, %v1842, 0.0
    %v1949 = vadd.f32 %v1946, %v1948
    %vm1950 = vcmp.eq.s32.totalorder %v207, 14
    %v1951 = vsel %vm1950, %v1837, 0.0
    %v1952 = vadd.f32 %v1949, %v1951
    %vm1953 = vcmp.eq.s32.totalorder %v207, 15
    %v1954 = vsel %vm1953, %v1832, 0.0
    %v1955 = vadd.f32 %v1952, %v1954
    %v1956 = vcvt.f32.s32.to.zero.pseudo %v1955
    %vm1957 = vcmask 122880
    %1958 = vst.msk [vmem:[#allocation20] sm:$0x1] %vm1957, %v1956
    // Predicated region
    $region126: #{tpu_custom_call.1} parent=1 // pred_check
      _
    $region127: #{tpu_custom_call.1} parent=1 // pred_check_branch
      %1960 = sbr.rel (0) target = $region129
    $region128: #{tpu_custom_call.1} parent=1 // pred_region
      %1962 = vsyncadd [#allocation6], 0
      %s1964 = sshll.u32 [#allocation19], 4
      %s1965 = int_to_ptr.vmem [resolvable:$true] %s1964
      %s1966 = sshll.u32 %s22, 4
      %s1967 = int_to_ptr.hbm [resolvable:$true] %s1966
      %1969 = dma.vmem_to_hbm [thread:$0]  %s1965, 16, %s1967, [#allocation6]
    $region129: #{tpu_custom_call.1} parent=1 // pred_fallthru
      _
    // Predicated region
    $region130: #{tpu_custom_call.1} parent=1 // pred_check
      _
    $region131: #{tpu_custom_call.1} parent=1 // pred_check_branch
      %1971 = sbr.rel (0) target = $region133
    $region132: #{tpu_custom_call.1} parent=1 // pred_region
      %1973 = vsyncadd [#allocation21], 0
      %s1975 = sshll.u32 [#allocation20], 4
      %s1976 = int_to_ptr.vmem [resolvable:$true] %s1975
      %s1977 = sshll.u32 %s23, 4
      %s1978 = int_to_ptr.hbm [resolvable:$true] %s1977
      %1980 = dma.vmem_to_hbm [thread:$0]  %s1976, 16, %s1978, [#allocation21]
    $region133: #{tpu_custom_call.1} parent=1 // pred_fallthru
      _
    // Predicated region
    $region134: #{tpu_custom_call.1} parent=1 // pred_check
      _
    $region135: #{tpu_custom_call.1} parent=1 // pred_check_branch
      %1982 = sbr.rel (0) target = $region137
    $region136: #{tpu_custom_call.1} parent=1 // pred_region
      %1984 = dma.done [#allocation6], 16
    $region137: #{tpu_custom_call.1} parent=1 // pred_fallthru
      _
    // Predicated region
    $region138: #{tpu_custom_call.1} parent=1 // pred_check
      _
    $region139: #{tpu_custom_call.1} parent=1 // pred_check_branch
      %1986 = sbr.rel (0) target = $region141
    $region140: #{tpu_custom_call.1} parent=1 // pred_region
      %1988 = dma.done [#allocation21], 16
    $region141: #{tpu_custom_call.1} parent=1 // pred_fallthru
      _
    %1989 = vsyncpa [#allocation5], 1
    %1990 = vsyncpa [#allocation8], 1
    %1991 = vsyncpa [#allocation11], 1
    %1992 = vsyncpa [#allocation14], 1
    %1993 = vsyncpa [#allocation17], 1
    %1994 = vsyncpa [#allocation6], 1
    %1995 = vsyncpa [#allocation21], 1

</llo_original>
